<compile_context>
chip_gen: v5e
topology: v5e:2x2
jax: 0.10.0
libtpu: 0.0.40
codegen_flags: <defaults>
</compile_context>

<pallas_src>
import functools

import jax
import jax.numpy as jnp
from jax.experimental import pallas as pl
from jax.experimental.pallas import tpu as pltpu

# Layer widths of the reference MLP.
DIMS = [784, 512, 256, 128, 64, 32, 10]
OUT_PAD = 128          # lane-dense padded width of the final layer output
MAX_BLOCK_B = 1024     # keeps VMEM use well inside default scoped limits


def _mlp_kernel(x_ref,
                w1, b1, w2, b2, w3, b3, w4, b4, w5, b5, w6, b6,
                o_ref):
    """Fused forward: 5x (Linear + ReLU) + final Linear (padded to 128 lanes).

    Matmuls run on the MXU with bf16 operands and f32 accumulation; bias-add
    and ReLU stay in f32 on the VPU. All weights are VMEM-resident.
    """

    def linear(h, w_ref, b_ref):
        y = jnp.dot(h, w_ref[...], preferred_element_type=jnp.float32)
        return y + b_ref[...]          # (1, out) broadcasts over batch rows

    h = x_ref[...]                      # bf16 activations
    h = jnp.maximum(linear(h, w1, b1), 0.0).astype(jnp.bfloat16)
    h = jnp.maximum(linear(h, w2, b2), 0.0).astype(jnp.bfloat16)
    h = jnp.maximum(linear(h, w3, b3), 0.0).astype(jnp.bfloat16)
    h = jnp.maximum(linear(h, w4, b4), 0.0).astype(jnp.bfloat16)
    h = jnp.maximum(linear(h, w5, b5), 0.0).astype(jnp.bfloat16)
    o_ref[...] = linear(h, w6, b6).astype(o_ref.dtype)


def _pick_block_b(batch, requested):
    """Batch tile: multiple of 8, <= requested (capped at MAX_BLOCK_B), and
    split into >= 2 tiles when possible so v7x's two TensorCores both run."""
    req = max(8, min(MAX_BLOCK_B, (requested // 8) * 8))
    b_pad8 = ((batch + 7) // 8) * 8
    bb = min(req, b_pad8)
    if b_pad8 // bb < 2 and b_pad8 >= 16:
        bb = max(8, (b_pad8 // 16) * 8)
    return bb


@functools.partial(jax.jit, static_argnames=("block_b", "single_buffer_weights"))
def mlp_forward(x, params, *, block_b=256, single_buffer_weights=True):
    """x: (B, ...) with prod(...) == 784 (e.g. (B,1,28,28), NCHW).
    params: list of (W_io, b) with W_io of shape (in, out)."""
    B = x.shape[0]
    x_flat = x.reshape(B, -1)                       # nn.Flatten()
    assert x_flat.shape[1] == DIMS[0], x_flat.shape

    bb = _pick_block_b(B, block_b)
    b_grid = pl.cdiv(B, bb) * bb
    if b_grid != B:
        x_flat = jnp.pad(x_flat, ((0, b_grid - B), (0, 0)))
    x_bf16 = x_flat.astype(jnp.bfloat16)

    # Flatten params: bf16 weights (MXU operands), f32 row-vector biases.
    # Final layer is zero-padded from 10 to 128 lanes for lane-dense stores.
    flat_params = []
    n_layers = len(params)
    for li, (w, b) in enumerate(params):
        if li == n_layers - 1:
            w = jnp.pad(w, ((0, 0), (0, OUT_PAD - w.shape[1])))
            b = jnp.pad(b, (0, OUT_PAD - b.shape[0]))
        flat_params.append(w.astype(jnp.bfloat16))
        flat_params.append(b.reshape(1, -1).astype(jnp.float32))

    # Weights/biases never change across grid steps (constant index_map):
    # request a single buffer to avoid wasting VMEM on double-buffering.
    spec_kwargs = {}
    if single_buffer_weights:
        spec_kwargs["pipeline_mode"] = pl.Buffered(1)
    param_specs = [
        pl.BlockSpec(p.shape, lambda i: (0, 0), **spec_kwargs)
        for p in flat_params
    ]

    grid = (b_grid // bb,)
    x_spec = pl.BlockSpec((bb, DIMS[0]), lambda i: (i, 0))
    o_spec = pl.BlockSpec((bb, OUT_PAD), lambda i: (i, 0))

    out = pl.pallas_call(
        _mlp_kernel,
        out_shape=jax.ShapeDtypeStruct((b_grid, OUT_PAD), jnp.float32),
        grid_spec=pltpu.PrefetchScalarGridSpec(
            num_scalar_prefetch=0,
            grid=grid,
            in_specs=[x_spec] + param_specs,
            out_specs=o_spec,
        ),
        compiler_params=pltpu.CompilerParams(
            dimension_semantics=("parallel",)),
    )(x_bf16, *flat_params)

    return out[:B, :DIMS[-1]]


def init_params(key):
    """Deterministic init matching PyTorch nn.Linear default
    (U[-1/sqrt(in), 1/sqrt(in)]), weights stored as (in, out)."""
    params = []
    for i in range(len(DIMS) - 1):
        fan_in, fan_out = DIMS[i], DIMS[i + 1]
        key, kw, kb = jax.random.split(key, 3)
        bound = 1.0 / (fan_in ** 0.5)
        w = jax.random.uniform(kw, (fan_in, fan_out), jnp.float32,
                               minval=-bound, maxval=bound)
        b = jax.random.uniform(kb, (fan_out,), jnp.float32,
                               minval=-bound, maxval=bound)
        params.append((w, b))
    return params


def mlp_reference(x, params):
    """Plain-JAX reference using the same bf16-operand / f32-accumulate math."""
    h = x.reshape(x.shape[0], -1).astype(jnp.float32)
    n = len(params)
    for i, (w, b) in enumerate(params):
        y = jnp.dot(h.astype(jnp.bfloat16), w.astype(jnp.bfloat16),
                    preferred_element_type=jnp.float32) + b
        h = jnp.maximum(y, 0.0) if i < n - 1 else y
    return h


if __name__ == "__main__":
    key = jax.random.PRNGKey(0)
    kx, kp = jax.random.split(key)

    # MNIST-style input implied by Linear(784, ...): (B, 1, 28, 28), NCHW.
    B = 16
    x = jax.random.normal(kx, (B, 1, 28, 28), dtype=jnp.float32)
    params = init_params(kp)

    try:
        out = mlp_forward(x, params)
    except Exception:
        # Fallback if this jax build rejects single-buffered weight BlockSpecs.
        out = mlp_forward(x, params, single_buffer_weights=False)
    jax.block_until_ready(out)

    ref = mlp_reference(x, params)
    assert out.shape == (B, 10), out.shape
    max_err = float(jnp.max(jnp.abs(out - ref)))
    assert jnp.allclose(out, ref, atol=1e-2, rtol=1e-2), max_err

    print("KERNEL_OK")
</pallas_src>

<mosaic_0001>
module attributes {stable_mosaic.version = 11 : i64} {
  func.func @_mlp_kernel(%arg0: i32, %arg1: memref<8x784xbf16, #tpu.memory_space<vmem>>, %arg2: memref<784x512xbf16, #tpu.memory_space<vmem>>, %arg3: memref<1x512xf32, #tpu.memory_space<vmem>>, %arg4: memref<512x256xbf16, #tpu.memory_space<vmem>>, %arg5: memref<1x256xf32, #tpu.memory_space<vmem>>, %arg6: memref<256x128xbf16, #tpu.memory_space<vmem>>, %arg7: memref<1x128xf32, #tpu.memory_space<vmem>>, %arg8: memref<128x64xbf16, #tpu.memory_space<vmem>>, %arg9: memref<1x64xf32, #tpu.memory_space<vmem>>, %arg10: memref<64x32xbf16, #tpu.memory_space<vmem>>, %arg11: memref<1x32xf32, #tpu.memory_space<vmem>>, %arg12: memref<32x128xbf16, #tpu.memory_space<vmem>>, %arg13: memref<1x128xf32, #tpu.memory_space<vmem>>, %arg14: memref<8x128xf32, #tpu.memory_space<vmem>>) attributes {dimension_semantics = [#tpu.dimension_semantics<parallel>], iteration_bounds = array<i64: 2>, scalar_prefetch = 0 : i64, scratch_operands = 0 : i64, tpu.core_type = #tpu.core_type<tc>, window_params = [{transform_indices = @transform_0, window_bounds = array<i64: 8, 784>}, {pipeline_mode = #tpu.pipeline_mode<synchronous>, transform_indices = @transform_1, window_bounds = array<i64: 784, 512>}, {pipeline_mode = #tpu.pipeline_mode<synchronous>, transform_indices = @transform_2, window_bounds = array<i64: 1, 512>}, {pipeline_mode = #tpu.pipeline_mode<synchronous>, transform_indices = @transform_3, window_bounds = array<i64: 512, 256>}, {pipeline_mode = #tpu.pipeline_mode<synchronous>, transform_indices = @transform_4, window_bounds = array<i64: 1, 256>}, {pipeline_mode = #tpu.pipeline_mode<synchronous>, transform_indices = @transform_5, window_bounds = array<i64: 256, 128>}, {pipeline_mode = #tpu.pipeline_mode<synchronous>, transform_indices = @transform_6, window_bounds = array<i64: 1, 128>}, {pipeline_mode = #tpu.pipeline_mode<synchronous>, transform_indices = @transform_7, window_bounds = array<i64: 128, 64>}, {pipeline_mode = #tpu.pipeline_mode<synchronous>, transform_indices = @transform_8, window_bounds = array<i64: 1, 64>}, {pipeline_mode = #tpu.pipeline_mode<synchronous>, transform_indices = @transform_9, window_bounds = array<i64: 64, 32>}, {pipeline_mode = #tpu.pipeline_mode<synchronous>, transform_indices = @transform_10, window_bounds = array<i64: 1, 32>}, {pipeline_mode = #tpu.pipeline_mode<synchronous>, transform_indices = @transform_11, window_bounds = array<i64: 32, 128>}, {pipeline_mode = #tpu.pipeline_mode<synchronous>, transform_indices = @transform_12, window_bounds = array<i64: 1, 128>}, {transform_indices = @transform_13, window_bounds = array<i64: 8, 128>}]} {
    %c0 = arith.constant 0 : index
    %c0_0 = arith.constant 0 : index
    %0 = vector.load %arg1[%c0, %c0_0] : memref<8x784xbf16, #tpu.memory_space<vmem>>, vector<8x784xbf16>
    %c0_1 = arith.constant 0 : index
    %c0_2 = arith.constant 0 : index
    %1 = vector.load %arg2[%c0_1, %c0_2] : memref<784x512xbf16, #tpu.memory_space<vmem>>, vector<784x512xbf16>
    %cst = arith.constant dense<0.000000e+00> : vector<8x512xf32>
    %2 = tpu.matmul %0, %1, %cst {dimension_numbers = #tpu.dot_dimension_numbers<[1], [0], [0], [1], [0, 0, 1, 1], [], []>} : vector<8x784xbf16>, vector<784x512xbf16>, vector<8x512xf32> -> vector<8x512xf32>
    %c0_3 = arith.constant 0 : index
    %c0_4 = arith.constant 0 : index
    %3 = vector.load %arg3[%c0_3, %c0_4] : memref<1x512xf32, #tpu.memory_space<vmem>>, vector<1x512xf32>
    %4 = vector.broadcast %3 : vector<1x512xf32> to vector<8x512xf32>
    %5 = arith.addf %2, %4 : vector<8x512xf32>
    %cst_5 = arith.constant 0.000000e+00 : f32
    %6 = vector.broadcast %cst_5 : f32 to vector<8x512xf32>
    %7 = arith.maximumf %5, %6 : vector<8x512xf32>
    %8 = arith.truncf %7 : vector<8x512xf32> to vector<8x512xbf16>
    %c0_6 = arith.constant 0 : index
    %c0_7 = arith.constant 0 : index
    %9 = vector.load %arg4[%c0_6, %c0_7] : memref<512x256xbf16, #tpu.memory_space<vmem>>, vector<512x256xbf16>
    %cst_8 = arith.constant dense<0.000000e+00> : vector<8x256xf32>
    %10 = tpu.matmul %8, %9, %cst_8 {dimension_numbers = #tpu.dot_dimension_numbers<[1], [0], [0], [1], [0, 0, 1, 1], [], []>} : vector<8x512xbf16>, vector<512x256xbf16>, vector<8x256xf32> -> vector<8x256xf32>
    %c0_9 = arith.constant 0 : index
    %c0_10 = arith.constant 0 : index
    %11 = vector.load %arg5[%c0_9, %c0_10] : memref<1x256xf32, #tpu.memory_space<vmem>>, vector<1x256xf32>
    %12 = vector.broadcast %11 : vector<1x256xf32> to vector<8x256xf32>
    %13 = arith.addf %10, %12 : vector<8x256xf32>
    %cst_11 = arith.constant 0.000000e+00 : f32
    %14 = vector.broadcast %cst_11 : f32 to vector<8x256xf32>
    %15 = arith.maximumf %13, %14 : vector<8x256xf32>
    %16 = arith.truncf %15 : vector<8x256xf32> to vector<8x256xbf16>
    %c0_12 = arith.constant 0 : index
    %c0_13 = arith.constant 0 : index
    %17 = vector.load %arg6[%c0_12, %c0_13] : memref<256x128xbf16, #tpu.memory_space<vmem>>, vector<256x128xbf16>
    %cst_14 = arith.constant dense<0.000000e+00> : vector<8x128xf32>
    %18 = tpu.matmul %16, %17, %cst_14 {dimension_numbers = #tpu.dot_dimension_numbers<[1], [0], [0], [1], [0, 0, 1, 1], [], []>} : vector<8x256xbf16>, vector<256x128xbf16>, vector<8x128xf32> -> vector<8x128xf32>
    %c0_15 = arith.constant 0 : index
    %c0_16 = arith.constant 0 : index
    %19 = vector.load %arg7[%c0_15, %c0_16] : memref<1x128xf32, #tpu.memory_space<vmem>>, vector<1x128xf32>
    %20 = vector.broadcast %19 : vector<1x128xf32> to vector<8x128xf32>
    %21 = arith.addf %18, %20 : vector<8x128xf32>
    %cst_17 = arith.constant 0.000000e+00 : f32
    %22 = vector.broadcast %cst_17 : f32 to vector<8x128xf32>
    %23 = arith.maximumf %21, %22 : vector<8x128xf32>
    %24 = arith.truncf %23 : vector<8x128xf32> to vector<8x128xbf16>
    %c0_18 = arith.constant 0 : index
    %c0_19 = arith.constant 0 : index
    %25 = vector.load %arg8[%c0_18, %c0_19] : memref<128x64xbf16, #tpu.memory_space<vmem>>, vector<128x64xbf16>
    %cst_20 = arith.constant dense<0.000000e+00> : vector<8x64xf32>
    %26 = tpu.matmul %24, %25, %cst_20 {dimension_numbers = #tpu.dot_dimension_numbers<[1], [0], [0], [1], [0, 0, 1, 1], [], []>} : vector<8x128xbf16>, vector<128x64xbf16>, vector<8x64xf32> -> vector<8x64xf32>
    %c0_21 = arith.constant 0 : index
    %c0_22 = arith.constant 0 : index
    %27 = vector.load %arg9[%c0_21, %c0_22] : memref<1x64xf32, #tpu.memory_space<vmem>>, vector<1x64xf32>
    %28 = vector.broadcast %27 : vector<1x64xf32> to vector<8x64xf32>
    %29 = arith.addf %26, %28 : vector<8x64xf32>
    %cst_23 = arith.constant 0.000000e+00 : f32
    %30 = vector.broadcast %cst_23 : f32 to vector<8x64xf32>
    %31 = arith.maximumf %29, %30 : vector<8x64xf32>
    %32 = arith.truncf %31 : vector<8x64xf32> to vector<8x64xbf16>
    %c0_24 = arith.constant 0 : index
    %c0_25 = arith.constant 0 : index
    %33 = vector.load %arg10[%c0_24, %c0_25] : memref<64x32xbf16, #tpu.memory_space<vmem>>, vector<64x32xbf16>
    %cst_26 = arith.constant dense<0.000000e+00> : vector<8x32xf32>
    %34 = tpu.matmul %32, %33, %cst_26 {dimension_numbers = #tpu.dot_dimension_numbers<[1], [0], [0], [1], [0, 0, 1, 1], [], []>} : vector<8x64xbf16>, vector<64x32xbf16>, vector<8x32xf32> -> vector<8x32xf32>
    %c0_27 = arith.constant 0 : index
    %c0_28 = arith.constant 0 : index
    %35 = vector.load %arg11[%c0_27, %c0_28] : memref<1x32xf32, #tpu.memory_space<vmem>>, vector<1x32xf32>
    %36 = vector.broadcast %35 : vector<1x32xf32> to vector<8x32xf32>
    %37 = arith.addf %34, %36 : vector<8x32xf32>
    %cst_29 = arith.constant 0.000000e+00 : f32
    %38 = vector.broadcast %cst_29 : f32 to vector<8x32xf32>
    %39 = arith.maximumf %37, %38 : vector<8x32xf32>
    %40 = arith.truncf %39 : vector<8x32xf32> to vector<8x32xbf16>
    %c0_30 = arith.constant 0 : index
    %c0_31 = arith.constant 0 : index
    %41 = vector.load %arg12[%c0_30, %c0_31] : memref<32x128xbf16, #tpu.memory_space<vmem>>, vector<32x128xbf16>
    %cst_32 = arith.constant dense<0.000000e+00> : vector<8x128xf32>
    %42 = tpu.matmul %40, %41, %cst_32 {dimension_numbers = #tpu.dot_dimension_numbers<[1], [0], [0], [1], [0, 0, 1, 1], [], []>} : vector<8x32xbf16>, vector<32x128xbf16>, vector<8x128xf32> -> vector<8x128xf32>
    %c0_33 = arith.constant 0 : index
    %c0_34 = arith.constant 0 : index
    %43 = vector.load %arg13[%c0_33, %c0_34] : memref<1x128xf32, #tpu.memory_space<vmem>>, vector<1x128xf32>
    %44 = vector.broadcast %43 : vector<1x128xf32> to vector<8x128xf32>
    %45 = arith.addf %42, %44 : vector<8x128xf32>
    %c0_35 = arith.constant 0 : index
    %c0_36 = arith.constant 0 : index
    %46 = vector.load %arg14[%c0_35, %c0_36] : memref<8x128xf32, #tpu.memory_space<vmem>>, vector<8x128xf32>
    tpu.vector_store %arg14[%c0_35, %c0_36], %45 {strides = array<i32>} : memref<8x128xf32, #tpu.memory_space<vmem>>, vector<8x128xf32>,
    return
  }
  func.func @transform_0(%arg0: i32) -> (i32, i32) {
    %c0_i32 = arith.constant 0 : i32
    %c0_i32_0 = arith.constant 0 : i32
    return %arg0, %c0_i32 : i32, i32
  }
  func.func @transform_1(%arg0: i32) -> (i32, i32) {
    %c0_i32 = arith.constant 0 : i32
    %c0_i32_0 = arith.constant 0 : i32
    %c0_i32_1 = arith.constant 0 : i32
    return %c0_i32, %c0_i32_0 : i32, i32
  }
  func.func @transform_2(%arg0: i32) -> (i32, i32) {
    %c0_i32 = arith.constant 0 : i32
    %c0_i32_0 = arith.constant 0 : i32
    %c0_i32_1 = arith.constant 0 : i32
    return %c0_i32, %c0_i32_0 : i32, i32
  }
  func.func @transform_3(%arg0: i32) -> (i32, i32) {
    %c0_i32 = arith.constant 0 : i32
    %c0_i32_0 = arith.constant 0 : i32
    %c0_i32_1 = arith.constant 0 : i32
    return %c0_i32, %c0_i32_0 : i32, i32
  }
  func.func @transform_4(%arg0: i32) -> (i32, i32) {
    %c0_i32 = arith.constant 0 : i32
    %c0_i32_0 = arith.constant 0 : i32
    %c0_i32_1 = arith.constant 0 : i32
    return %c0_i32, %c0_i32_0 : i32, i32
  }
  func.func @transform_5(%arg0: i32) -> (i32, i32) {
    %c0_i32 = arith.constant 0 : i32
    %c0_i32_0 = arith.constant 0 : i32
    %c0_i32_1 = arith.constant 0 : i32
    return %c0_i32, %c0_i32_0 : i32, i32
  }
  func.func @transform_6(%arg0: i32) -> (i32, i32) {
    %c0_i32 = arith.constant 0 : i32
    %c0_i32_0 = arith.constant 0 : i32
    %c0_i32_1 = arith.constant 0 : i32
    return %c0_i32, %c0_i32_0 : i32, i32
  }
  func.func @transform_7(%arg0: i32) -> (i32, i32) {
    %c0_i32 = arith.constant 0 : i32
    %c0_i32_0 = arith.constant 0 : i32
    %c0_i32_1 = arith.constant 0 : i32
    return %c0_i32, %c0_i32_0 : i32, i32
  }
  func.func @transform_8(%arg0: i32) -> (i32, i32) {
    %c0_i32 = arith.constant 0 : i32
    %c0_i32_0 = arith.constant 0 : i32
    %c0_i32_1 = arith.constant 0 : i32
    return %c0_i32, %c0_i32_0 : i32, i32
  }
  func.func @transform_9(%arg0: i32) -> (i32, i32) {
    %c0_i32 = arith.constant 0 : i32
    %c0_i32_0 = arith.constant 0 : i32
    %c0_i32_1 = arith.constant 0 : i32
    return %c0_i32, %c0_i32_0 : i32, i32
  }
  func.func @transform_10(%arg0: i32) -> (i32, i32) {
    %c0_i32 = arith.constant 0 : i32
    %c0_i32_0 = arith.constant 0 : i32
    %c0_i32_1 = arith.constant 0 : i32
    return %c0_i32, %c0_i32_0 : i32, i32
  }
  func.func @transform_11(%arg0: i32) -> (i32, i32) {
    %c0_i32 = arith.constant 0 : i32
    %c0_i32_0 = arith.constant 0 : i32
    %c0_i32_1 = arith.constant 0 : i32
    return %c0_i32, %c0_i32_0 : i32, i32
  }
  func.func @transform_12(%arg0: i32) -> (i32, i32) {
    %c0_i32 = arith.constant 0 : i32
    %c0_i32_0 = arith.constant 0 : i32
    %c0_i32_1 = arith.constant 0 : i32
    return %c0_i32, %c0_i32_0 : i32, i32
  }
  func.func @transform_13(%arg0: i32) -> (i32, i32) {
    %c0_i32 = arith.constant 0 : i32
    %c0_i32_0 = arith.constant 0 : i32
    return %arg0, %c0_i32 : i32, i32
  }
}

module attributes {stable_mosaic.version = 11 : i64} {
  func.func @_mlp_kernel(%arg0: i32, %arg1: memref<8x784xbf16, #tpu.memory_space<vmem>>, %arg2: memref<784x512xbf16, #tpu.memory_space<vmem>>, %arg3: memref<1x512xf32, #tpu.memory_space<vmem>>, %arg4: memref<512x256xbf16, #tpu.memory_space<vmem>>, %arg5: memref<1x256xf32, #tpu.memory_space<vmem>>, %arg6: memref<256x128xbf16, #tpu.memory_space<vmem>>, %arg7: memref<1x128xf32, #tpu.memory_space<vmem>>, %arg8: memref<128x64xbf16, #tpu.memory_space<vmem>>, %arg9: memref<1x64xf32, #tpu.memory_space<vmem>>, %arg10: memref<64x32xbf16, #tpu.memory_space<vmem>>, %arg11: memref<1x32xf32, #tpu.memory_space<vmem>>, %arg12: memref<32x128xbf16, #tpu.memory_space<vmem>>, %arg13: memref<1x128xf32, #tpu.memory_space<vmem>>, %arg14: memref<8x128xf32, #tpu.memory_space<vmem>>) attributes {dimension_semantics = [#tpu.dimension_semantics<parallel>], iteration_bounds = array<i64: 2>, scalar_prefetch = 0 : i64, scratch_operands = 0 : i64, tpu.core_type = #tpu.core_type<tc>, window_params = [{transform_indices = @transform_0, window_bounds = array<i64: 8, 784>}, {pipeline_mode = #tpu.pipeline_mode<synchronous>, transform_indices = @transform_1, window_bounds = array<i64: 784, 512>}, {pipeline_mode = #tpu.pipeline_mode<synchronous>, transform_indices = @transform_2, window_bounds = array<i64: 1, 512>}, {pipeline_mode = #tpu.pipeline_mode<synchronous>, transform_indices = @transform_3, window_bounds = array<i64: 512, 256>}, {pipeline_mode = #tpu.pipeline_mode<synchronous>, transform_indices = @transform_4, window_bounds = array<i64: 1, 256>}, {pipeline_mode = #tpu.pipeline_mode<synchronous>, transform_indices = @transform_5, window_bounds = array<i64: 256, 128>}, {pipeline_mode = #tpu.pipeline_mode<synchronous>, transform_indices = @transform_6, window_bounds = array<i64: 1, 128>}, {pipeline_mode = #tpu.pipeline_mode<synchronous>, transform_indices = @transform_7, window_bounds = array<i64: 128, 64>}, {pipeline_mode = #tpu.pipeline_mode<synchronous>, transform_indices = @transform_8, window_bounds = array<i64: 1, 64>}, {pipeline_mode = #tpu.pipeline_mode<synchronous>, transform_indices = @transform_9, window_bounds = array<i64: 64, 32>}, {pipeline_mode = #tpu.pipeline_mode<synchronous>, transform_indices = @transform_10, window_bounds = array<i64: 1, 32>}, {pipeline_mode = #tpu.pipeline_mode<synchronous>, transform_indices = @transform_11, window_bounds = array<i64: 32, 128>}, {pipeline_mode = #tpu.pipeline_mode<synchronous>, transform_indices = @transform_12, window_bounds = array<i64: 1, 128>}, {transform_indices = @transform_13, window_bounds = array<i64: 8, 128>}]} {
    %c0 = arith.constant 0 : index
    %c0_0 = arith.constant 0 : index
    %0 = vector.load %arg1[%c0, %c0_0] : memref<8x784xbf16, #tpu.memory_space<vmem>>, vector<8x784xbf16>
    %c0_1 = arith.constant 0 : index
    %c0_2 = arith.constant 0 : index
    %1 = vector.load %arg2[%c0_1, %c0_2] : memref<784x512xbf16, #tpu.memory_space<vmem>>, vector<784x512xbf16>
    %cst = arith.constant dense<0.000000e+00> : vector<8x512xf32>
    %2 = tpu.matmul %0, %1, %cst {dimension_numbers = #tpu.dot_dimension_numbers<[1], [0], [0], [1], [0, 0, 1, 1], [], []>} : vector<8x784xbf16>, vector<784x512xbf16>, vector<8x512xf32> -> vector<8x512xf32>
    %c0_3 = arith.constant 0 : index
    %c0_4 = arith.constant 0 : index
    %3 = vector.load %arg3[%c0_3, %c0_4] : memref<1x512xf32, #tpu.memory_space<vmem>>, vector<1x512xf32>
    %4 = vector.broadcast %3 : vector<1x512xf32> to vector<8x512xf32>
    %5 = arith.addf %2, %4 : vector<8x512xf32>
    %cst_5 = arith.constant 0.000000e+00 : f32
    %6 = vector.broadcast %cst_5 : f32 to vector<8x512xf32>
    %7 = arith.maximumf %5, %6 : vector<8x512xf32>
    %8 = arith.truncf %7 : vector<8x512xf32> to vector<8x512xbf16>
    %c0_6 = arith.constant 0 : index
    %c0_7 = arith.constant 0 : index
    %9 = vector.load %arg4[%c0_6, %c0_7] : memref<512x256xbf16, #tpu.memory_space<vmem>>, vector<512x256xbf16>
    %cst_8 = arith.constant dense<0.000000e+00> : vector<8x256xf32>
    %10 = tpu.matmul %8, %9, %cst_8 {dimension_numbers = #tpu.dot_dimension_numbers<[1], [0], [0], [1], [0, 0, 1, 1], [], []>} : vector<8x512xbf16>, vector<512x256xbf16>, vector<8x256xf32> -> vector<8x256xf32>
    %c0_9 = arith.constant 0 : index
    %c0_10 = arith.constant 0 : index
    %11 = vector.load %arg5[%c0_9, %c0_10] : memref<1x256xf32, #tpu.memory_space<vmem>>, vector<1x256xf32>
    %12 = vector.broadcast %11 : vector<1x256xf32> to vector<8x256xf32>
    %13 = arith.addf %10, %12 : vector<8x256xf32>
    %cst_11 = arith.constant 0.000000e+00 : f32
    %14 = vector.broadcast %cst_11 : f32 to vector<8x256xf32>
    %15 = arith.maximumf %13, %14 : vector<8x256xf32>
    %16 = arith.truncf %15 : vector<8x256xf32> to vector<8x256xbf16>
    %c0_12 = arith.constant 0 : index
    %c0_13 = arith.constant 0 : index
    %17 = vector.load %arg6[%c0_12, %c0_13] : memref<256x128xbf16, #tpu.memory_space<vmem>>, vector<256x128xbf16>
    %cst_14 = arith.constant dense<0.000000e+00> : vector<8x128xf32>
    %18 = tpu.matmul %16, %17, %cst_14 {dimension_numbers = #tpu.dot_dimension_numbers<[1], [0], [0], [1], [0, 0, 1, 1], [], []>} : vector<8x256xbf16>, vector<256x128xbf16>, vector<8x128xf32> -> vector<8x128xf32>
    %c0_15 = arith.constant 0 : index
    %c0_16 = arith.constant 0 : index
    %19 = vector.load %arg7[%c0_15, %c0_16] : memref<1x128xf32, #tpu.memory_space<vmem>>, vector<1x128xf32>
    %20 = vector.broadcast %19 : vector<1x128xf32> to vector<8x128xf32>
    %21 = arith.addf %18, %20 : vector<8x128xf32>
    %cst_17 = arith.constant 0.000000e+00 : f32
    %22 = vector.broadcast %cst_17 : f32 to vector<8x128xf32>
    %23 = arith.maximumf %21, %22 : vector<8x128xf32>
    %24 = arith.truncf %23 : vector<8x128xf32> to vector<8x128xbf16>
    %c0_18 = arith.constant 0 : index
    %c0_19 = arith.constant 0 : index
    %25 = vector.load %arg8[%c0_18, %c0_19] : memref<128x64xbf16, #tpu.memory_space<vmem>>, vector<128x64xbf16>
    %cst_20 = arith.constant dense<0.000000e+00> : vector<8x64xf32>
    %26 = tpu.matmul %24, %25, %cst_20 {dimension_numbers = #tpu.dot_dimension_numbers<[1], [0], [0], [1], [0, 0, 1, 1], [], []>} : vector<8x128xbf16>, vector<128x64xbf16>, vector<8x64xf32> -> vector<8x64xf32>
    %c0_21 = arith.constant 0 : index
    %c0_22 = arith.constant 0 : index
    %27 = vector.load %arg9[%c0_21, %c0_22] : memref<1x64xf32, #tpu.memory_space<vmem>>, vector<1x64xf32>
    %28 = vector.broadcast %27 : vector<1x64xf32> to vector<8x64xf32>
    %29 = arith.addf %26, %28 : vector<8x64xf32>
    %cst_23 = arith.constant 0.000000e+00 : f32
    %30 = vector.broadcast %cst_23 : f32 to vector<8x64xf32>
    %31 = arith.maximumf %29, %30 : vector<8x64xf32>
    %32 = arith.truncf %31 : vector<8x64xf32> to vector<8x64xbf16>
    %c0_24 = arith.constant 0 : index
    %c0_25 = arith.constant 0 : index
    %33 = vector.load %arg10[%c0_24, %c0_25] : memref<64x32xbf16, #tpu.memory_space<vmem>>, vector<64x32xbf16>
    %cst_26 = arith.constant dense<0.000000e+00> : vector<8x32xf32>
    %34 = tpu.matmul %32, %33, %cst_26 {dimension_numbers = #tpu.dot_dimension_numbers<[1], [0], [0], [1], [0, 0, 1, 1], [], []>} : vector<8x64xbf16>, vector<64x32xbf16>, vector<8x32xf32> -> vector<8x32xf32>
    %c0_27 = arith.constant 0 : index
    %c0_28 = arith.constant 0 : index
    %35 = vector.load %arg11[%c0_27, %c0_28] : memref<1x32xf32, #tpu.memory_space<vmem>>, vector<1x32xf32>
    %36 = vector.broadcast %35 : vector<1x32xf32> to vector<8x32xf32>
    %37 = arith.addf %34, %36 : vector<8x32xf32>
    %cst_29 = arith.constant 0.000000e+00 : f32
    %38 = vector.broadcast %cst_29 : f32 to vector<8x32xf32>
    %39 = arith.maximumf %37, %38 : vector<8x32xf32>
    %40 = arith.truncf %39 : vector<8x32xf32> to vector<8x32xbf16>
    %c0_30 = arith.constant 0 : index
    %c0_31 = arith.constant 0 : index
    %41 = vector.load %arg12[%c0_30, %c0_31] : memref<32x128xbf16, #tpu.memory_space<vmem>>, vector<32x128xbf16>
    %cst_32 = arith.constant dense<0.000000e+00> : vector<8x128xf32>
    %42 = tpu.matmul %40, %41, %cst_32 {dimension_numbers = #tpu.dot_dimension_numbers<[1], [0], [0], [1], [0, 0, 1, 1], [], []>} : vector<8x32xbf16>, vector<32x128xbf16>, vector<8x128xf32> -> vector<8x128xf32>
    %c0_33 = arith.constant 0 : index
    %c0_34 = arith.constant 0 : index
    %43 = vector.load %arg13[%c0_33, %c0_34] : memref<1x128xf32, #tpu.memory_space<vmem>>, vector<1x128xf32>
    %44 = vector.broadcast %43 : vector<1x128xf32> to vector<8x128xf32>
    %45 = arith.addf %42, %44 : vector<8x128xf32>
    %c0_35 = arith.constant 0 : index
    %c0_36 = arith.constant 0 : index
    %46 = vector.load %arg14[%c0_35, %c0_36] : memref<8x128xf32, #tpu.memory_space<vmem>>, vector<8x128xf32>
    tpu.vector_store %arg14[%c0_35, %c0_36], %45 {strides = array<i32>} : memref<8x128xf32, #tpu.memory_space<vmem>>, vector<8x128xf32>,
    return
  }
  func.func @transform_0(%arg0: i32) -> (i32, i32) {
    %c0_i32 = arith.constant 0 : i32
    %c0_i32_0 = arith.constant 0 : i32
    return %arg0, %c0_i32 : i32, i32
  }
  func.func @transform_1(%arg0: i32) -> (i32, i32) {
    %c0_i32 = arith.constant 0 : i32
    %c0_i32_0 = arith.constant 0 : i32
    %c0_i32_1 = arith.constant 0 : i32
    return %c0_i32, %c0_i32_0 : i32, i32
  }
  func.func @transform_2(%arg0: i32) -> (i32, i32) {
    %c0_i32 = arith.constant 0 : i32
    %c0_i32_0 = arith.constant 0 : i32
    %c0_i32_1 = arith.constant 0 : i32
    return %c0_i32, %c0_i32_0 : i32, i32
  }
  func.func @transform_3(%arg0: i32) -> (i32, i32) {
    %c0_i32 = arith.constant 0 : i32
    %c0_i32_0 = arith.constant 0 : i32
    %c0_i32_1 = arith.constant 0 : i32
    return %c0_i32, %c0_i32_0 : i32, i32
  }
  func.func @transform_4(%arg0: i32) -> (i32, i32) {
    %c0_i32 = arith.constant 0 : i32
    %c0_i32_0 = arith.constant 0 : i32
    %c0_i32_1 = arith.constant 0 : i32
    return %c0_i32, %c0_i32_0 : i32, i32
  }
  func.func @transform_5(%arg0: i32) -> (i32, i32) {
    %c0_i32 = arith.constant 0 : i32
    %c0_i32_0 = arith.constant 0 : i32
    %c0_i32_1 = arith.constant 0 : i32
    return %c0_i32, %c0_i32_0 : i32, i32
  }
  func.func @transform_6(%arg0: i32) -> (i32, i32) {
    %c0_i32 = arith.constant 0 : i32
    %c0_i32_0 = arith.constant 0 : i32
    %c0_i32_1 = arith.constant 0 : i32
    return %c0_i32, %c0_i32_0 : i32, i32
  }
  func.func @transform_7(%arg0: i32) -> (i32, i32) {
    %c0_i32 = arith.constant 0 : i32
    %c0_i32_0 = arith.constant 0 : i32
    %c0_i32_1 = arith.constant 0 : i32
    return %c0_i32, %c0_i32_0 : i32, i32
  }
  func.func @transform_8(%arg0: i32) -> (i32, i32) {
    %c0_i32 = arith.constant 0 : i32
    %c0_i32_0 = arith.constant 0 : i32
    %c0_i32_1 = arith.constant 0 : i32
    return %c0_i32, %c0_i32_0 : i32, i32
  }
  func.func @transform_9(%arg0: i32) -> (i32, i32) {
    %c0_i32 = arith.constant 0 : i32
    %c0_i32_0 = arith.constant 0 : i32
    %c0_i32_1 = arith.constant 0 : i32
    return %c0_i32, %c0_i32_0 : i32, i32
  }
  func.func @transform_10(%arg0: i32) -> (i32, i32) {
    %c0_i32 = arith.constant 0 : i32
    %c0_i32_0 = arith.constant 0 : i32
    %c0_i32_1 = arith.constant 0 : i32
    return %c0_i32, %c0_i32_0 : i32, i32
  }
  func.func @transform_11(%arg0: i32) -> (i32, i32) {
    %c0_i32 = arith.constant 0 : i32
    %c0_i32_0 = arith.constant 0 : i32
    %c0_i32_1 = arith.constant 0 : i32
    return %c0_i32, %c0_i32_0 : i32, i32
  }
  func.func @transform_12(%arg0: i32) -> (i32, i32) {
    %c0_i32 = arith.constant 0 : i32
    %c0_i32_0 = arith.constant 0 : i32
    %c0_i32_1 = arith.constant 0 : i32
    return %c0_i32, %c0_i32_0 : i32, i32
  }
  func.func @transform_13(%arg0: i32) -> (i32, i32) {
    %c0_i32 = arith.constant 0 : i32
    %c0_i32_0 = arith.constant 0 : i32
    return %arg0, %c0_i32 : i32, i32
  }
}

</mosaic_0001>

<llo_original>
// kernel: mlp_forward.1
$region0: #{mlp_forward.1}
  #allocation0 [shape = 'u32[]', space=smem, size = 0x4, offset = 0x4, fixed_abs, tag = 'smem constant byte address 0x4 - core index']
  #allocation1 [shape = 'u32[72,128]{1,0:T(1,128)}', space=vmem, size = 0x9000, scoped, tag = 'internal scratch']
  %s0 = inlined_call_operand.vmem [shape: bf16[16,784], index: 0, kind: input, shape index: {}]
  %s1 = inlined_call_operand.vmem [shape: bf16[784,512], index: 1, kind: input, shape index: {}]
  %s2 = inlined_call_operand.vmem [shape: f32[1,512], index: 2, kind: input, shape index: {}]
  %s3 = inlined_call_operand.vmem [shape: bf16[512,256], index: 3, kind: input, shape index: {}]
  %s4 = inlined_call_operand.vmem [shape: f32[1,256], index: 4, kind: input, shape index: {}]
  %s5 = inlined_call_operand.vmem [shape: bf16[256,128], index: 5, kind: input, shape index: {}]
  %s6 = inlined_call_operand.vmem [shape: f32[1,128], index: 6, kind: input, shape index: {}]
  %s7 = inlined_call_operand.vmem [shape: bf16[128,64], index: 7, kind: input, shape index: {}]
  %s8 = inlined_call_operand.vmem [shape: f32[1,64], index: 8, kind: input, shape index: {}]
  %s9 = inlined_call_operand.vmem [shape: bf16[64,32], index: 9, kind: input, shape index: {}]
  %s10 = inlined_call_operand.vmem [shape: f32[1,32], index: 10, kind: input, shape index: {}]
  %s11 = inlined_call_operand.vmem [shape: bf16[32,128], index: 11, kind: input, shape index: {}]
  %s12 = inlined_call_operand.vmem [shape: f32[1,128], index: 12, kind: input, shape index: {}]
  %s13 = inlined_call_operand.hbm [shape: f32[16,128], index: 13, kind: output, shape index: {}]
  %s14 = sld [smem:[#allocation0]]
  $region85: #{mlp_forward.1} parent=0
    _
  %s16 = ssub.s32 1, %s14
  %s17 = scalar_select 0, %s16, %s14
  $region1: #{mlp_forward.1} parent=0
    #allocation2 [shape = 'u8[8192]{0}', space=vmem, size = 0x2000, scoped, tag = 'output window, operand 0']
    #allocation3 [shape = 's32[2]{0}', space=sflag, size = 0x8, scoped, tag = 'scoped memory for mlp_forward.1']
    %18 = vsyncpa [#allocation3], 0
    %s19 = scalar_lea.sflag [#allocation3], 1
    %20 = vsyncpa %s19, 0
    loop: start=0, step=1, limit=4
    $region2: #{mlp_forward.1} parent=1 // loop_pre_header
      _
    $region3: #{mlp_forward.1} parent=1 // loop_header
      %s22 = sphi 0, %s26
      %p23 = scmp.ge.s32.totalorder %s22, 4
      %s32 = sphi 0, %s34
      %s35 = sphi 0, %s32
      %s36 = sphi 0, %s35
      %s52 = sphi 0, %s36
      %s56 = sphi 0, %s56
      %s58 = sphi 0, %s56
      %s59 = sphi 0, %s58
      %s73 = sphi 0, %s59
      %s77 = sphi 0, %s77
      %s79 = sphi 0, %s77
      %s80 = sphi 0, %s79
      %s94 = sphi 0, %s80
      %s98 = sphi 0, %s98
      %s100 = sphi 0, %s98
      %s101 = sphi 0, %s100
      %s115 = sphi 0, %s101
      %s119 = sphi 0, %s119
      %s121 = sphi 0, %s119
      %s122 = sphi 0, %s121
      %s136 = sphi 0, %s122
      %s140 = sphi 0, %s140
      %s142 = sphi 0, %s140
      %s143 = sphi 0, %s142
      %s157 = sphi 0, %s143
      %s161 = sphi 0, %s161
      %s163 = sphi 0, %s161
      %s164 = sphi 0, %s163
      %s178 = sphi 0, %s164
      %s182 = sphi 0, %s182
      %s184 = sphi 0, %s182
      %s185 = sphi 0, %s184
      %s199 = sphi 0, %s185
      %s203 = sphi 0, %s203
      %s205 = sphi 0, %s203
      %s206 = sphi 0, %s205
      %s220 = sphi 0, %s206
      %s224 = sphi 0, %s224
      %s226 = sphi 0, %s224
      %s227 = sphi 0, %s226
      %s241 = sphi 0, %s227
      %s245 = sphi 0, %s245
      %s247 = sphi 0, %s245
      %s248 = sphi 0, %s247
      %s262 = sphi 0, %s248
      %s266 = sphi 0, %s266
      %s268 = sphi 0, %s266
      %s269 = sphi 0, %s268
      %s283 = sphi 0, %s269
      %s287 = sphi 0, %s287
      %s289 = sphi 0, %s287
      %s290 = sphi 0, %s289
      %s304 = sphi 0, %s290
      %s310 = sphi 0, %s312
      %s313 = sphi 0, %s310
      %s314 = sphi 0, %s313
      %s330 = sphi 0, %s314
    $region4: #{mlp_forward.1} parent=1 // loop_header_branch
      %25 = sbr.rel (%p23) target = $region8
    $region5: #{mlp_forward.1} parent=1 // loop_body
      %s27 = ssub.s32 %s22, 1
      %s28 = ssub.s32 %s22, 2
      %s29 = sadd.s32 %s22, 1
      %s30 = ssub.s32 %s22, %s29
      %p31 = scmp.eq.s32.totalorder %s30, 0
      %s33 = sadd.s32 %s32, 1
      %s34 = scalar_select %p31, %s32, %s33
      %p37 = pneg %p31
      %p38 = scmp.eq.s32.totalorder %s22, 1
      %p39 = por %p37, %p38
      %p40 = scmp.ne.s32.totalorder %s32, %s35
      %p41 = scmp.eq.s32.totalorder %s22, 0
      %p42 = por %p40, %p41
      %p43 = scmp.ne.s32.totalorder %s32, %s35
      %p44 = scmp.eq.s32.totalorder %s27, 1
      %p45 = por %p43, %p44
      %p46 = scmp.ne.s32.totalorder %s35, %s36
      %p47 = scmp.eq.s32.totalorder %s27, 0
      %p48 = por %p46, %p47
      %p49 = scmp.ne.s32.totalorder %s35, %s36
      %p50 = scmp.eq.s32.totalorder %s28, 1
      %p51 = por %p49, %p50
      %p53 = scmp.ne.s32.totalorder %s36, %s52
      %p54 = scmp.eq.s32.totalorder %s28, 0
      %p55 = por %p53, %p54
      %s57 = sadd.s32 %s56, 1
      %p60 = scmp.eq.s32.totalorder %s22, 1
      %p61 = scmp.ne.s32.totalorder %s56, %s58
      %p62 = scmp.eq.s32.totalorder %s22, 0
      %p63 = por %p61, %p62
      %p64 = scmp.ne.s32.totalorder %s56, %s58
      %p65 = scmp.eq.s32.totalorder %s27, 1
      %p66 = por %p64, %p65
      %p67 = scmp.ne.s32.totalorder %s58, %s59
      %p68 = scmp.eq.s32.totalorder %s27, 0
      %p69 = por %p67, %p68
      %p70 = scmp.ne.s32.totalorder %s58, %s59
      %p71 = scmp.eq.s32.totalorder %s28, 1
      %p72 = por %p70, %p71
      %p74 = scmp.ne.s32.totalorder %s59, %s73
      %p75 = scmp.eq.s32.totalorder %s28, 0
      %p76 = por %p74, %p75
      %s78 = sadd.s32 %s77, 1
      %p81 = scmp.eq.s32.totalorder %s22, 1
      %p82 = scmp.ne.s32.totalorder %s77, %s79
      %p83 = scmp.eq.s32.totalorder %s22, 0
      %p84 = por %p82, %p83
      %p85 = scmp.ne.s32.totalorder %s77, %s79
      %p86 = scmp.eq.s32.totalorder %s27, 1
      %p87 = por %p85, %p86
      %p88 = scmp.ne.s32.totalorder %s79, %s80
      %p89 = scmp.eq.s32.totalorder %s27, 0
      %p90 = por %p88, %p89
      %p91 = scmp.ne.s32.totalorder %s79, %s80
      %p92 = scmp.eq.s32.totalorder %s28, 1
      %p93 = por %p91, %p92
      %p95 = scmp.ne.s32.totalorder %s80, %s94
      %p96 = scmp.eq.s32.totalorder %s28, 0
      %p97 = por %p95, %p96
      %s99 = sadd.s32 %s98, 1
      %p102 = scmp.eq.s32.totalorder %s22, 1
      %p103 = scmp.ne.s32.totalorder %s98, %s100
      %p104 = scmp.eq.s32.totalorder %s22, 0
      %p105 = por %p103, %p104
      %p106 = scmp.ne.s32.totalorder %s98, %s100
      %p107 = scmp.eq.s32.totalorder %s27, 1
      %p108 = por %p106, %p107
      %p109 = scmp.ne.s32.totalorder %s100, %s101
      %p110 = scmp.eq.s32.totalorder %s27, 0
      %p111 = por %p109, %p110
      %p112 = scmp.ne.s32.totalorder %s100, %s101
      %p113 = scmp.eq.s32.totalorder %s28, 1
      %p114 = por %p112, %p113
      %p116 = scmp.ne.s32.totalorder %s101, %s115
      %p117 = scmp.eq.s32.totalorder %s28, 0
      %p118 = por %p116, %p117
      %s120 = sadd.s32 %s119, 1
      %p123 = scmp.eq.s32.totalorder %s22, 1
      %p124 = scmp.ne.s32.totalorder %s119, %s121
      %p125 = scmp.eq.s32.totalorder %s22, 0
      %p126 = por %p124, %p125
      %p127 = scmp.ne.s32.totalorder %s119, %s121
      %p128 = scmp.eq.s32.totalorder %s27, 1
      %p129 = por %p127, %p128
      %p130 = scmp.ne.s32.totalorder %s121, %s122
      %p131 = scmp.eq.s32.totalorder %s27, 0
      %p132 = por %p130, %p131
      %p133 = scmp.ne.s32.totalorder %s121, %s122
      %p134 = scmp.eq.s32.totalorder %s28, 1
      %p135 = por %p133, %p134
      %p137 = scmp.ne.s32.totalorder %s122, %s136
      %p138 = scmp.eq.s32.totalorder %s28, 0
      %p139 = por %p137, %p138
      %s141 = sadd.s32 %s140, 1
      %p144 = scmp.eq.s32.totalorder %s22, 1
      %p145 = scmp.ne.s32.totalorder %s140, %s142
      %p146 = scmp.eq.s32.totalorder %s22, 0
      %p147 = por %p145, %p146
      %p148 = scmp.ne.s32.totalorder %s140, %s142
      %p149 = scmp.eq.s32.totalorder %s27, 1
      %p150 = por %p148, %p149
      %p151 = scmp.ne.s32.totalorder %s142, %s143
      %p152 = scmp.eq.s32.totalorder %s27, 0
      %p153 = por %p151, %p152
      %p154 = scmp.ne.s32.totalorder %s142, %s143
      %p155 = scmp.eq.s32.totalorder %s28, 1
      %p156 = por %p154, %p155
      %p158 = scmp.ne.s32.totalorder %s143, %s157
      %p159 = scmp.eq.s32.totalorder %s28, 0
      %p160 = por %p158, %p159
      %s162 = sadd.s32 %s161, 1
      %p165 = scmp.eq.s32.totalorder %s22, 1
      %p166 = scmp.ne.s32.totalorder %s161, %s163
      %p167 = scmp.eq.s32.totalorder %s22, 0
      %p168 = por %p166, %p167
      %p169 = scmp.ne.s32.totalorder %s161, %s163
      %p170 = scmp.eq.s32.totalorder %s27, 1
      %p171 = por %p169, %p170
      %p172 = scmp.ne.s32.totalorder %s163, %s164
      %p173 = scmp.eq.s32.totalorder %s27, 0
      %p174 = por %p172, %p173
      %p175 = scmp.ne.s32.totalorder %s163, %s164
      %p176 = scmp.eq.s32.totalorder %s28, 1
      %p177 = por %p175, %p176
      %p179 = scmp.ne.s32.totalorder %s164, %s178
      %p180 = scmp.eq.s32.totalorder %s28, 0
      %p181 = por %p179, %p180
      %s183 = sadd.s32 %s182, 1
      %p186 = scmp.eq.s32.totalorder %s22, 1
      %p187 = scmp.ne.s32.totalorder %s182, %s184
      %p188 = scmp.eq.s32.totalorder %s22, 0
      %p189 = por %p187, %p188
      %p190 = scmp.ne.s32.totalorder %s182, %s184
      %p191 = scmp.eq.s32.totalorder %s27, 1
      %p192 = por %p190, %p191
      %p193 = scmp.ne.s32.totalorder %s184, %s185
      %p194 = scmp.eq.s32.totalorder %s27, 0
      %p195 = por %p193, %p194
      %p196 = scmp.ne.s32.totalorder %s184, %s185
      %p197 = scmp.eq.s32.totalorder %s28, 1
      %p198 = por %p196, %p197
      %p200 = scmp.ne.s32.totalorder %s185, %s199
      %p201 = scmp.eq.s32.totalorder %s28, 0
      %p202 = por %p200, %p201
      %s204 = sadd.s32 %s203, 1
      %p207 = scmp.eq.s32.totalorder %s22, 1
      %p208 = scmp.ne.s32.totalorder %s203, %s205
      %p209 = scmp.eq.s32.totalorder %s22, 0
      %p210 = por %p208, %p209
      %p211 = scmp.ne.s32.totalorder %s203, %s205
      %p212 = scmp.eq.s32.totalorder %s27, 1
      %p213 = por %p211, %p212
      %p214 = scmp.ne.s32.totalorder %s205, %s206
      %p215 = scmp.eq.s32.totalorder %s27, 0
      %p216 = por %p214, %p215
      %p217 = scmp.ne.s32.totalorder %s205, %s206
      %p218 = scmp.eq.s32.totalorder %s28, 1
      %p219 = por %p217, %p218
      %p221 = scmp.ne.s32.totalorder %s206, %s220
      %p222 = scmp.eq.s32.totalorder %s28, 0
      %p223 = por %p221, %p222
      %s225 = sadd.s32 %s224, 1
      %p228 = scmp.eq.s32.totalorder %s22, 1
      %p229 = scmp.ne.s32.totalorder %s224, %s226
      %p230 = scmp.eq.s32.totalorder %s22, 0
      %p231 = por %p229, %p230
      %p232 = scmp.ne.s32.totalorder %s224, %s226
      %p233 = scmp.eq.s32.totalorder %s27, 1
      %p234 = por %p232, %p233
      %p235 = scmp.ne.s32.totalorder %s226, %s227
      %p236 = scmp.eq.s32.totalorder %s27, 0
      %p237 = por %p235, %p236
      %p238 = scmp.ne.s32.totalorder %s226, %s227
      %p239 = scmp.eq.s32.totalorder %s28, 1
      %p240 = por %p238, %p239
      %p242 = scmp.ne.s32.totalorder %s227, %s241
      %p243 = scmp.eq.s32.totalorder %s28, 0
      %p244 = por %p242, %p243
      %s246 = sadd.s32 %s245, 1
      %p249 = scmp.eq.s32.totalorder %s22, 1
      %p250 = scmp.ne.s32.totalorder %s245, %s247
      %p251 = scmp.eq.s32.totalorder %s22, 0
      %p252 = por %p250, %p251
      %p253 = scmp.ne.s32.totalorder %s245, %s247
      %p254 = scmp.eq.s32.totalorder %s27, 1
      %p255 = por %p253, %p254
      %p256 = scmp.ne.s32.totalorder %s247, %s248
      %p257 = scmp.eq.s32.totalorder %s27, 0
      %p258 = por %p256, %p257
      %p259 = scmp.ne.s32.totalorder %s247, %s248
      %p260 = scmp.eq.s32.totalorder %s28, 1
      %p261 = por %p259, %p260
      %p263 = scmp.ne.s32.totalorder %s248, %s262
      %p264 = scmp.eq.s32.totalorder %s28, 0
      %p265 = por %p263, %p264
      %s267 = sadd.s32 %s266, 1
      %p270 = scmp.eq.s32.totalorder %s22, 1
      %p271 = scmp.ne.s32.totalorder %s266, %s268
      %p272 = scmp.eq.s32.totalorder %s22, 0
      %p273 = por %p271, %p272
      %p274 = scmp.ne.s32.totalorder %s266, %s268
      %p275 = scmp.eq.s32.totalorder %s27, 1
      %p276 = por %p274, %p275
      %p277 = scmp.ne.s32.totalorder %s268, %s269
      %p278 = scmp.eq.s32.totalorder %s27, 0
      %p279 = por %p277, %p278
      %p280 = scmp.ne.s32.totalorder %s268, %s269
      %p281 = scmp.eq.s32.totalorder %s28, 1
      %p282 = por %p280, %p281
      %p284 = scmp.ne.s32.totalorder %s269, %s283
      %p285 = scmp.eq.s32.totalorder %s28, 0
      %p286 = por %p284, %p285
      %s288 = sadd.s32 %s287, 1
      %p291 = scmp.eq.s32.totalorder %s22, 1
      %p292 = scmp.ne.s32.totalorder %s287, %s289
      %p293 = scmp.eq.s32.totalorder %s22, 0
      %p294 = por %p292, %p293
      %p295 = scmp.ne.s32.totalorder %s287, %s289
      %p296 = scmp.eq.s32.totalorder %s27, 1
      %p297 = por %p295, %p296
      %p298 = scmp.ne.s32.totalorder %s289, %s290
      %p299 = scmp.eq.s32.totalorder %s27, 0
      %p300 = por %p298, %p299
      %p301 = scmp.ne.s32.totalorder %s289, %s290
      %p302 = scmp.eq.s32.totalorder %s28, 1
      %p303 = por %p301, %p302
      %p305 = scmp.ne.s32.totalorder %s290, %s304
      %p306 = scmp.eq.s32.totalorder %s28, 0
      %p307 = por %p305, %p306
      %s308 = ssub.s32 %s22, %s29
      %p309 = scmp.eq.s32.totalorder %s308, 0
      %s311 = sadd.s32 %s310, 1
      %s312 = scalar_select %p309, %s310, %s311
      %p315 = pneg %p309
      %p316 = scmp.eq.s32.totalorder %s22, 1
      %p317 = por %p315, %p316
      %p318 = scmp.ne.s32.totalorder %s310, %s313
      %p319 = scmp.eq.s32.totalorder %s22, 0
      %p320 = por %p318, %p319
      %p321 = scmp.ne.s32.totalorder %s310, %s313
      %p322 = scmp.eq.s32.totalorder %s27, 1
      %p323 = por %p321, %p322
      %p324 = scmp.ne.s32.totalorder %s313, %s314
      %p325 = scmp.eq.s32.totalorder %s27, 0
      %p326 = por %p324, %p325
      %p327 = scmp.ne.s32.totalorder %s313, %s314
      %p328 = scmp.eq.s32.totalorder %s28, 1
      %p329 = por %p327, %p328
      %p331 = scmp.ne.s32.totalorder %s314, %s330
      %p332 = scmp.eq.s32.totalorder %s28, 0
      %p333 = por %p331, %p332
      %p334 = scmp.le.s32.totalorder 1, %s22
      %p335 = scmp.lt.s32.totalorder %s22, 3
      %p336 = pnand %p334, %p335
      %p337 = pneg %p336
      // Predicated region
      $region9: #{mlp_forward.1} parent=5 // pred_check
        _
      $region10: #{mlp_forward.1} parent=5 // pred_check_branch
        %339 = sbr.rel (%p336) target = $region12
      $region11: #{mlp_forward.1} parent=5 // pred_region
        %s340 = ssub.s32 %s22, 1
        // Predicated region
        $region13: #{mlp_forward.1} parent=11 // pred_check
          %p341 = pneg %p69
        $region14: #{mlp_forward.1} parent=11 // pred_check_branch
          %343 = sbr.rel (%p341) target = $region16
        $region15: #{mlp_forward.1} parent=11 // pred_region
          _
        $region16: #{mlp_forward.1} parent=11 // pred_fallthru
          _
        // Predicated region
        $region17: #{mlp_forward.1} parent=11 // pred_check
          %p344 = pneg %p90
        $region18: #{mlp_forward.1} parent=11 // pred_check_branch
          %346 = sbr.rel (%p344) target = $region20
        $region19: #{mlp_forward.1} parent=11 // pred_region
          _
        $region20: #{mlp_forward.1} parent=11 // pred_fallthru
          _
        // Predicated region
        $region21: #{mlp_forward.1} parent=11 // pred_check
          %p347 = pneg %p111
        $region22: #{mlp_forward.1} parent=11 // pred_check_branch
          %349 = sbr.rel (%p347) target = $region24
        $region23: #{mlp_forward.1} parent=11 // pred_region
          _
        $region24: #{mlp_forward.1} parent=11 // pred_fallthru
          _
        // Predicated region
        $region25: #{mlp_forward.1} parent=11 // pred_check
          %p350 = pneg %p132
        $region26: #{mlp_forward.1} parent=11 // pred_check_branch
          %352 = sbr.rel (%p350) target = $region28
        $region27: #{mlp_forward.1} parent=11 // pred_region
          _
        $region28: #{mlp_forward.1} parent=11 // pred_fallthru
          _
        // Predicated region
        $region29: #{mlp_forward.1} parent=11 // pred_check
          %p353 = pneg %p153
        $region30: #{mlp_forward.1} parent=11 // pred_check_branch
          %355 = sbr.rel (%p353) target = $region32
        $region31: #{mlp_forward.1} parent=11 // pred_region
          _
        $region32: #{mlp_forward.1} parent=11 // pred_fallthru
          _
        // Predicated region
        $region33: #{mlp_forward.1} parent=11 // pred_check
          %p356 = pneg %p174
        $region34: #{mlp_forward.1} parent=11 // pred_check_branch
          %358 = sbr.rel (%p356) target = $region36
        $region35: #{mlp_forward.1} parent=11 // pred_region
          _
        $region36: #{mlp_forward.1} parent=11 // pred_fallthru
          _
        // Predicated region
        $region37: #{mlp_forward.1} parent=11 // pred_check
          %p359 = pneg %p195
        $region38: #{mlp_forward.1} parent=11 // pred_check_branch
          %361 = sbr.rel (%p359) target = $region40
        $region39: #{mlp_forward.1} parent=11 // pred_region
          _
        $region40: #{mlp_forward.1} parent=11 // pred_fallthru
          _
        // Predicated region
        $region41: #{mlp_forward.1} parent=11 // pred_check
          %p362 = pneg %p216
        $region42: #{mlp_forward.1} parent=11 // pred_check_branch
          %364 = sbr.rel (%p362) target = $region44
        $region43: #{mlp_forward.1} parent=11 // pred_region
          _
        $region44: #{mlp_forward.1} parent=11 // pred_fallthru
          _
        // Predicated region
        $region45: #{mlp_forward.1} parent=11 // pred_check
          %p365 = pneg %p237
        $region46: #{mlp_forward.1} parent=11 // pred_check_branch
          %367 = sbr.rel (%p365) target = $region48
        $region47: #{mlp_forward.1} parent=11 // pred_region
          _
        $region48: #{mlp_forward.1} parent=11 // pred_fallthru
          _
        // Predicated region
        $region49: #{mlp_forward.1} parent=11 // pred_check
          %p368 = pneg %p258
        $region50: #{mlp_forward.1} parent=11 // pred_check_branch
          %370 = sbr.rel (%p368) target = $region52
        $region51: #{mlp_forward.1} parent=11 // pred_region
          _
        $region52: #{mlp_forward.1} parent=11 // pred_fallthru
          _
        // Predicated region
        $region53: #{mlp_forward.1} parent=11 // pred_check
          %p371 = pneg %p279
        $region54: #{mlp_forward.1} parent=11 // pred_check_branch
          %373 = sbr.rel (%p371) target = $region56
        $region55: #{mlp_forward.1} parent=11 // pred_region
          _
        $region56: #{mlp_forward.1} parent=11 // pred_fallthru
          _
        // Predicated region
        $region57: #{mlp_forward.1} parent=11 // pred_check
          %p374 = pneg %p300
        $region58: #{mlp_forward.1} parent=11 // pred_check_branch
          %376 = sbr.rel (%p374) target = $region60
        $region59: #{mlp_forward.1} parent=11 // pred_region
          _
        $region60: #{mlp_forward.1} parent=11 // pred_fallthru
          _
      $region12: #{mlp_forward.1} parent=5 // pred_fallthru
        _
      %p377 = scmp.lt.s32.totalorder %s22, 2
      // Predicated region
      $region61: #{mlp_forward.1} parent=5 // pred_check
        %p378 = pneg %p377
      $region62: #{mlp_forward.1} parent=5 // pred_check_branch
        %380 = sbr.rel (%p378) target = $region64
      $region63: #{mlp_forward.1} parent=5 // pred_region
        // Predicated region
        $region65: #{mlp_forward.1} parent=63 // pred_check
          %p381 = pneg %p42
        $region66: #{mlp_forward.1} parent=63 // pred_check_branch
          %383 = sbr.rel (%p381) target = $region68
        $region67: #{mlp_forward.1} parent=63 // pred_region
          %p384 = scmp.lt.s32.totalorder %s22, 1
          %s385 = scalar_select %p384, %s22, 1
          %s386 = smul.addr %s385, 7
          %s387 = smul.addr %s386, 4
          %s388 = scalar_lea.vmem %s0, %s387
        $region68: #{mlp_forward.1} parent=63 // pred_fallthru
          _
      $region64: #{mlp_forward.1} parent=5 // pred_fallthru
        _
      %p389 = scmp.le.s32.totalorder 1, %s22
      %p390 = scmp.lt.s32.totalorder %s22, 3
      %p391 = pnand %p389, %p390
      %p392 = pneg %p391
      // Predicated region
      $region69: #{mlp_forward.1} parent=5 // pred_check
        _
      $region70: #{mlp_forward.1} parent=5 // pred_check_branch
        %394 = sbr.rel (%p391) target = $region72
      $region71: #{mlp_forward.1} parent=5 // pred_region
        %s395 = ssub.s32 %s22, 1
        %p396 = scmp.lt.s32.totalorder %s27, 1
        %s397 = scalar_select %p396, %s27, 1
        %s398 = smul.addr %s397, 7
        %s399 = smul.addr %s398, 4
        %s400 = scalar_lea.vmem %s0, %s399
        %p401 = pneg %p48
        %p402 = pneg %p45
        %p403 = pneg %p69
        %p404 = pneg %p66
        %p405 = pneg %p90
        %p406 = pneg %p87
        %p407 = pneg %p111
        %p408 = pneg %p108
        %p409 = pneg %p132
        %p410 = pneg %p129
        %p411 = pneg %p153
        %p412 = pneg %p150
        %p413 = pneg %p174
        %p414 = pneg %p171
        %p415 = pneg %p195
        %p416 = pneg %p192
        %p417 = pneg %p216
        %p418 = pneg %p213
        %p419 = pneg %p237
        %p420 = pneg %p234
        %p421 = pneg %p258
        %p422 = pneg %p255
        %p423 = pneg %p279
        %p424 = pneg %p276
        %p425 = pneg %p300
        %p426 = pneg %p297
        %p427 = pneg %p326
        %p428 = pneg %p323
        %s429 = sand.u32 %s313, 1
        %s430 = scalar_lea.sflag [#allocation3], %s429
        %s431 = sand.u32 %s313, 1
        %s432 = smul.addr %s431, 8
        %s433 = scalar_lea.vmem [#allocation2], %s432
        %p434 = scmp.lt.s32.totalorder %s27, 1
        %s435 = scalar_select %p434, %s27, 1
        %s436 = smul.addr %s435, 7
        %s437 = smul.addr %s436, 4
        %s438 = scalar_lea.vmem %s0, %s437
        %v440 = vld [vmem:[%s438] sm:$0xff]
        %v441 = vld [vmem:[%s438 + $0x8] sm:$0xff]
        %v442 = vld [vmem:[%s438 + $0x10] sm:$0xff]
        %v443 = vld [vmem:[%s438 + $0x18] sm:$0xf]
        %v444 = vld [vmem:[%s1] sm:$0xff]
        %v445 = vld [vmem:[%s1 + $0x8] sm:$0xff]
        %v446 = vld [vmem:[%s1 + $0x10] sm:$0xff]
        %v447 = vld [vmem:[%s1 + $0x18] sm:$0xff]
        %v448 = vld [vmem:[%s1 + $0x20] sm:$0xff]
        %v449 = vld [vmem:[%s1 + $0x28] sm:$0xff]
        %v450 = vld [vmem:[%s1 + $0x30] sm:$0xff]
        %v451 = vld [vmem:[%s1 + $0x38] sm:$0xff]
        %v452 = vld [vmem:[%s1 + $0x40] sm:$0xff]
        %v453 = vld [vmem:[%s1 + $0x48] sm:$0xff]
        %v454 = vld [vmem:[%s1 + $0x50] sm:$0xff]
        %v455 = vld [vmem:[%s1 + $0x58] sm:$0xff]
        %v456 = vld [vmem:[%s1 + $0x60] sm:$0xff]
        %v457 = vld [vmem:[%s1 + $0x68] sm:$0xff]
        %v458 = vld [vmem:[%s1 + $0x70] sm:$0xff]
        %v459 = vld [vmem:[%s1 + $0x78] sm:$0xff]
        %v460 = vld [vmem:[%s1 + $0x80] sm:$0xff]
        %v461 = vld [vmem:[%s1 + $0x88] sm:$0xff]
        %v462 = vld [vmem:[%s1 + $0x90] sm:$0xff]
        %v463 = vld [vmem:[%s1 + $0x98] sm:$0xff]
        %v464 = vld [vmem:[%s1 + $0xa0] sm:$0xff]
        %v465 = vld [vmem:[%s1 + $0xa8] sm:$0xff]
        %v466 = vld [vmem:[%s1 + $0xb0] sm:$0xff]
        %v467 = vld [vmem:[%s1 + $0xb8] sm:$0xff]
        %v468 = vld [vmem:[%s1 + $0xc0] sm:$0xff]
        %v469 = vld [vmem:[%s1 + $0xc8] sm:$0xff]
        %v470 = vld [vmem:[%s1 + $0xd0] sm:$0xff]
        %v471 = vld [vmem:[%s1 + $0xd8] sm:$0xff]
        %v472 = vld [vmem:[%s1 + $0xe0] sm:$0xff]
        %v473 = vld [vmem:[%s1 + $0xe8] sm:$0xff]
        %v474 = vld [vmem:[%s1 + $0xf0] sm:$0xff]
        %v475 = vld [vmem:[%s1 + $0xf8] sm:$0xff]
        %v476 = vld [vmem:[%s1 + $0x100] sm:$0xff]
        %v477 = vld [vmem:[%s1 + $0x108] sm:$0xff]
        %v478 = vld [vmem:[%s1 + $0x110] sm:$0xff]
        %v479 = vld [vmem:[%s1 + $0x118] sm:$0xff]
        %v480 = vld [vmem:[%s1 + $0x120] sm:$0xff]
        %v481 = vld [vmem:[%s1 + $0x128] sm:$0xff]
        %v482 = vld [vmem:[%s1 + $0x130] sm:$0xff]
        %v483 = vld [vmem:[%s1 + $0x138] sm:$0xff]
        %v484 = vld [vmem:[%s1 + $0x140] sm:$0xff]
        %v485 = vld [vmem:[%s1 + $0x148] sm:$0xff]
        %v486 = vld [vmem:[%s1 + $0x150] sm:$0xff]
        %v487 = vld [vmem:[%s1 + $0x158] sm:$0xff]
        %v488 = vld [vmem:[%s1 + $0x160] sm:$0xff]
        %v489 = vld [vmem:[%s1 + $0x168] sm:$0xff]
        %v490 = vld [vmem:[%s1 + $0x170] sm:$0xff]
        %v491 = vld [vmem:[%s1 + $0x178] sm:$0xff]
        %v492 = vld [vmem:[%s1 + $0x180] sm:$0xff]
        %v493 = vld [vmem:[%s1 + $0x188] sm:$0xff]
        %v494 = vld [vmem:[%s1 + $0x190] sm:$0xff]
        %v495 = vld [vmem:[%s1 + $0x198] sm:$0xff]
        %v496 = vld [vmem:[%s1 + $0x1a0] sm:$0xff]
        %v497 = vld [vmem:[%s1 + $0x1a8] sm:$0xff]
        %v498 = vld [vmem:[%s1 + $0x1b0] sm:$0xff]
        %v499 = vld [vmem:[%s1 + $0x1b8] sm:$0xff]
        %v500 = vld [vmem:[%s1 + $0x1c0] sm:$0xff]
        %v501 = vld [vmem:[%s1 + $0x1c8] sm:$0xff]
        %v502 = vld [vmem:[%s1 + $0x1d0] sm:$0xff]
        %v503 = vld [vmem:[%s1 + $0x1d8] sm:$0xff]
        %v504 = vld [vmem:[%s1 + $0x1e0] sm:$0xff]
        %v505 = vld [vmem:[%s1 + $0x1e8] sm:$0xff]
        %v506 = vld [vmem:[%s1 + $0x1f0] sm:$0xff]
        %v507 = vld [vmem:[%s1 + $0x1f8] sm:$0xff]
        %v508 = vld [vmem:[%s1 + $0x200] sm:$0xff]
        %v509 = vld [vmem:[%s1 + $0x208] sm:$0xff]
        %v510 = vld [vmem:[%s1 + $0x210] sm:$0xff]
        %v511 = vld [vmem:[%s1 + $0x218] sm:$0xff]
        %v512 = vld [vmem:[%s1 + $0x220] sm:$0xff]
        %v513 = vld [vmem:[%s1 + $0x228] sm:$0xff]
        %v514 = vld [vmem:[%s1 + $0x230] sm:$0xff]
        %v515 = vld [vmem:[%s1 + $0x238] sm:$0xff]
        %v516 = vld [vmem:[%s1 + $0x240] sm:$0xff]
        %v517 = vld [vmem:[%s1 + $0x248] sm:$0xff]
        %v518 = vld [vmem:[%s1 + $0x250] sm:$0xff]
        %v519 = vld [vmem:[%s1 + $0x258] sm:$0xff]
        %v520 = vld [vmem:[%s1 + $0x260] sm:$0xff]
        %v521 = vld [vmem:[%s1 + $0x268] sm:$0xff]
        %v522 = vld [vmem:[%s1 + $0x270] sm:$0xff]
        %v523 = vld [vmem:[%s1 + $0x278] sm:$0xff]
        %v524 = vld [vmem:[%s1 + $0x280] sm:$0xff]
        %v525 = vld [vmem:[%s1 + $0x288] sm:$0xff]
        %v526 = vld [vmem:[%s1 + $0x290] sm:$0xff]
        %v527 = vld [vmem:[%s1 + $0x298] sm:$0xff]
        %v528 = vld [vmem:[%s1 + $0x2a0] sm:$0xff]
        %v529 = vld [vmem:[%s1 + $0x2a8] sm:$0xff]
        %v530 = vld [vmem:[%s1 + $0x2b0] sm:$0xff]
        %v531 = vld [vmem:[%s1 + $0x2b8] sm:$0xff]
        %v532 = vld [vmem:[%s1 + $0x2c0] sm:$0xff]
        %v533 = vld [vmem:[%s1 + $0x2c8] sm:$0xff]
        %v534 = vld [vmem:[%s1 + $0x2d0] sm:$0xff]
        %v535 = vld [vmem:[%s1 + $0x2d8] sm:$0xff]
        %v536 = vld [vmem:[%s1 + $0x2e0] sm:$0xff]
        %v537 = vld [vmem:[%s1 + $0x2e8] sm:$0xff]
        %v538 = vld [vmem:[%s1 + $0x2f0] sm:$0xff]
        %v539 = vld [vmem:[%s1 + $0x2f8] sm:$0xff]
        %v540 = vld [vmem:[%s1 + $0x300] sm:$0xff]
        %v541 = vld [vmem:[%s1 + $0x308] sm:$0xff]
        %v542 = vld [vmem:[%s1 + $0x310] sm:$0xff]
        %v543 = vld [vmem:[%s1 + $0x318] sm:$0xff]
        %v544 = vld [vmem:[%s1 + $0x320] sm:$0xff]
        %v545 = vld [vmem:[%s1 + $0x328] sm:$0xff]
        %v546 = vld [vmem:[%s1 + $0x330] sm:$0xff]
        %v547 = vld [vmem:[%s1 + $0x338] sm:$0xff]
        %v548 = vld [vmem:[%s1 + $0x340] sm:$0xff]
        %v549 = vld [vmem:[%s1 + $0x348] sm:$0xff]
        %v550 = vld [vmem:[%s1 + $0x350] sm:$0xff]
        %v551 = vld [vmem:[%s1 + $0x358] sm:$0xff]
        %v552 = vld [vmem:[%s1 + $0x360] sm:$0xff]
        %v553 = vld [vmem:[%s1 + $0x368] sm:$0xff]
        %v554 = vld [vmem:[%s1 + $0x370] sm:$0xff]
        %v555 = vld [vmem:[%s1 + $0x378] sm:$0xff]
        %v556 = vld [vmem:[%s1 + $0x380] sm:$0xff]
        %v557 = vld [vmem:[%s1 + $0x388] sm:$0xff]
        %v558 = vld [vmem:[%s1 + $0x390] sm:$0xff]
        %v559 = vld [vmem:[%s1 + $0x398] sm:$0xff]
        %v560 = vld [vmem:[%s1 + $0x3a0] sm:$0xff]
        %v561 = vld [vmem:[%s1 + $0x3a8] sm:$0xff]
        %v562 = vld [vmem:[%s1 + $0x3b0] sm:$0xff]
        %v563 = vld [vmem:[%s1 + $0x3b8] sm:$0xff]
        %v564 = vld [vmem:[%s1 + $0x3c0] sm:$0xff]
        %v565 = vld [vmem:[%s1 + $0x3c8] sm:$0xff]
        %v566 = vld [vmem:[%s1 + $0x3d0] sm:$0xff]
        %v567 = vld [vmem:[%s1 + $0x3d8] sm:$0xff]
        %v568 = vld [vmem:[%s1 + $0x3e0] sm:$0xff]
        %v569 = vld [vmem:[%s1 + $0x3e8] sm:$0xff]
        %v570 = vld [vmem:[%s1 + $0x3f0] sm:$0xff]
        %v571 = vld [vmem:[%s1 + $0x3f8] sm:$0xff]
        %v572 = vld [vmem:[%s1 + $0x400] sm:$0xff]
        %v573 = vld [vmem:[%s1 + $0x408] sm:$0xff]
        %v574 = vld [vmem:[%s1 + $0x410] sm:$0xff]
        %v575 = vld [vmem:[%s1 + $0x418] sm:$0xff]
        %v576 = vld [vmem:[%s1 + $0x420] sm:$0xff]
        %v577 = vld [vmem:[%s1 + $0x428] sm:$0xff]
        %v578 = vld [vmem:[%s1 + $0x430] sm:$0xff]
        %v579 = vld [vmem:[%s1 + $0x438] sm:$0xff]
        %v580 = vld [vmem:[%s1 + $0x440] sm:$0xff]
        %v581 = vld [vmem:[%s1 + $0x448] sm:$0xff]
        %v582 = vld [vmem:[%s1 + $0x450] sm:$0xff]
        %v583 = vld [vmem:[%s1 + $0x458] sm:$0xff]
        %v584 = vld [vmem:[%s1 + $0x460] sm:$0xff]
        %v585 = vld [vmem:[%s1 + $0x468] sm:$0xff]
        %v586 = vld [vmem:[%s1 + $0x470] sm:$0xff]
        %v587 = vld [vmem:[%s1 + $0x478] sm:$0xff]
        %v588 = vld [vmem:[%s1 + $0x480] sm:$0xff]
        %v589 = vld [vmem:[%s1 + $0x488] sm:$0xff]
        %v590 = vld [vmem:[%s1 + $0x490] sm:$0xff]
        %v591 = vld [vmem:[%s1 + $0x498] sm:$0xff]
        %v592 = vld [vmem:[%s1 + $0x4a0] sm:$0xff]
        %v593 = vld [vmem:[%s1 + $0x4a8] sm:$0xff]
        %v594 = vld [vmem:[%s1 + $0x4b0] sm:$0xff]
        %v595 = vld [vmem:[%s1 + $0x4b8] sm:$0xff]
        %v596 = vld [vmem:[%s1 + $0x4c0] sm:$0xff]
        %v597 = vld [vmem:[%s1 + $0x4c8] sm:$0xff]
        %v598 = vld [vmem:[%s1 + $0x4d0] sm:$0xff]
        %v599 = vld [vmem:[%s1 + $0x4d8] sm:$0xff]
        %v600 = vld [vmem:[%s1 + $0x4e0] sm:$0xff]
        %v601 = vld [vmem:[%s1 + $0x4e8] sm:$0xff]
        %v602 = vld [vmem:[%s1 + $0x4f0] sm:$0xff]
        %v603 = vld [vmem:[%s1 + $0x4f8] sm:$0xff]
        %v604 = vld [vmem:[%s1 + $0x500] sm:$0xff]
        %v605 = vld [vmem:[%s1 + $0x508] sm:$0xff]
        %v606 = vld [vmem:[%s1 + $0x510] sm:$0xff]
        %v607 = vld [vmem:[%s1 + $0x518] sm:$0xff]
        %v608 = vld [vmem:[%s1 + $0x520] sm:$0xff]
        %v609 = vld [vmem:[%s1 + $0x528] sm:$0xff]
        %v610 = vld [vmem:[%s1 + $0x530] sm:$0xff]
        %v611 = vld [vmem:[%s1 + $0x538] sm:$0xff]
        %v612 = vld [vmem:[%s1 + $0x540] sm:$0xff]
        %v613 = vld [vmem:[%s1 + $0x548] sm:$0xff]
        %v614 = vld [vmem:[%s1 + $0x550] sm:$0xff]
        %v615 = vld [vmem:[%s1 + $0x558] sm:$0xff]
        %v616 = vld [vmem:[%s1 + $0x560] sm:$0xff]
        %v617 = vld [vmem:[%s1 + $0x568] sm:$0xff]
        %v618 = vld [vmem:[%s1 + $0x570] sm:$0xff]
        %v619 = vld [vmem:[%s1 + $0x578] sm:$0xff]
        %v620 = vld [vmem:[%s1 + $0x580] sm:$0xff]
        %v621 = vld [vmem:[%s1 + $0x588] sm:$0xff]
        %v622 = vld [vmem:[%s1 + $0x590] sm:$0xff]
        %v623 = vld [vmem:[%s1 + $0x598] sm:$0xff]
        %v624 = vld [vmem:[%s1 + $0x5a0] sm:$0xff]
        %v625 = vld [vmem:[%s1 + $0x5a8] sm:$0xff]
        %v626 = vld [vmem:[%s1 + $0x5b0] sm:$0xff]
        %v627 = vld [vmem:[%s1 + $0x5b8] sm:$0xff]
        %v628 = vld [vmem:[%s1 + $0x5c0] sm:$0xff]
        %v629 = vld [vmem:[%s1 + $0x5c8] sm:$0xff]
        %v630 = vld [vmem:[%s1 + $0x5d0] sm:$0xff]
        %v631 = vld [vmem:[%s1 + $0x5d8] sm:$0xff]
        %v632 = vld [vmem:[%s1 + $0x5e0] sm:$0xff]
        %v633 = vld [vmem:[%s1 + $0x5e8] sm:$0xff]
        %v634 = vld [vmem:[%s1 + $0x5f0] sm:$0xff]
        %v635 = vld [vmem:[%s1 + $0x5f8] sm:$0xff]
        %v636 = vld [vmem:[%s1 + $0x600] sm:$0xff]
        %v637 = vld [vmem:[%s1 + $0x608] sm:$0xff]
        %v638 = vld [vmem:[%s1 + $0x610] sm:$0xff]
        %v639 = vld [vmem:[%s1 + $0x618] sm:$0xff]
        %v640 = vld [vmem:[%s2] sm:$0xf]
        %v642 = vperm.slane %v640, 0
        %v643 = vperm.slane %v640, 1
        %v644 = vperm.slane %v640, 2
        %v645 = vperm.slane %v640, 3
        %v654 = vunpack.c.l.b16 %v440
        %v655 = vunpack.c.h.b16 %v440
        %v656 = vunpack.c.l.b16 %v441
        %v657 = vunpack.c.h.b16 %v441
        %v658 = vunpack.c.l.b16 %v442
        %v659 = vunpack.c.h.b16 %v442
        %v660 = vunpack.c.l.b16 %v443
        %v661 = vpack.c.b16 %v654, %v654
        %v662 = vpack.c.b16 %v655, %v655
        %v663 = vpack.c.b16 %v656, %v656
        %v664 = vpack.c.b16 %v657, %v657
        %v665 = vpack.c.b16 %v658, %v658
        %v666 = vpack.c.b16 %v659, %v659
        %v667 = vpack.c.b16 %v660, %v660
        %v870 = vunpack.c.l.b16 %v444
        %v871 = vunpack.c.h.b16 %v444
        %v872 = vunpack.c.l.b16 %v445
        %v873 = vunpack.c.h.b16 %v445
        %v874 = vunpack.c.l.b16 %v446
        %v875 = vunpack.c.h.b16 %v446
        %v876 = vunpack.c.l.b16 %v447
        %v877 = vunpack.c.h.b16 %v447
        %v878 = vunpack.c.l.b16 %v448
        %v879 = vunpack.c.h.b16 %v448
        %v880 = vunpack.c.l.b16 %v449
        %v881 = vunpack.c.h.b16 %v449
        %v882 = vunpack.c.l.b16 %v450
        %v883 = vunpack.c.h.b16 %v450
        %v884 = vunpack.c.l.b16 %v451
        %v885 = vunpack.c.h.b16 %v451
        %v886 = vunpack.c.l.b16 %v452
        %v887 = vunpack.c.h.b16 %v452
        %v888 = vunpack.c.l.b16 %v453
        %v889 = vunpack.c.h.b16 %v453
        %v890 = vunpack.c.l.b16 %v454
        %v891 = vunpack.c.h.b16 %v454
        %v892 = vunpack.c.l.b16 %v455
        %v893 = vunpack.c.h.b16 %v455
        %v894 = vunpack.c.l.b16 %v456
        %v895 = vunpack.c.h.b16 %v456
        %v896 = vunpack.c.l.b16 %v457
        %v897 = vunpack.c.h.b16 %v457
        %v898 = vunpack.c.l.b16 %v458
        %v899 = vunpack.c.h.b16 %v458
        %v900 = vunpack.c.l.b16 %v459
        %v901 = vunpack.c.h.b16 %v459
        %v902 = vunpack.c.l.b16 %v460
        %v903 = vunpack.c.h.b16 %v460
        %v904 = vunpack.c.l.b16 %v461
        %v905 = vunpack.c.h.b16 %v461
        %v906 = vunpack.c.l.b16 %v462
        %v907 = vunpack.c.h.b16 %v462
        %v908 = vunpack.c.l.b16 %v463
        %v909 = vunpack.c.h.b16 %v463
        %v910 = vunpack.c.l.b16 %v464
        %v911 = vunpack.c.h.b16 %v464
        %v912 = vunpack.c.l.b16 %v465
        %v913 = vunpack.c.h.b16 %v465
        %v914 = vunpack.c.l.b16 %v466
        %v915 = vunpack.c.h.b16 %v466
        %v916 = vunpack.c.l.b16 %v467
        %v917 = vunpack.c.h.b16 %v467
        %v918 = vunpack.c.l.b16 %v468
        %v919 = vunpack.c.h.b16 %v468
        %v920 = vunpack.c.l.b16 %v469
        %v921 = vunpack.c.h.b16 %v469
        %v922 = vunpack.c.l.b16 %v470
        %v923 = vunpack.c.h.b16 %v470
        %v924 = vunpack.c.l.b16 %v471
        %v925 = vunpack.c.h.b16 %v471
        %v926 = vunpack.c.l.b16 %v472
        %v927 = vunpack.c.h.b16 %v472
        %v928 = vunpack.c.l.b16 %v473
        %v929 = vunpack.c.h.b16 %v473
        %v930 = vunpack.c.l.b16 %v474
        %v931 = vunpack.c.h.b16 %v474
        %v932 = vunpack.c.l.b16 %v475
        %v933 = vunpack.c.h.b16 %v475
        %v934 = vunpack.c.l.b16 %v476
        %v935 = vunpack.c.h.b16 %v476
        %v936 = vunpack.c.l.b16 %v477
        %v937 = vunpack.c.h.b16 %v477
        %v938 = vunpack.c.l.b16 %v478
        %v939 = vunpack.c.h.b16 %v478
        %v940 = vunpack.c.l.b16 %v479
        %v941 = vunpack.c.h.b16 %v479
        %v942 = vunpack.c.l.b16 %v480
        %v943 = vunpack.c.h.b16 %v480
        %v944 = vunpack.c.l.b16 %v481
        %v945 = vunpack.c.h.b16 %v481
        %v946 = vunpack.c.l.b16 %v482
        %v947 = vunpack.c.h.b16 %v482
        %v948 = vunpack.c.l.b16 %v483
        %v949 = vunpack.c.h.b16 %v483
        %v950 = vunpack.c.l.b16 %v484
        %v951 = vunpack.c.h.b16 %v484
        %v952 = vunpack.c.l.b16 %v485
        %v953 = vunpack.c.h.b16 %v485
        %v954 = vunpack.c.l.b16 %v486
        %v955 = vunpack.c.h.b16 %v486
        %v956 = vunpack.c.l.b16 %v487
        %v957 = vunpack.c.h.b16 %v487
        %v958 = vunpack.c.l.b16 %v488
        %v959 = vunpack.c.h.b16 %v488
        %v960 = vunpack.c.l.b16 %v489
        %v961 = vunpack.c.h.b16 %v489
        %v962 = vunpack.c.l.b16 %v490
        %v963 = vunpack.c.h.b16 %v490
        %v964 = vunpack.c.l.b16 %v491
        %v965 = vunpack.c.h.b16 %v491
        %v966 = vunpack.c.l.b16 %v492
        %v967 = vunpack.c.h.b16 %v492
        %v968 = vunpack.c.l.b16 %v493
        %v969 = vunpack.c.h.b16 %v493
        %v970 = vunpack.c.l.b16 %v494
        %v971 = vunpack.c.h.b16 %v494
        %v972 = vunpack.c.l.b16 %v495
        %v973 = vunpack.c.h.b16 %v495
        %v974 = vunpack.c.l.b16 %v496
        %v975 = vunpack.c.h.b16 %v496
        %v976 = vunpack.c.l.b16 %v497
        %v977 = vunpack.c.h.b16 %v497
        %v978 = vunpack.c.l.b16 %v498
        %v979 = vunpack.c.h.b16 %v498
        %v980 = vunpack.c.l.b16 %v499
        %v981 = vunpack.c.h.b16 %v499
        %v982 = vunpack.c.l.b16 %v500
        %v983 = vunpack.c.h.b16 %v500
        %v984 = vunpack.c.l.b16 %v501
        %v985 = vunpack.c.h.b16 %v501
        %v986 = vunpack.c.l.b16 %v502
        %v987 = vunpack.c.h.b16 %v502
        %v988 = vunpack.c.l.b16 %v503
        %v989 = vunpack.c.h.b16 %v503
        %v990 = vunpack.c.l.b16 %v504
        %v991 = vunpack.c.h.b16 %v504
        %v992 = vunpack.c.l.b16 %v505
        %v993 = vunpack.c.h.b16 %v505
        %v994 = vunpack.c.l.b16 %v506
        %v995 = vunpack.c.h.b16 %v506
        %v996 = vunpack.c.l.b16 %v507
        %v997 = vunpack.c.h.b16 %v507
        %v998 = vunpack.c.l.b16 %v508
        %v999 = vunpack.c.h.b16 %v508
        %v1000 = vunpack.c.l.b16 %v509
        %v1001 = vunpack.c.h.b16 %v509
        %v1002 = vunpack.c.l.b16 %v510
        %v1003 = vunpack.c.h.b16 %v510
        %v1004 = vunpack.c.l.b16 %v511
        %v1005 = vunpack.c.h.b16 %v511
        %v1006 = vunpack.c.l.b16 %v512
        %v1007 = vunpack.c.h.b16 %v512
        %v1008 = vunpack.c.l.b16 %v513
        %v1009 = vunpack.c.h.b16 %v513
        %v1010 = vunpack.c.l.b16 %v514
        %v1011 = vunpack.c.h.b16 %v514
        %v1012 = vunpack.c.l.b16 %v515
        %v1013 = vunpack.c.h.b16 %v515
        %v1014 = vunpack.c.l.b16 %v516
        %v1015 = vunpack.c.h.b16 %v516
        %v1016 = vunpack.c.l.b16 %v517
        %v1017 = vunpack.c.h.b16 %v517
        %v1018 = vunpack.c.l.b16 %v518
        %v1019 = vunpack.c.h.b16 %v518
        %v1020 = vunpack.c.l.b16 %v519
        %v1021 = vunpack.c.h.b16 %v519
        %v1022 = vunpack.c.l.b16 %v520
        %v1023 = vunpack.c.h.b16 %v520
        %v1024 = vunpack.c.l.b16 %v521
        %v1025 = vunpack.c.h.b16 %v521
        %v1026 = vunpack.c.l.b16 %v522
        %v1027 = vunpack.c.h.b16 %v522
        %v1028 = vunpack.c.l.b16 %v523
        %v1029 = vunpack.c.h.b16 %v523
        %v1030 = vunpack.c.l.b16 %v524
        %v1031 = vunpack.c.h.b16 %v524
        %v1032 = vunpack.c.l.b16 %v525
        %v1033 = vunpack.c.h.b16 %v525
        %v1034 = vunpack.c.l.b16 %v526
        %v1035 = vunpack.c.h.b16 %v526
        %v1036 = vunpack.c.l.b16 %v527
        %v1037 = vunpack.c.h.b16 %v527
        %v1038 = vunpack.c.l.b16 %v528
        %v1039 = vunpack.c.h.b16 %v528
        %v1040 = vunpack.c.l.b16 %v529
        %v1041 = vunpack.c.h.b16 %v529
        %v1042 = vunpack.c.l.b16 %v530
        %v1043 = vunpack.c.h.b16 %v530
        %v1044 = vunpack.c.l.b16 %v531
        %v1045 = vunpack.c.h.b16 %v531
        %v1046 = vunpack.c.l.b16 %v532
        %v1047 = vunpack.c.h.b16 %v532
        %v1048 = vunpack.c.l.b16 %v533
        %v1049 = vunpack.c.h.b16 %v533
        %v1050 = vunpack.c.l.b16 %v534
        %v1051 = vunpack.c.h.b16 %v534
        %v1052 = vunpack.c.l.b16 %v535
        %v1053 = vunpack.c.h.b16 %v535
        %v1054 = vunpack.c.l.b16 %v536
        %v1055 = vunpack.c.h.b16 %v536
        %v1056 = vunpack.c.l.b16 %v537
        %v1057 = vunpack.c.h.b16 %v537
        %v1058 = vunpack.c.l.b16 %v538
        %v1059 = vunpack.c.h.b16 %v538
        %v1060 = vunpack.c.l.b16 %v539
        %v1061 = vunpack.c.h.b16 %v539
        %v1062 = vunpack.c.l.b16 %v540
        %v1063 = vunpack.c.h.b16 %v540
        %v1064 = vunpack.c.l.b16 %v541
        %v1065 = vunpack.c.h.b16 %v541
        %v1066 = vunpack.c.l.b16 %v542
        %v1067 = vunpack.c.h.b16 %v542
        %v1068 = vunpack.c.l.b16 %v543
        %v1069 = vunpack.c.h.b16 %v543
        %v1070 = vunpack.c.l.b16 %v544
        %v1071 = vunpack.c.h.b16 %v544
        %v1072 = vunpack.c.l.b16 %v545
        %v1073 = vunpack.c.h.b16 %v545
        %v1074 = vunpack.c.l.b16 %v546
        %v1075 = vunpack.c.h.b16 %v546
        %v1076 = vunpack.c.l.b16 %v547
        %v1077 = vunpack.c.h.b16 %v547
        %v1078 = vunpack.c.l.b16 %v548
        %v1079 = vunpack.c.h.b16 %v548
        %v1080 = vunpack.c.l.b16 %v549
        %v1081 = vunpack.c.h.b16 %v549
        %v1082 = vunpack.c.l.b16 %v550
        %v1083 = vunpack.c.h.b16 %v550
        %v1084 = vunpack.c.l.b16 %v551
        %v1085 = vunpack.c.h.b16 %v551
        %v1086 = vunpack.c.l.b16 %v552
        %v1087 = vunpack.c.h.b16 %v552
        %v1088 = vunpack.c.l.b16 %v553
        %v1089 = vunpack.c.h.b16 %v553
        %v1090 = vunpack.c.l.b16 %v554
        %v1091 = vunpack.c.h.b16 %v554
        %v1092 = vunpack.c.l.b16 %v555
        %v1093 = vunpack.c.h.b16 %v555
        %v1094 = vunpack.c.l.b16 %v556
        %v1095 = vunpack.c.h.b16 %v556
        %v1096 = vunpack.c.l.b16 %v557
        %v1097 = vunpack.c.h.b16 %v557
        %v1098 = vunpack.c.l.b16 %v558
        %v1099 = vunpack.c.h.b16 %v558
        %v1100 = vunpack.c.l.b16 %v559
        %v1101 = vunpack.c.h.b16 %v559
        %v1102 = vunpack.c.l.b16 %v560
        %v1103 = vunpack.c.h.b16 %v560
        %v1104 = vunpack.c.l.b16 %v561
        %v1105 = vunpack.c.h.b16 %v561
        %v1106 = vunpack.c.l.b16 %v562
        %v1107 = vunpack.c.h.b16 %v562
        %v1108 = vunpack.c.l.b16 %v563
        %v1109 = vunpack.c.h.b16 %v563
        %v1110 = vunpack.c.l.b16 %v564
        %v1111 = vunpack.c.h.b16 %v564
        %v1112 = vunpack.c.l.b16 %v565
        %v1113 = vunpack.c.h.b16 %v565
        %v1114 = vunpack.c.l.b16 %v566
        %v1115 = vunpack.c.h.b16 %v566
        %v1116 = vunpack.c.l.b16 %v567
        %v1117 = vunpack.c.h.b16 %v567
        %v1118 = vunpack.c.l.b16 %v568
        %v1119 = vunpack.c.h.b16 %v568
        %v1120 = vunpack.c.l.b16 %v569
        %v1121 = vunpack.c.h.b16 %v569
        %v1122 = vunpack.c.l.b16 %v570
        %v1123 = vunpack.c.h.b16 %v570
        %v1124 = vunpack.c.l.b16 %v571
        %v1125 = vunpack.c.h.b16 %v571
        %v1126 = vunpack.c.l.b16 %v572
        %v1127 = vunpack.c.h.b16 %v572
        %v1128 = vunpack.c.l.b16 %v573
        %v1129 = vunpack.c.h.b16 %v573
        %v1130 = vunpack.c.l.b16 %v574
        %v1131 = vunpack.c.h.b16 %v574
        %v1132 = vunpack.c.l.b16 %v575
        %v1133 = vunpack.c.h.b16 %v575
        %v1134 = vunpack.c.l.b16 %v576
        %v1135 = vunpack.c.h.b16 %v576
        %v1136 = vunpack.c.l.b16 %v577
        %v1137 = vunpack.c.h.b16 %v577
        %v1138 = vunpack.c.l.b16 %v578
        %v1139 = vunpack.c.h.b16 %v578
        %v1140 = vunpack.c.l.b16 %v579
        %v1141 = vunpack.c.h.b16 %v579
        %v1142 = vunpack.c.l.b16 %v580
        %v1143 = vunpack.c.h.b16 %v580
        %v1144 = vunpack.c.l.b16 %v581
        %v1145 = vunpack.c.h.b16 %v581
        %v1146 = vunpack.c.l.b16 %v582
        %v1147 = vunpack.c.h.b16 %v582
        %v1148 = vunpack.c.l.b16 %v583
        %v1149 = vunpack.c.h.b16 %v583
        %v1150 = vunpack.c.l.b16 %v584
        %v1151 = vunpack.c.h.b16 %v584
        %v1152 = vunpack.c.l.b16 %v585
        %v1153 = vunpack.c.h.b16 %v585
        %v1154 = vunpack.c.l.b16 %v586
        %v1155 = vunpack.c.h.b16 %v586
        %v1156 = vunpack.c.l.b16 %v587
        %v1157 = vunpack.c.h.b16 %v587
        %v1158 = vunpack.c.l.b16 %v588
        %v1159 = vunpack.c.h.b16 %v588
        %v1160 = vunpack.c.l.b16 %v589
        %v1161 = vunpack.c.h.b16 %v589
        %v1162 = vunpack.c.l.b16 %v590
        %v1163 = vunpack.c.h.b16 %v590
        %v1164 = vunpack.c.l.b16 %v591
        %v1165 = vunpack.c.h.b16 %v591
        %v1166 = vunpack.c.l.b16 %v592
        %v1167 = vunpack.c.h.b16 %v592
        %v1168 = vunpack.c.l.b16 %v593
        %v1169 = vunpack.c.h.b16 %v593
        %v1170 = vunpack.c.l.b16 %v594
        %v1171 = vunpack.c.h.b16 %v594
        %v1172 = vunpack.c.l.b16 %v595
        %v1173 = vunpack.c.h.b16 %v595
        %v1174 = vunpack.c.l.b16 %v596
        %v1175 = vunpack.c.h.b16 %v596
        %v1176 = vunpack.c.l.b16 %v597
        %v1177 = vunpack.c.h.b16 %v597
        %v1178 = vunpack.c.l.b16 %v598
        %v1179 = vunpack.c.h.b16 %v598
        %v1180 = vunpack.c.l.b16 %v599
        %v1181 = vunpack.c.h.b16 %v599
        %v1182 = vunpack.c.l.b16 %v600
        %v1183 = vunpack.c.h.b16 %v600
        %v1184 = vunpack.c.l.b16 %v601
        %v1185 = vunpack.c.h.b16 %v601
        %v1186 = vunpack.c.l.b16 %v602
        %v1187 = vunpack.c.h.b16 %v602
        %v1188 = vunpack.c.l.b16 %v603
        %v1189 = vunpack.c.h.b16 %v603
        %v1190 = vunpack.c.l.b16 %v604
        %v1191 = vunpack.c.h.b16 %v604
        %v1192 = vunpack.c.l.b16 %v605
        %v1193 = vunpack.c.h.b16 %v605
        %v1194 = vunpack.c.l.b16 %v606
        %v1195 = vunpack.c.h.b16 %v606
        %v1196 = vunpack.c.l.b16 %v607
        %v1197 = vunpack.c.h.b16 %v607
        %v1198 = vunpack.c.l.b16 %v608
        %v1199 = vunpack.c.h.b16 %v608
        %v1200 = vunpack.c.l.b16 %v609
        %v1201 = vunpack.c.h.b16 %v609
        %v1202 = vunpack.c.l.b16 %v610
        %v1203 = vunpack.c.h.b16 %v610
        %v1204 = vunpack.c.l.b16 %v611
        %v1205 = vunpack.c.h.b16 %v611
        %v1206 = vunpack.c.l.b16 %v612
        %v1207 = vunpack.c.h.b16 %v612
        %v1208 = vunpack.c.l.b16 %v613
        %v1209 = vunpack.c.h.b16 %v613
        %v1210 = vunpack.c.l.b16 %v614
        %v1211 = vunpack.c.h.b16 %v614
        %v1212 = vunpack.c.l.b16 %v615
        %v1213 = vunpack.c.h.b16 %v615
        %v1214 = vunpack.c.l.b16 %v616
        %v1215 = vunpack.c.h.b16 %v616
        %v1216 = vunpack.c.l.b16 %v617
        %v1217 = vunpack.c.h.b16 %v617
        %v1218 = vunpack.c.l.b16 %v618
        %v1219 = vunpack.c.h.b16 %v618
        %v1220 = vunpack.c.l.b16 %v619
        %v1221 = vunpack.c.h.b16 %v619
        %v1222 = vunpack.c.l.b16 %v620
        %v1223 = vunpack.c.h.b16 %v620
        %v1224 = vunpack.c.l.b16 %v621
        %v1225 = vunpack.c.h.b16 %v621
        %v1226 = vunpack.c.l.b16 %v622
        %v1227 = vunpack.c.h.b16 %v622
        %v1228 = vunpack.c.l.b16 %v623
        %v1229 = vunpack.c.h.b16 %v623
        %v1230 = vunpack.c.l.b16 %v624
        %v1231 = vunpack.c.h.b16 %v624
        %v1232 = vunpack.c.l.b16 %v625
        %v1233 = vunpack.c.h.b16 %v625
        %v1234 = vunpack.c.l.b16 %v626
        %v1235 = vunpack.c.h.b16 %v626
        %v1236 = vunpack.c.l.b16 %v627
        %v1237 = vunpack.c.h.b16 %v627
        %v1238 = vunpack.c.l.b16 %v628
        %v1239 = vunpack.c.h.b16 %v628
        %v1240 = vunpack.c.l.b16 %v629
        %v1241 = vunpack.c.h.b16 %v629
        %v1242 = vunpack.c.l.b16 %v630
        %v1243 = vunpack.c.h.b16 %v630
        %v1244 = vunpack.c.l.b16 %v631
        %v1245 = vunpack.c.h.b16 %v631
        %v1246 = vunpack.c.l.b16 %v632
        %v1247 = vunpack.c.h.b16 %v632
        %v1248 = vunpack.c.l.b16 %v633
        %v1249 = vunpack.c.h.b16 %v633
        %v1250 = vunpack.c.l.b16 %v634
        %v1251 = vunpack.c.h.b16 %v634
        %v1252 = vunpack.c.l.b16 %v635
        %v1253 = vunpack.c.h.b16 %v635
        %v1254 = vunpack.c.l.b16 %v636
        %v1255 = vunpack.c.h.b16 %v636
        %v1256 = vunpack.c.l.b16 %v637
        %v1257 = vunpack.c.h.b16 %v637
        %v1258 = vunpack.c.l.b16 %v638
        %v1259 = vunpack.c.h.b16 %v638
        %v1260 = vunpack.c.l.b16 %v639
        %v1261 = vunpack.c.h.b16 %v639
        %v1262 = vpack.c.b16 %v874, %v870
        %v1263 = vpack.c.b16 %v875, %v871
        %v1264 = vpack.c.b16 %v876, %v872
        %v1265 = vpack.c.b16 %v877, %v873
        %v1266 = vpack.c.b16 %v882, %v878
        %v1267 = vpack.c.b16 %v883, %v879
        %v1268 = vpack.c.b16 %v884, %v880
        %v1269 = vpack.c.b16 %v885, %v881
        %v1270 = vpack.c.b16 %v890, %v886
        %v1271 = vpack.c.b16 %v891, %v887
        %v1272 = vpack.c.b16 %v892, %v888
        %v1273 = vpack.c.b16 %v893, %v889
        %v1274 = vpack.c.b16 %v898, %v894
        %v1275 = vpack.c.b16 %v899, %v895
        %v1276 = vpack.c.b16 %v900, %v896
        %v1277 = vpack.c.b16 %v901, %v897
        %v1278 = vpack.c.b16 %v906, %v902
        %v1279 = vpack.c.b16 %v907, %v903
        %v1280 = vpack.c.b16 %v908, %v904
        %v1281 = vpack.c.b16 %v909, %v905
        %v1282 = vpack.c.b16 %v914, %v910
        %v1283 = vpack.c.b16 %v915, %v911
        %v1284 = vpack.c.b16 %v916, %v912
        %v1285 = vpack.c.b16 %v917, %v913
        %v1286 = vpack.c.b16 %v922, %v918
        %v1287 = vpack.c.b16 %v923, %v919
        %v1288 = vpack.c.b16 %v924, %v920
        %v1289 = vpack.c.b16 %v925, %v921
        %v1290 = vpack.c.b16 %v930, %v926
        %v1291 = vpack.c.b16 %v931, %v927
        %v1292 = vpack.c.b16 %v932, %v928
        %v1293 = vpack.c.b16 %v933, %v929
        %v1294 = vpack.c.b16 %v938, %v934
        %v1295 = vpack.c.b16 %v939, %v935
        %v1296 = vpack.c.b16 %v940, %v936
        %v1297 = vpack.c.b16 %v941, %v937
        %v1298 = vpack.c.b16 %v946, %v942
        %v1299 = vpack.c.b16 %v947, %v943
        %v1300 = vpack.c.b16 %v948, %v944
        %v1301 = vpack.c.b16 %v949, %v945
        %v1302 = vpack.c.b16 %v954, %v950
        %v1303 = vpack.c.b16 %v955, %v951
        %v1304 = vpack.c.b16 %v956, %v952
        %v1305 = vpack.c.b16 %v957, %v953
        %v1306 = vpack.c.b16 %v962, %v958
        %v1307 = vpack.c.b16 %v963, %v959
        %v1308 = vpack.c.b16 %v964, %v960
        %v1309 = vpack.c.b16 %v965, %v961
        %v1310 = vpack.c.b16 %v970, %v966
        %v1311 = vpack.c.b16 %v971, %v967
        %v1312 = vpack.c.b16 %v972, %v968
        %v1313 = vpack.c.b16 %v973, %v969
        %v1314 = vpack.c.b16 %v978, %v974
        %v1315 = vpack.c.b16 %v979, %v975
        %v1316 = vpack.c.b16 %v980, %v976
        %v1317 = vpack.c.b16 %v981, %v977
        %v1318 = vpack.c.b16 %v986, %v982
        %v1319 = vpack.c.b16 %v987, %v983
        %v1320 = vpack.c.b16 %v988, %v984
        %v1321 = vpack.c.b16 %v989, %v985
        %v1322 = vpack.c.b16 %v994, %v990
        %v1323 = vpack.c.b16 %v995, %v991
        %v1324 = vpack.c.b16 %v996, %v992
        %v1325 = vpack.c.b16 %v997, %v993
        %v1326 = vpack.c.b16 %v1002, %v998
        %v1327 = vpack.c.b16 %v1003, %v999
        %v1328 = vpack.c.b16 %v1004, %v1000
        %v1329 = vpack.c.b16 %v1005, %v1001
        %v1330 = vpack.c.b16 %v1010, %v1006
        %v1331 = vpack.c.b16 %v1011, %v1007
        %v1332 = vpack.c.b16 %v1012, %v1008
        %v1333 = vpack.c.b16 %v1013, %v1009
        %v1334 = vpack.c.b16 %v1018, %v1014
        %v1335 = vpack.c.b16 %v1019, %v1015
        %v1336 = vpack.c.b16 %v1020, %v1016
        %v1337 = vpack.c.b16 %v1021, %v1017
        %v1338 = vpack.c.b16 %v1026, %v1022
        %v1339 = vpack.c.b16 %v1027, %v1023
        %v1340 = vpack.c.b16 %v1028, %v1024
        %v1341 = vpack.c.b16 %v1029, %v1025
        %v1342 = vpack.c.b16 %v1034, %v1030
        %v1343 = vpack.c.b16 %v1035, %v1031
        %v1344 = vpack.c.b16 %v1036, %v1032
        %v1345 = vpack.c.b16 %v1037, %v1033
        %v1346 = vpack.c.b16 %v1042, %v1038
        %v1347 = vpack.c.b16 %v1043, %v1039
        %v1348 = vpack.c.b16 %v1044, %v1040
        %v1349 = vpack.c.b16 %v1045, %v1041
        %v1350 = vpack.c.b16 %v1050, %v1046
        %v1351 = vpack.c.b16 %v1051, %v1047
        %v1352 = vpack.c.b16 %v1052, %v1048
        %v1353 = vpack.c.b16 %v1053, %v1049
        %v1354 = vpack.c.b16 %v1058, %v1054
        %v1355 = vpack.c.b16 %v1059, %v1055
        %v1356 = vpack.c.b16 %v1060, %v1056
        %v1357 = vpack.c.b16 %v1061, %v1057
        %v1358 = vpack.c.b16 %v1066, %v1062
        %v1359 = vpack.c.b16 %v1067, %v1063
        %v1360 = vpack.c.b16 %v1068, %v1064
        %v1361 = vpack.c.b16 %v1069, %v1065
        %v1362 = vpack.c.b16 %v1074, %v1070
        %v1363 = vpack.c.b16 %v1075, %v1071
        %v1364 = vpack.c.b16 %v1076, %v1072
        %v1365 = vpack.c.b16 %v1077, %v1073
        %v1366 = vpack.c.b16 %v1082, %v1078
        %v1367 = vpack.c.b16 %v1083, %v1079
        %v1368 = vpack.c.b16 %v1084, %v1080
        %v1369 = vpack.c.b16 %v1085, %v1081
        %v1370 = vpack.c.b16 %v1090, %v1086
        %v1371 = vpack.c.b16 %v1091, %v1087
        %v1372 = vpack.c.b16 %v1092, %v1088
        %v1373 = vpack.c.b16 %v1093, %v1089
        %v1374 = vpack.c.b16 %v1098, %v1094
        %v1375 = vpack.c.b16 %v1099, %v1095
        %v1376 = vpack.c.b16 %v1100, %v1096
        %v1377 = vpack.c.b16 %v1101, %v1097
        %v1378 = vpack.c.b16 %v1106, %v1102
        %v1379 = vpack.c.b16 %v1107, %v1103
        %v1380 = vpack.c.b16 %v1108, %v1104
        %v1381 = vpack.c.b16 %v1109, %v1105
        %v1382 = vpack.c.b16 %v1114, %v1110
        %v1383 = vpack.c.b16 %v1115, %v1111
        %v1384 = vpack.c.b16 %v1116, %v1112
        %v1385 = vpack.c.b16 %v1117, %v1113
        %v1386 = vpack.c.b16 %v1122, %v1118
        %v1387 = vpack.c.b16 %v1123, %v1119
        %v1388 = vpack.c.b16 %v1124, %v1120
        %v1389 = vpack.c.b16 %v1125, %v1121
        %v1390 = vpack.c.b16 %v1130, %v1126
        %v1391 = vpack.c.b16 %v1131, %v1127
        %v1392 = vpack.c.b16 %v1132, %v1128
        %v1393 = vpack.c.b16 %v1133, %v1129
        %v1394 = vpack.c.b16 %v1138, %v1134
        %v1395 = vpack.c.b16 %v1139, %v1135
        %v1396 = vpack.c.b16 %v1140, %v1136
        %v1397 = vpack.c.b16 %v1141, %v1137
        %v1398 = vpack.c.b16 %v1146, %v1142
        %v1399 = vpack.c.b16 %v1147, %v1143
        %v1400 = vpack.c.b16 %v1148, %v1144
        %v1401 = vpack.c.b16 %v1149, %v1145
        %v1402 = vpack.c.b16 %v1154, %v1150
        %v1403 = vpack.c.b16 %v1155, %v1151
        %v1404 = vpack.c.b16 %v1156, %v1152
        %v1405 = vpack.c.b16 %v1157, %v1153
        %v1406 = vpack.c.b16 %v1162, %v1158
        %v1407 = vpack.c.b16 %v1163, %v1159
        %v1408 = vpack.c.b16 %v1164, %v1160
        %v1409 = vpack.c.b16 %v1165, %v1161
        %v1410 = vpack.c.b16 %v1170, %v1166
        %v1411 = vpack.c.b16 %v1171, %v1167
        %v1412 = vpack.c.b16 %v1172, %v1168
        %v1413 = vpack.c.b16 %v1173, %v1169
        %v1414 = vpack.c.b16 %v1178, %v1174
        %v1415 = vpack.c.b16 %v1179, %v1175
        %v1416 = vpack.c.b16 %v1180, %v1176
        %v1417 = vpack.c.b16 %v1181, %v1177
        %v1418 = vpack.c.b16 %v1186, %v1182
        %v1419 = vpack.c.b16 %v1187, %v1183
        %v1420 = vpack.c.b16 %v1188, %v1184
        %v1421 = vpack.c.b16 %v1189, %v1185
        %v1422 = vpack.c.b16 %v1194, %v1190
        %v1423 = vpack.c.b16 %v1195, %v1191
        %v1424 = vpack.c.b16 %v1196, %v1192
        %v1425 = vpack.c.b16 %v1197, %v1193
        %v1426 = vpack.c.b16 %v1202, %v1198
        %v1427 = vpack.c.b16 %v1203, %v1199
        %v1428 = vpack.c.b16 %v1204, %v1200
        %v1429 = vpack.c.b16 %v1205, %v1201
        %v1430 = vpack.c.b16 %v1210, %v1206
        %v1431 = vpack.c.b16 %v1211, %v1207
        %v1432 = vpack.c.b16 %v1212, %v1208
        %v1433 = vpack.c.b16 %v1213, %v1209
        %v1434 = vpack.c.b16 %v1218, %v1214
        %v1435 = vpack.c.b16 %v1219, %v1215
        %v1436 = vpack.c.b16 %v1220, %v1216
        %v1437 = vpack.c.b16 %v1221, %v1217
        %v1438 = vpack.c.b16 %v1226, %v1222
        %v1439 = vpack.c.b16 %v1227, %v1223
        %v1440 = vpack.c.b16 %v1228, %v1224
        %v1441 = vpack.c.b16 %v1229, %v1225
        %v1442 = vpack.c.b16 %v1234, %v1230
        %v1443 = vpack.c.b16 %v1235, %v1231
        %v1444 = vpack.c.b16 %v1236, %v1232
        %v1445 = vpack.c.b16 %v1237, %v1233
        %v1446 = vpack.c.b16 %v1242, %v1238
        %v1447 = vpack.c.b16 %v1243, %v1239
        %v1448 = vpack.c.b16 %v1244, %v1240
        %v1449 = vpack.c.b16 %v1245, %v1241
        %v1450 = vpack.c.b16 %v1250, %v1246
        %v1451 = vpack.c.b16 %v1251, %v1247
        %v1452 = vpack.c.b16 %v1252, %v1248
        %v1453 = vpack.c.b16 %v1253, %v1249
        %v1454 = vpack.c.b16 %v1258, %v1254
        %v1455 = vpack.c.b16 %v1259, %v1255
        %v1456 = vpack.c.b16 %v1260, %v1256
        %v1457 = vpack.c.b16 %v1261, %v1257
        %vm1654 = vcmask 130048
        %v1656 = vsel %vm1654, %v667, 0
        %1658 = vmatpush.bf16.msra.mxu0 %v1290
        %1659 = vmatpush.bf16.msra.mxu0 %v1286
        %1660 = vmatpush.bf16.msra.mxu0 %v1282
        %1661 = vmatpush.bf16.msra.mxu0 %v1278
        %1662 = vmatpush.bf16.msra.mxu0 %v1274
        %1663 = vmatpush.bf16.msra.mxu0 %v1270
        %1664 = vmatpush.bf16.msra.mxu0 %v1266
        %1665 = vmatpush.bf16.msra.mxu0 %v1262
        %1666 = vmatmul.bf16.gmra.mxu0 %v661
        %v1667 = vpop.f32.mrf.mxu0
        %v1668 = vadd.f32 %v642, %v1667
        %v1669 = vpop.f32.mrf.mxu0
        %1670 = vdwg.mxu0
        %1671 = vmatpush.bf16.msra.mxu0 %v1322
        %1672 = vmatpush.bf16.msra.mxu0 %v1318
        %1673 = vmatpush.bf16.msra.mxu0 %v1314
        %1674 = vmatpush.bf16.msra.mxu0 %v1310
        %1675 = vmatpush.bf16.msra.mxu0 %v1306
        %1676 = vmatpush.bf16.msra.mxu0 %v1302
        %1677 = vmatpush.bf16.msra.mxu0 %v1298
        %1678 = vmatpush.bf16.msra.mxu0 %v1294
        %1679 = vmatmul.bf16.gmra.mxu0 %v662
        %v1680 = vpop.f32.mrf.mxu0
        %v1681 = vadd.f32 %v1668, %v1680
        %v1682 = vpop.f32.mrf.mxu0
        %1683 = vdwg.mxu0
        %1684 = vmatpush.bf16.msra.mxu0 %v1354
        %1685 = vmatpush.bf16.msra.mxu0 %v1350
        %1686 = vmatpush.bf16.msra.mxu0 %v1346
        %1687 = vmatpush.bf16.msra.mxu0 %v1342
        %1688 = vmatpush.bf16.msra.mxu0 %v1338
        %1689 = vmatpush.bf16.msra.mxu0 %v1334
        %1690 = vmatpush.bf16.msra.mxu0 %v1330
        %1691 = vmatpush.bf16.msra.mxu0 %v1326
        %1692 = vmatmul.bf16.gmra.mxu0 %v663
        %v1693 = vpop.f32.mrf.mxu0
        %v1694 = vadd.f32 %v1681, %v1693
        %v1695 = vpop.f32.mrf.mxu0
        %1696 = vdwg.mxu0
        %1697 = vmatpush.bf16.msra.mxu0 %v1386
        %1698 = vmatpush.bf16.msra.mxu0 %v1382
        %1699 = vmatpush.bf16.msra.mxu0 %v1378
        %1700 = vmatpush.bf16.msra.mxu0 %v1374
        %1701 = vmatpush.bf16.msra.mxu0 %v1370
        %1702 = vmatpush.bf16.msra.mxu0 %v1366
        %1703 = vmatpush.bf16.msra.mxu0 %v1362
        %1704 = vmatpush.bf16.msra.mxu0 %v1358
        %1705 = vmatmul.bf16.gmra.mxu0 %v664
        %v1706 = vpop.f32.mrf.mxu0
        %v1707 = vadd.f32 %v1694, %v1706
        %v1708 = vpop.f32.mrf.mxu0
        %1709 = vdwg.mxu0
        %1710 = vmatpush.bf16.msra.mxu0 %v1418
        %1711 = vmatpush.bf16.msra.mxu0 %v1414
        %1712 = vmatpush.bf16.msra.mxu0 %v1410
        %1713 = vmatpush.bf16.msra.mxu0 %v1406
        %1714 = vmatpush.bf16.msra.mxu0 %v1402
        %1715 = vmatpush.bf16.msra.mxu0 %v1398
        %1716 = vmatpush.bf16.msra.mxu0 %v1394
        %1717 = vmatpush.bf16.msra.mxu0 %v1390
        %1718 = vmatmul.bf16.gmra.mxu0 %v665
        %v1719 = vpop.f32.mrf.mxu0
        %v1720 = vadd.f32 %v1707, %v1719
        %v1721 = vpop.f32.mrf.mxu0
        %1722 = vdwg.mxu0
        %1723 = vmatpush.bf16.msra.mxu0 %v1450
        %1724 = vmatpush.bf16.msra.mxu0 %v1446
        %1725 = vmatpush.bf16.msra.mxu0 %v1442
        %1726 = vmatpush.bf16.msra.mxu0 %v1438
        %1727 = vmatpush.bf16.msra.mxu0 %v1434
        %1728 = vmatpush.bf16.msra.mxu0 %v1430
        %1729 = vmatpush.bf16.msra.mxu0 %v1426
        %1730 = vmatpush.bf16.msra.mxu0 %v1422
        %1731 = vmatmul.bf16.gmra.mxu0 %v666
        %v1732 = vpop.f32.mrf.mxu0
        %v1733 = vadd.f32 %v1720, %v1732
        %v1734 = vpop.f32.mrf.mxu0
        %1735 = vdwg.mxu0
        %1736 = vmatpush.bf16.msra.mxu0 0
        %1737 = vmatpush.bf16.msra.mxu0 0
        %1738 = vmatpush.bf16.msra.mxu0 0
        %1739 = vmatpush.bf16.msra.mxu0 0
        %1740 = vmatpush.bf16.msra.mxu0 0
        %1741 = vmatpush.bf16.msra.mxu0 0
        %1742 = vmatpush.bf16.msra.mxu0 0
        %1743 = vmatpush.bf16.msra.mxu0 %v1454
        %1744 = vmatmul.bf16.gmra.mxu0 %v1656
        %v1745 = vpop.f32.mrf.mxu0
        %v1746 = vadd.f32 %v1733, %v1745
        %v1747 = vpop.f32.mrf.mxu0
        %1748 = vdwg.mxu0
        %1749 = vmatpush.bf16.msra.mxu0 %v1291
        %1750 = vmatpush.bf16.msra.mxu0 %v1287
        %1751 = vmatpush.bf16.msra.mxu0 %v1283
        %1752 = vmatpush.bf16.msra.mxu0 %v1279
        %1753 = vmatpush.bf16.msra.mxu0 %v1275
        %1754 = vmatpush.bf16.msra.mxu0 %v1271
        %1755 = vmatpush.bf16.msra.mxu0 %v1267
        %1756 = vmatpush.bf16.msra.mxu0 %v1263
        %1757 = vmatmul.bf16.gmra.mxu0 %v661
        %v1758 = vpop.f32.mrf.mxu0
        %v1759 = vadd.f32 %v643, %v1758
        %v1760 = vpop.f32.mrf.mxu0
        %1761 = vdwg.mxu0
        %1762 = vmatpush.bf16.msra.mxu0 %v1323
        %1763 = vmatpush.bf16.msra.mxu0 %v1319
        %1764 = vmatpush.bf16.msra.mxu0 %v1315
        %1765 = vmatpush.bf16.msra.mxu0 %v1311
        %1766 = vmatpush.bf16.msra.mxu0 %v1307
        %1767 = vmatpush.bf16.msra.mxu0 %v1303
        %1768 = vmatpush.bf16.msra.mxu0 %v1299
        %1769 = vmatpush.bf16.msra.mxu0 %v1295
        %1770 = vmatmul.bf16.gmra.mxu0 %v662
        %v1771 = vpop.f32.mrf.mxu0
        %v1772 = vadd.f32 %v1759, %v1771
        %v1773 = vpop.f32.mrf.mxu0
        %1774 = vdwg.mxu0
        %1775 = vmatpush.bf16.msra.mxu0 %v1355
        %1776 = vmatpush.bf16.msra.mxu0 %v1351
        %1777 = vmatpush.bf16.msra.mxu0 %v1347
        %1778 = vmatpush.bf16.msra.mxu0 %v1343
        %1779 = vmatpush.bf16.msra.mxu0 %v1339
        %1780 = vmatpush.bf16.msra.mxu0 %v1335
        %1781 = vmatpush.bf16.msra.mxu0 %v1331
        %1782 = vmatpush.bf16.msra.mxu0 %v1327
        %1783 = vmatmul.bf16.gmra.mxu0 %v663
        %v1784 = vpop.f32.mrf.mxu0
        %v1785 = vadd.f32 %v1772, %v1784
        %v1786 = vpop.f32.mrf.mxu0
        %1787 = vdwg.mxu0
        %1788 = vmatpush.bf16.msra.mxu0 %v1387
        %1789 = vmatpush.bf16.msra.mxu0 %v1383
        %1790 = vmatpush.bf16.msra.mxu0 %v1379
        %1791 = vmatpush.bf16.msra.mxu0 %v1375
        %1792 = vmatpush.bf16.msra.mxu0 %v1371
        %1793 = vmatpush.bf16.msra.mxu0 %v1367
        %1794 = vmatpush.bf16.msra.mxu0 %v1363
        %1795 = vmatpush.bf16.msra.mxu0 %v1359
        %1796 = vmatmul.bf16.gmra.mxu0 %v664
        %v1797 = vpop.f32.mrf.mxu0
        %v1798 = vadd.f32 %v1785, %v1797
        %v1799 = vpop.f32.mrf.mxu0
        %1800 = vdwg.mxu0
        %1801 = vmatpush.bf16.msra.mxu0 %v1419
        %1802 = vmatpush.bf16.msra.mxu0 %v1415
        %1803 = vmatpush.bf16.msra.mxu0 %v1411
        %1804 = vmatpush.bf16.msra.mxu0 %v1407
        %1805 = vmatpush.bf16.msra.mxu0 %v1403
        %1806 = vmatpush.bf16.msra.mxu0 %v1399
        %1807 = vmatpush.bf16.msra.mxu0 %v1395
        %1808 = vmatpush.bf16.msra.mxu0 %v1391
        %1809 = vmatmul.bf16.gmra.mxu0 %v665
        %v1810 = vpop.f32.mrf.mxu0
        %v1811 = vadd.f32 %v1798, %v1810
        %v1812 = vpop.f32.mrf.mxu0
        %1813 = vdwg.mxu0
        %1814 = vmatpush.bf16.msra.mxu0 %v1451
        %1815 = vmatpush.bf16.msra.mxu0 %v1447
        %1816 = vmatpush.bf16.msra.mxu0 %v1443
        %1817 = vmatpush.bf16.msra.mxu0 %v1439
        %1818 = vmatpush.bf16.msra.mxu0 %v1435
        %1819 = vmatpush.bf16.msra.mxu0 %v1431
        %1820 = vmatpush.bf16.msra.mxu0 %v1427
        %1821 = vmatpush.bf16.msra.mxu0 %v1423
        %1822 = vmatmul.bf16.gmra.mxu0 %v666
        %v1823 = vpop.f32.mrf.mxu0
        %v1824 = vadd.f32 %v1811, %v1823
        %v1825 = vpop.f32.mrf.mxu0
        %1826 = vdwg.mxu0
        %1827 = vmatpush.bf16.msra.mxu0 0
        %1828 = vmatpush.bf16.msra.mxu0 0
        %1829 = vmatpush.bf16.msra.mxu0 0
        %1830 = vmatpush.bf16.msra.mxu0 0
        %1831 = vmatpush.bf16.msra.mxu0 0
        %1832 = vmatpush.bf16.msra.mxu0 0
        %1833 = vmatpush.bf16.msra.mxu0 0
        %1834 = vmatpush.bf16.msra.mxu0 %v1455
        %1835 = vmatmul.bf16.gmra.mxu0 %v1656
        %v1836 = vpop.f32.mrf.mxu0
        %v1837 = vadd.f32 %v1824, %v1836
        %v1838 = vpop.f32.mrf.mxu0
        %1839 = vdwg.mxu0
        %1840 = vmatpush.bf16.msra.mxu0 %v1292
        %1841 = vmatpush.bf16.msra.mxu0 %v1288
        %1842 = vmatpush.bf16.msra.mxu0 %v1284
        %1843 = vmatpush.bf16.msra.mxu0 %v1280
        %1844 = vmatpush.bf16.msra.mxu0 %v1276
        %1845 = vmatpush.bf16.msra.mxu0 %v1272
        %1846 = vmatpush.bf16.msra.mxu0 %v1268
        %1847 = vmatpush.bf16.msra.mxu0 %v1264
        %1848 = vmatmul.bf16.gmra.mxu0 %v661
        %v1849 = vpop.f32.mrf.mxu0
        %v1850 = vadd.f32 %v644, %v1849
        %v1851 = vpop.f32.mrf.mxu0
        %1852 = vdwg.mxu0
        %1853 = vmatpush.bf16.msra.mxu0 %v1324
        %1854 = vmatpush.bf16.msra.mxu0 %v1320
        %1855 = vmatpush.bf16.msra.mxu0 %v1316
        %1856 = vmatpush.bf16.msra.mxu0 %v1312
        %1857 = vmatpush.bf16.msra.mxu0 %v1308
        %1858 = vmatpush.bf16.msra.mxu0 %v1304
        %1859 = vmatpush.bf16.msra.mxu0 %v1300
        %1860 = vmatpush.bf16.msra.mxu0 %v1296
        %1861 = vmatmul.bf16.gmra.mxu0 %v662
        %v1862 = vpop.f32.mrf.mxu0
        %v1863 = vadd.f32 %v1850, %v1862
        %v1864 = vpop.f32.mrf.mxu0
        %1865 = vdwg.mxu0
        %1866 = vmatpush.bf16.msra.mxu0 %v1356
        %1867 = vmatpush.bf16.msra.mxu0 %v1352
        %1868 = vmatpush.bf16.msra.mxu0 %v1348
        %1869 = vmatpush.bf16.msra.mxu0 %v1344
        %1870 = vmatpush.bf16.msra.mxu0 %v1340
        %1871 = vmatpush.bf16.msra.mxu0 %v1336
        %1872 = vmatpush.bf16.msra.mxu0 %v1332
        %1873 = vmatpush.bf16.msra.mxu0 %v1328
        %1874 = vmatmul.bf16.gmra.mxu0 %v663
        %v1875 = vpop.f32.mrf.mxu0
        %v1876 = vadd.f32 %v1863, %v1875
        %v1877 = vpop.f32.mrf.mxu0
        %1878 = vdwg.mxu0
        %1879 = vmatpush.bf16.msra.mxu0 %v1388
        %1880 = vmatpush.bf16.msra.mxu0 %v1384
        %1881 = vmatpush.bf16.msra.mxu0 %v1380
        %1882 = vmatpush.bf16.msra.mxu0 %v1376
        %1883 = vmatpush.bf16.msra.mxu0 %v1372
        %1884 = vmatpush.bf16.msra.mxu0 %v1368
        %1885 = vmatpush.bf16.msra.mxu0 %v1364
        %1886 = vmatpush.bf16.msra.mxu0 %v1360
        %1887 = vmatmul.bf16.gmra.mxu0 %v664
        %v1888 = vpop.f32.mrf.mxu0
        %v1889 = vadd.f32 %v1876, %v1888
        %v1890 = vpop.f32.mrf.mxu0
        %1891 = vdwg.mxu0
        %1892 = vmatpush.bf16.msra.mxu0 %v1420
        %1893 = vmatpush.bf16.msra.mxu0 %v1416
        %1894 = vmatpush.bf16.msra.mxu0 %v1412
        %1895 = vmatpush.bf16.msra.mxu0 %v1408
        %1896 = vmatpush.bf16.msra.mxu0 %v1404
        %1897 = vmatpush.bf16.msra.mxu0 %v1400
        %1898 = vmatpush.bf16.msra.mxu0 %v1396
        %1899 = vmatpush.bf16.msra.mxu0 %v1392
        %1900 = vmatmul.bf16.gmra.mxu0 %v665
        %v1901 = vpop.f32.mrf.mxu0
        %v1902 = vadd.f32 %v1889, %v1901
        %v1903 = vpop.f32.mrf.mxu0
        %1904 = vdwg.mxu0
        %1905 = vmatpush.bf16.msra.mxu0 %v1452
        %1906 = vmatpush.bf16.msra.mxu0 %v1448
        %1907 = vmatpush.bf16.msra.mxu0 %v1444
        %1908 = vmatpush.bf16.msra.mxu0 %v1440
        %1909 = vmatpush.bf16.msra.mxu0 %v1436
        %1910 = vmatpush.bf16.msra.mxu0 %v1432
        %1911 = vmatpush.bf16.msra.mxu0 %v1428
        %1912 = vmatpush.bf16.msra.mxu0 %v1424
        %1913 = vmatmul.bf16.gmra.mxu0 %v666
        %v1914 = vpop.f32.mrf.mxu0
        %v1915 = vadd.f32 %v1902, %v1914
        %v1916 = vpop.f32.mrf.mxu0
        %1917 = vdwg.mxu0
        %1918 = vmatpush.bf16.msra.mxu0 0
        %1919 = vmatpush.bf16.msra.mxu0 0
        %1920 = vmatpush.bf16.msra.mxu0 0
        %1921 = vmatpush.bf16.msra.mxu0 0
        %1922 = vmatpush.bf16.msra.mxu0 0
        %1923 = vmatpush.bf16.msra.mxu0 0
        %1924 = vmatpush.bf16.msra.mxu0 0
        %1925 = vmatpush.bf16.msra.mxu0 %v1456
        %1926 = vmatmul.bf16.gmra.mxu0 %v1656
        %v1927 = vpop.f32.mrf.mxu0
        %v1928 = vadd.f32 %v1915, %v1927
        %v1929 = vpop.f32.mrf.mxu0
        %1930 = vdwg.mxu0
        %1931 = vmatpush.bf16.msra.mxu0 %v1293
        %1932 = vmatpush.bf16.msra.mxu0 %v1289
        %1933 = vmatpush.bf16.msra.mxu0 %v1285
        %1934 = vmatpush.bf16.msra.mxu0 %v1281
        %1935 = vmatpush.bf16.msra.mxu0 %v1277
        %1936 = vmatpush.bf16.msra.mxu0 %v1273
        %1937 = vmatpush.bf16.msra.mxu0 %v1269
        %1938 = vmatpush.bf16.msra.mxu0 %v1265
        %1939 = vmatmul.bf16.gmra.mxu0 %v661
        %v1940 = vpop.f32.mrf.mxu0
        %v1941 = vadd.f32 %v645, %v1940
        %v1942 = vpop.f32.mrf.mxu0
        %1943 = vdwg.mxu0
        %1944 = vmatpush.bf16.msra.mxu0 %v1325
        %1945 = vmatpush.bf16.msra.mxu0 %v1321
        %1946 = vmatpush.bf16.msra.mxu0 %v1317
        %1947 = vmatpush.bf16.msra.mxu0 %v1313
        %1948 = vmatpush.bf16.msra.mxu0 %v1309
        %1949 = vmatpush.bf16.msra.mxu0 %v1305
        %1950 = vmatpush.bf16.msra.mxu0 %v1301
        %1951 = vmatpush.bf16.msra.mxu0 %v1297
        %1952 = vmatmul.bf16.gmra.mxu0 %v662
        %v1953 = vpop.f32.mrf.mxu0
        %v1954 = vadd.f32 %v1941, %v1953
        %v1955 = vpop.f32.mrf.mxu0
        %1956 = vdwg.mxu0
        %1957 = vmatpush.bf16.msra.mxu0 %v1357
        %1958 = vmatpush.bf16.msra.mxu0 %v1353
        %1959 = vmatpush.bf16.msra.mxu0 %v1349
        %1960 = vmatpush.bf16.msra.mxu0 %v1345
        %1961 = vmatpush.bf16.msra.mxu0 %v1341
        %1962 = vmatpush.bf16.msra.mxu0 %v1337
        %1963 = vmatpush.bf16.msra.mxu0 %v1333
        %1964 = vmatpush.bf16.msra.mxu0 %v1329
        %1965 = vmatmul.bf16.gmra.mxu0 %v663
        %v1966 = vpop.f32.mrf.mxu0
        %v1967 = vadd.f32 %v1954, %v1966
        %v1968 = vpop.f32.mrf.mxu0
        %1969 = vdwg.mxu0
        %1970 = vmatpush.bf16.msra.mxu0 %v1389
        %1971 = vmatpush.bf16.msra.mxu0 %v1385
        %1972 = vmatpush.bf16.msra.mxu0 %v1381
        %1973 = vmatpush.bf16.msra.mxu0 %v1377
        %1974 = vmatpush.bf16.msra.mxu0 %v1373
        %1975 = vmatpush.bf16.msra.mxu0 %v1369
        %1976 = vmatpush.bf16.msra.mxu0 %v1365
        %1977 = vmatpush.bf16.msra.mxu0 %v1361
        %1978 = vmatmul.bf16.gmra.mxu0 %v664
        %v1979 = vpop.f32.mrf.mxu0
        %v1980 = vadd.f32 %v1967, %v1979
        %v1981 = vpop.f32.mrf.mxu0
        %1982 = vdwg.mxu0
        %1983 = vmatpush.bf16.msra.mxu0 %v1421
        %1984 = vmatpush.bf16.msra.mxu0 %v1417
        %1985 = vmatpush.bf16.msra.mxu0 %v1413
        %1986 = vmatpush.bf16.msra.mxu0 %v1409
        %1987 = vmatpush.bf16.msra.mxu0 %v1405
        %1988 = vmatpush.bf16.msra.mxu0 %v1401
        %1989 = vmatpush.bf16.msra.mxu0 %v1397
        %1990 = vmatpush.bf16.msra.mxu0 %v1393
        %1991 = vmatmul.bf16.gmra.mxu0 %v665
        %v1992 = vpop.f32.mrf.mxu0
        %v1993 = vadd.f32 %v1980, %v1992
        %v1994 = vpop.f32.mrf.mxu0
        %1995 = vdwg.mxu0
        %1996 = vmatpush.bf16.msra.mxu0 %v1453
        %1997 = vmatpush.bf16.msra.mxu0 %v1449
        %1998 = vmatpush.bf16.msra.mxu0 %v1445
        %1999 = vmatpush.bf16.msra.mxu0 %v1441
        %2000 = vmatpush.bf16.msra.mxu0 %v1437
        %2001 = vmatpush.bf16.msra.mxu0 %v1433
        %2002 = vmatpush.bf16.msra.mxu0 %v1429
        %2003 = vmatpush.bf16.msra.mxu0 %v1425
        %2004 = vmatmul.bf16.gmra.mxu0 %v666
        %v2005 = vpop.f32.mrf.mxu0
        %v2006 = vadd.f32 %v1993, %v2005
        %v2007 = vpop.f32.mrf.mxu0
        %2008 = vdwg.mxu0
        %2009 = vmatpush.bf16.msra.mxu0 0
        %2010 = vmatpush.bf16.msra.mxu0 0
        %2011 = vmatpush.bf16.msra.mxu0 0
        %2012 = vmatpush.bf16.msra.mxu0 0
        %2013 = vmatpush.bf16.msra.mxu0 0
        %2014 = vmatpush.bf16.msra.mxu0 0
        %2015 = vmatpush.bf16.msra.mxu0 0
        %2016 = vmatpush.bf16.msra.mxu0 %v1457
        %2017 = vmatmul.bf16.gmra.mxu0 %v1656
        %v2018 = vpop.f32.mrf.mxu0
        %v2019 = vadd.f32 %v2006, %v2018
        %v2020 = vpop.f32.mrf.mxu0
        %2021 = vdwg.mxu0
        %v2022 = vmax.f32 %v1746, 0.0
        %v2023 = vmax.f32 %v1837, 0.0
        %v2024 = vmax.f32 %v1928, 0.0
        %v2025 = vmax.f32 %v2019, 0.0
        %v2026 = vpack.c.bf16 %v2022, %v2022
        %v2027 = vpack.c.bf16 %v2023, %v2023
        %v2028 = vpack.c.bf16 %v2024, %v2024
        %v2029 = vpack.c.bf16 %v2025, %v2025
        %v2030 = vld [vmem:[%s3] sm:$0xff]
        %v2031 = vld [vmem:[%s3 + $0x8] sm:$0xff]
        %v2032 = vld [vmem:[%s3 + $0x10] sm:$0xff]
        %v2033 = vld [vmem:[%s3 + $0x18] sm:$0xff]
        %v2034 = vld [vmem:[%s3 + $0x20] sm:$0xff]
        %v2035 = vld [vmem:[%s3 + $0x28] sm:$0xff]
        %v2036 = vld [vmem:[%s3 + $0x30] sm:$0xff]
        %v2037 = vld [vmem:[%s3 + $0x38] sm:$0xff]
        %v2038 = vld [vmem:[%s3 + $0x40] sm:$0xff]
        %v2039 = vld [vmem:[%s3 + $0x48] sm:$0xff]
        %v2040 = vld [vmem:[%s3 + $0x50] sm:$0xff]
        %v2041 = vld [vmem:[%s3 + $0x58] sm:$0xff]
        %v2042 = vld [vmem:[%s3 + $0x60] sm:$0xff]
        %v2043 = vld [vmem:[%s3 + $0x68] sm:$0xff]
        %v2044 = vld [vmem:[%s3 + $0x70] sm:$0xff]
        %v2045 = vld [vmem:[%s3 + $0x78] sm:$0xff]
        %v2046 = vld [vmem:[%s3 + $0x80] sm:$0xff]
        %v2047 = vld [vmem:[%s3 + $0x88] sm:$0xff]
        %v2048 = vld [vmem:[%s3 + $0x90] sm:$0xff]
        %v2049 = vld [vmem:[%s3 + $0x98] sm:$0xff]
        %v2050 = vld [vmem:[%s3 + $0xa0] sm:$0xff]
        %v2051 = vld [vmem:[%s3 + $0xa8] sm:$0xff]
        %v2052 = vld [vmem:[%s3 + $0xb0] sm:$0xff]
        %v2053 = vld [vmem:[%s3 + $0xb8] sm:$0xff]
        %v2054 = vld [vmem:[%s3 + $0xc0] sm:$0xff]
        %v2055 = vld [vmem:[%s3 + $0xc8] sm:$0xff]
        %v2056 = vld [vmem:[%s3 + $0xd0] sm:$0xff]
        %v2057 = vld [vmem:[%s3 + $0xd8] sm:$0xff]
        %v2058 = vld [vmem:[%s3 + $0xe0] sm:$0xff]
        %v2059 = vld [vmem:[%s3 + $0xe8] sm:$0xff]
        %v2060 = vld [vmem:[%s3 + $0xf0] sm:$0xff]
        %v2061 = vld [vmem:[%s3 + $0xf8] sm:$0xff]
        %v2062 = vld [vmem:[%s3 + $0x100] sm:$0xff]
        %v2063 = vld [vmem:[%s3 + $0x108] sm:$0xff]
        %v2064 = vld [vmem:[%s3 + $0x110] sm:$0xff]
        %v2065 = vld [vmem:[%s3 + $0x118] sm:$0xff]
        %v2066 = vld [vmem:[%s3 + $0x120] sm:$0xff]
        %v2067 = vld [vmem:[%s3 + $0x128] sm:$0xff]
        %v2068 = vld [vmem:[%s3 + $0x130] sm:$0xff]
        %v2069 = vld [vmem:[%s3 + $0x138] sm:$0xff]
        %v2070 = vld [vmem:[%s3 + $0x140] sm:$0xff]
        %v2071 = vld [vmem:[%s3 + $0x148] sm:$0xff]
        %v2072 = vld [vmem:[%s3 + $0x150] sm:$0xff]
        %v2073 = vld [vmem:[%s3 + $0x158] sm:$0xff]
        %v2074 = vld [vmem:[%s3 + $0x160] sm:$0xff]
        %v2075 = vld [vmem:[%s3 + $0x168] sm:$0xff]
        %v2076 = vld [vmem:[%s3 + $0x170] sm:$0xff]
        %v2077 = vld [vmem:[%s3 + $0x178] sm:$0xff]
        %v2078 = vld [vmem:[%s3 + $0x180] sm:$0xff]
        %v2079 = vld [vmem:[%s3 + $0x188] sm:$0xff]
        %v2080 = vld [vmem:[%s3 + $0x190] sm:$0xff]
        %v2081 = vld [vmem:[%s3 + $0x198] sm:$0xff]
        %v2082 = vld [vmem:[%s3 + $0x1a0] sm:$0xff]
        %v2083 = vld [vmem:[%s3 + $0x1a8] sm:$0xff]
        %v2084 = vld [vmem:[%s3 + $0x1b0] sm:$0xff]
        %v2085 = vld [vmem:[%s3 + $0x1b8] sm:$0xff]
        %v2086 = vld [vmem:[%s3 + $0x1c0] sm:$0xff]
        %v2087 = vld [vmem:[%s3 + $0x1c8] sm:$0xff]
        %v2088 = vld [vmem:[%s3 + $0x1d0] sm:$0xff]
        %v2089 = vld [vmem:[%s3 + $0x1d8] sm:$0xff]
        %v2090 = vld [vmem:[%s3 + $0x1e0] sm:$0xff]
        %v2091 = vld [vmem:[%s3 + $0x1e8] sm:$0xff]
        %v2092 = vld [vmem:[%s3 + $0x1f0] sm:$0xff]
        %v2093 = vld [vmem:[%s3 + $0x1f8] sm:$0xff]
        %v2094 = vld [vmem:[%s4] sm:$0x3]
        %v2096 = vperm.slane %v2094, 0
        %v2097 = vperm.slane %v2094, 1
        %v2164 = vunpack.c.l.b16 %v2030
        %v2165 = vunpack.c.h.b16 %v2030
        %v2166 = vunpack.c.l.b16 %v2031
        %v2167 = vunpack.c.h.b16 %v2031
        %v2168 = vunpack.c.l.b16 %v2032
        %v2169 = vunpack.c.h.b16 %v2032
        %v2170 = vunpack.c.l.b16 %v2033
        %v2171 = vunpack.c.h.b16 %v2033
        %v2172 = vunpack.c.l.b16 %v2034
        %v2173 = vunpack.c.h.b16 %v2034
        %v2174 = vunpack.c.l.b16 %v2035
        %v2175 = vunpack.c.h.b16 %v2035
        %v2176 = vunpack.c.l.b16 %v2036
        %v2177 = vunpack.c.h.b16 %v2036
        %v2178 = vunpack.c.l.b16 %v2037
        %v2179 = vunpack.c.h.b16 %v2037
        %v2180 = vunpack.c.l.b16 %v2038
        %v2181 = vunpack.c.h.b16 %v2038
        %v2182 = vunpack.c.l.b16 %v2039
        %v2183 = vunpack.c.h.b16 %v2039
        %v2184 = vunpack.c.l.b16 %v2040
        %v2185 = vunpack.c.h.b16 %v2040
        %v2186 = vunpack.c.l.b16 %v2041
        %v2187 = vunpack.c.h.b16 %v2041
        %v2188 = vunpack.c.l.b16 %v2042
        %v2189 = vunpack.c.h.b16 %v2042
        %v2190 = vunpack.c.l.b16 %v2043
        %v2191 = vunpack.c.h.b16 %v2043
        %v2192 = vunpack.c.l.b16 %v2044
        %v2193 = vunpack.c.h.b16 %v2044
        %v2194 = vunpack.c.l.b16 %v2045
        %v2195 = vunpack.c.h.b16 %v2045
        %v2196 = vunpack.c.l.b16 %v2046
        %v2197 = vunpack.c.h.b16 %v2046
        %v2198 = vunpack.c.l.b16 %v2047
        %v2199 = vunpack.c.h.b16 %v2047
        %v2200 = vunpack.c.l.b16 %v2048
        %v2201 = vunpack.c.h.b16 %v2048
        %v2202 = vunpack.c.l.b16 %v2049
        %v2203 = vunpack.c.h.b16 %v2049
        %v2204 = vunpack.c.l.b16 %v2050
        %v2205 = vunpack.c.h.b16 %v2050
        %v2206 = vunpack.c.l.b16 %v2051
        %v2207 = vunpack.c.h.b16 %v2051
        %v2208 = vunpack.c.l.b16 %v2052
        %v2209 = vunpack.c.h.b16 %v2052
        %v2210 = vunpack.c.l.b16 %v2053
        %v2211 = vunpack.c.h.b16 %v2053
        %v2212 = vunpack.c.l.b16 %v2054
        %v2213 = vunpack.c.h.b16 %v2054
        %v2214 = vunpack.c.l.b16 %v2055
        %v2215 = vunpack.c.h.b16 %v2055
        %v2216 = vunpack.c.l.b16 %v2056
        %v2217 = vunpack.c.h.b16 %v2056
        %v2218 = vunpack.c.l.b16 %v2057
        %v2219 = vunpack.c.h.b16 %v2057
        %v2220 = vunpack.c.l.b16 %v2058
        %v2221 = vunpack.c.h.b16 %v2058
        %v2222 = vunpack.c.l.b16 %v2059
        %v2223 = vunpack.c.h.b16 %v2059
        %v2224 = vunpack.c.l.b16 %v2060
        %v2225 = vunpack.c.h.b16 %v2060
        %v2226 = vunpack.c.l.b16 %v2061
        %v2227 = vunpack.c.h.b16 %v2061
        %v2228 = vunpack.c.l.b16 %v2062
        %v2229 = vunpack.c.h.b16 %v2062
        %v2230 = vunpack.c.l.b16 %v2063
        %v2231 = vunpack.c.h.b16 %v2063
        %v2232 = vunpack.c.l.b16 %v2064
        %v2233 = vunpack.c.h.b16 %v2064
        %v2234 = vunpack.c.l.b16 %v2065
        %v2235 = vunpack.c.h.b16 %v2065
        %v2236 = vunpack.c.l.b16 %v2066
        %v2237 = vunpack.c.h.b16 %v2066
        %v2238 = vunpack.c.l.b16 %v2067
        %v2239 = vunpack.c.h.b16 %v2067
        %v2240 = vunpack.c.l.b16 %v2068
        %v2241 = vunpack.c.h.b16 %v2068
        %v2242 = vunpack.c.l.b16 %v2069
        %v2243 = vunpack.c.h.b16 %v2069
        %v2244 = vunpack.c.l.b16 %v2070
        %v2245 = vunpack.c.h.b16 %v2070
        %v2246 = vunpack.c.l.b16 %v2071
        %v2247 = vunpack.c.h.b16 %v2071
        %v2248 = vunpack.c.l.b16 %v2072
        %v2249 = vunpack.c.h.b16 %v2072
        %v2250 = vunpack.c.l.b16 %v2073
        %v2251 = vunpack.c.h.b16 %v2073
        %v2252 = vunpack.c.l.b16 %v2074
        %v2253 = vunpack.c.h.b16 %v2074
        %v2254 = vunpack.c.l.b16 %v2075
        %v2255 = vunpack.c.h.b16 %v2075
        %v2256 = vunpack.c.l.b16 %v2076
        %v2257 = vunpack.c.h.b16 %v2076
        %v2258 = vunpack.c.l.b16 %v2077
        %v2259 = vunpack.c.h.b16 %v2077
        %v2260 = vunpack.c.l.b16 %v2078
        %v2261 = vunpack.c.h.b16 %v2078
        %v2262 = vunpack.c.l.b16 %v2079
        %v2263 = vunpack.c.h.b16 %v2079
        %v2264 = vunpack.c.l.b16 %v2080
        %v2265 = vunpack.c.h.b16 %v2080
        %v2266 = vunpack.c.l.b16 %v2081
        %v2267 = vunpack.c.h.b16 %v2081
        %v2268 = vunpack.c.l.b16 %v2082
        %v2269 = vunpack.c.h.b16 %v2082
        %v2270 = vunpack.c.l.b16 %v2083
        %v2271 = vunpack.c.h.b16 %v2083
        %v2272 = vunpack.c.l.b16 %v2084
        %v2273 = vunpack.c.h.b16 %v2084
        %v2274 = vunpack.c.l.b16 %v2085
        %v2275 = vunpack.c.h.b16 %v2085
        %v2276 = vunpack.c.l.b16 %v2086
        %v2277 = vunpack.c.h.b16 %v2086
        %v2278 = vunpack.c.l.b16 %v2087
        %v2279 = vunpack.c.h.b16 %v2087
        %v2280 = vunpack.c.l.b16 %v2088
        %v2281 = vunpack.c.h.b16 %v2088
        %v2282 = vunpack.c.l.b16 %v2089
        %v2283 = vunpack.c.h.b16 %v2089
        %v2284 = vunpack.c.l.b16 %v2090
        %v2285 = vunpack.c.h.b16 %v2090
        %v2286 = vunpack.c.l.b16 %v2091
        %v2287 = vunpack.c.h.b16 %v2091
        %v2288 = vunpack.c.l.b16 %v2092
        %v2289 = vunpack.c.h.b16 %v2092
        %v2290 = vunpack.c.l.b16 %v2093
        %v2291 = vunpack.c.h.b16 %v2093
        %v2292 = vpack.c.b16 %v2166, %v2164
        %v2293 = vpack.c.b16 %v2167, %v2165
        %v2294 = vpack.c.b16 %v2170, %v2168
        %v2295 = vpack.c.b16 %v2171, %v2169
        %v2296 = vpack.c.b16 %v2174, %v2172
        %v2297 = vpack.c.b16 %v2175, %v2173
        %v2298 = vpack.c.b16 %v2178, %v2176
        %v2299 = vpack.c.b16 %v2179, %v2177
        %v2300 = vpack.c.b16 %v2182, %v2180
        %v2301 = vpack.c.b16 %v2183, %v2181
        %v2302 = vpack.c.b16 %v2186, %v2184
        %v2303 = vpack.c.b16 %v2187, %v2185
        %v2304 = vpack.c.b16 %v2190, %v2188
        %v2305 = vpack.c.b16 %v2191, %v2189
        %v2306 = vpack.c.b16 %v2194, %v2192
        %v2307 = vpack.c.b16 %v2195, %v2193
        %v2308 = vpack.c.b16 %v2198, %v2196
        %v2309 = vpack.c.b16 %v2199, %v2197
        %v2310 = vpack.c.b16 %v2202, %v2200
        %v2311 = vpack.c.b16 %v2203, %v2201
        %v2312 = vpack.c.b16 %v2206, %v2204
        %v2313 = vpack.c.b16 %v2207, %v2205
        %v2314 = vpack.c.b16 %v2210, %v2208
        %v2315 = vpack.c.b16 %v2211, %v2209
        %v2316 = vpack.c.b16 %v2214, %v2212
        %v2317 = vpack.c.b16 %v2215, %v2213
        %v2318 = vpack.c.b16 %v2218, %v2216
        %v2319 = vpack.c.b16 %v2219, %v2217
        %v2320 = vpack.c.b16 %v2222, %v2220
        %v2321 = vpack.c.b16 %v2223, %v2221
        %v2322 = vpack.c.b16 %v2226, %v2224
        %v2323 = vpack.c.b16 %v2227, %v2225
        %v2324 = vpack.c.b16 %v2230, %v2228
        %v2325 = vpack.c.b16 %v2231, %v2229
        %v2326 = vpack.c.b16 %v2234, %v2232
        %v2327 = vpack.c.b16 %v2235, %v2233
        %v2328 = vpack.c.b16 %v2238, %v2236
        %v2329 = vpack.c.b16 %v2239, %v2237
        %v2330 = vpack.c.b16 %v2242, %v2240
        %v2331 = vpack.c.b16 %v2243, %v2241
        %v2332 = vpack.c.b16 %v2246, %v2244
        %v2333 = vpack.c.b16 %v2247, %v2245
        %v2334 = vpack.c.b16 %v2250, %v2248
        %v2335 = vpack.c.b16 %v2251, %v2249
        %v2336 = vpack.c.b16 %v2254, %v2252
        %v2337 = vpack.c.b16 %v2255, %v2253
        %v2338 = vpack.c.b16 %v2258, %v2256
        %v2339 = vpack.c.b16 %v2259, %v2257
        %v2340 = vpack.c.b16 %v2262, %v2260
        %v2341 = vpack.c.b16 %v2263, %v2261
        %v2342 = vpack.c.b16 %v2266, %v2264
        %v2343 = vpack.c.b16 %v2267, %v2265
        %v2344 = vpack.c.b16 %v2270, %v2268
        %v2345 = vpack.c.b16 %v2271, %v2269
        %v2346 = vpack.c.b16 %v2274, %v2272
        %v2347 = vpack.c.b16 %v2275, %v2273
        %v2348 = vpack.c.b16 %v2278, %v2276
        %v2349 = vpack.c.b16 %v2279, %v2277
        %v2350 = vpack.c.b16 %v2282, %v2280
        %v2351 = vpack.c.b16 %v2283, %v2281
        %v2352 = vpack.c.b16 %v2286, %v2284
        %v2353 = vpack.c.b16 %v2287, %v2285
        %v2354 = vpack.c.b16 %v2290, %v2288
        %v2355 = vpack.c.b16 %v2291, %v2289
        %2420 = vmatpush.bf16.msra.mxu0 %v2306
        %2421 = vmatpush.bf16.msra.mxu0 %v2304
        %2422 = vmatpush.bf16.msra.mxu0 %v2302
        %2423 = vmatpush.bf16.msra.mxu0 %v2300
        %2424 = vmatpush.bf16.msra.mxu0 %v2298
        %2425 = vmatpush.bf16.msra.mxu0 %v2296
        %2426 = vmatpush.bf16.msra.mxu0 %v2294
        %2427 = vmatpush.bf16.msra.mxu0 %v2292
        %2428 = vmatmul.bf16.gmra.mxu0 %v2026
        %v2429 = vpop.f32.mrf.mxu0
        %v2430 = vadd.f32 %v2096, %v2429
        %v2431 = vpop.f32.mrf.mxu0
        %2432 = vdwg.mxu0
        %2433 = vmatpush.bf16.msra.mxu0 %v2322
        %2434 = vmatpush.bf16.msra.mxu0 %v2320
        %2435 = vmatpush.bf16.msra.mxu0 %v2318
        %2436 = vmatpush.bf16.msra.mxu0 %v2316
        %2437 = vmatpush.bf16.msra.mxu0 %v2314
        %2438 = vmatpush.bf16.msra.mxu0 %v2312
        %2439 = vmatpush.bf16.msra.mxu0 %v2310
        %2440 = vmatpush.bf16.msra.mxu0 %v2308
        %2441 = vmatmul.bf16.gmra.mxu0 %v2027
        %v2442 = vpop.f32.mrf.mxu0
        %v2443 = vadd.f32 %v2430, %v2442
        %v2444 = vpop.f32.mrf.mxu0
        %2445 = vdwg.mxu0
        %2446 = vmatpush.bf16.msra.mxu0 %v2338
        %2447 = vmatpush.bf16.msra.mxu0 %v2336
        %2448 = vmatpush.bf16.msra.mxu0 %v2334
        %2449 = vmatpush.bf16.msra.mxu0 %v2332
        %2450 = vmatpush.bf16.msra.mxu0 %v2330
        %2451 = vmatpush.bf16.msra.mxu0 %v2328
        %2452 = vmatpush.bf16.msra.mxu0 %v2326
        %2453 = vmatpush.bf16.msra.mxu0 %v2324
        %2454 = vmatmul.bf16.gmra.mxu0 %v2028
        %v2455 = vpop.f32.mrf.mxu0
        %v2456 = vadd.f32 %v2443, %v2455
        %v2457 = vpop.f32.mrf.mxu0
        %2458 = vdwg.mxu0
        %2459 = vmatpush.bf16.msra.mxu0 %v2354
        %2460 = vmatpush.bf16.msra.mxu0 %v2352
        %2461 = vmatpush.bf16.msra.mxu0 %v2350
        %2462 = vmatpush.bf16.msra.mxu0 %v2348
        %2463 = vmatpush.bf16.msra.mxu0 %v2346
        %2464 = vmatpush.bf16.msra.mxu0 %v2344
        %2465 = vmatpush.bf16.msra.mxu0 %v2342
        %2466 = vmatpush.bf16.msra.mxu0 %v2340
        %2467 = vmatmul.bf16.gmra.mxu0 %v2029
        %v2468 = vpop.f32.mrf.mxu0
        %v2469 = vadd.f32 %v2456, %v2468
        %v2470 = vpop.f32.mrf.mxu0
        %2471 = vdwg.mxu0
        %2472 = vmatpush.bf16.msra.mxu0 %v2307
        %2473 = vmatpush.bf16.msra.mxu0 %v2305
        %2474 = vmatpush.bf16.msra.mxu0 %v2303
        %2475 = vmatpush.bf16.msra.mxu0 %v2301
        %2476 = vmatpush.bf16.msra.mxu0 %v2299
        %2477 = vmatpush.bf16.msra.mxu0 %v2297
        %2478 = vmatpush.bf16.msra.mxu0 %v2295
        %2479 = vmatpush.bf16.msra.mxu0 %v2293
        %2480 = vmatmul.bf16.gmra.mxu0 %v2026
        %v2481 = vpop.f32.mrf.mxu0
        %v2482 = vadd.f32 %v2097, %v2481
        %v2483 = vpop.f32.mrf.mxu0
        %2484 = vdwg.mxu0
        %2485 = vmatpush.bf16.msra.mxu0 %v2323
        %2486 = vmatpush.bf16.msra.mxu0 %v2321
        %2487 = vmatpush.bf16.msra.mxu0 %v2319
        %2488 = vmatpush.bf16.msra.mxu0 %v2317
        %2489 = vmatpush.bf16.msra.mxu0 %v2315
        %2490 = vmatpush.bf16.msra.mxu0 %v2313
        %2491 = vmatpush.bf16.msra.mxu0 %v2311
        %2492 = vmatpush.bf16.msra.mxu0 %v2309
        %2493 = vmatmul.bf16.gmra.mxu0 %v2027
        %v2494 = vpop.f32.mrf.mxu0
        %v2495 = vadd.f32 %v2482, %v2494
        %v2496 = vpop.f32.mrf.mxu0
        %2497 = vdwg.mxu0
        %2498 = vmatpush.bf16.msra.mxu0 %v2339
        %2499 = vmatpush.bf16.msra.mxu0 %v2337
        %2500 = vmatpush.bf16.msra.mxu0 %v2335
        %2501 = vmatpush.bf16.msra.mxu0 %v2333
        %2502 = vmatpush.bf16.msra.mxu0 %v2331
        %2503 = vmatpush.bf16.msra.mxu0 %v2329
        %2504 = vmatpush.bf16.msra.mxu0 %v2327
        %2505 = vmatpush.bf16.msra.mxu0 %v2325
        %2506 = vmatmul.bf16.gmra.mxu0 %v2028
        %v2507 = vpop.f32.mrf.mxu0
        %v2508 = vadd.f32 %v2495, %v2507
        %v2509 = vpop.f32.mrf.mxu0
        %2510 = vdwg.mxu0
        %2511 = vmatpush.bf16.msra.mxu0 %v2355
        %2512 = vmatpush.bf16.msra.mxu0 %v2353
        %2513 = vmatpush.bf16.msra.mxu0 %v2351
        %2514 = vmatpush.bf16.msra.mxu0 %v2349
        %2515 = vmatpush.bf16.msra.mxu0 %v2347
        %2516 = vmatpush.bf16.msra.mxu0 %v2345
        %2517 = vmatpush.bf16.msra.mxu0 %v2343
        %2518 = vmatpush.bf16.msra.mxu0 %v2341
        %2519 = vmatmul.bf16.gmra.mxu0 %v2029
        %v2520 = vpop.f32.mrf.mxu0
        %v2521 = vadd.f32 %v2508, %v2520
        %v2522 = vpop.f32.mrf.mxu0
        %2523 = vdwg.mxu0
        %v2524 = vmax.f32 %v2469, 0.0
        %v2525 = vmax.f32 %v2521, 0.0
        %v2526 = vpack.c.bf16 %v2524, %v2524
        %v2527 = vpack.c.bf16 %v2525, %v2525
        %v2528 = vld [vmem:[%s5] sm:$0xf]
        %v2529 = vld [vmem:[%s5 + $0x4] sm:$0xf]
        %v2530 = vld [vmem:[%s5 + $0x8] sm:$0xf]
        %v2531 = vld [vmem:[%s5 + $0xc] sm:$0xf]
        %v2532 = vld [vmem:[%s5 + $0x10] sm:$0xf]
        %v2533 = vld [vmem:[%s5 + $0x14] sm:$0xf]
        %v2534 = vld [vmem:[%s5 + $0x18] sm:$0xf]
        %v2535 = vld [vmem:[%s5 + $0x1c] sm:$0xf]
        %v2536 = vld [vmem:[%s5 + $0x20] sm:$0xf]
        %v2537 = vld [vmem:[%s5 + $0x24] sm:$0xf]
        %v2538 = vld [vmem:[%s5 + $0x28] sm:$0xf]
        %v2539 = vld [vmem:[%s5 + $0x2c] sm:$0xf]
        %v2540 = vld [vmem:[%s5 + $0x30] sm:$0xf]
        %v2541 = vld [vmem:[%s5 + $0x34] sm:$0xf]
        %v2542 = vld [vmem:[%s5 + $0x38] sm:$0xf]
        %v2543 = vld [vmem:[%s5 + $0x3c] sm:$0xf]
        %v2544 = vld [vmem:[%s5 + $0x40] sm:$0xf]
        %v2545 = vld [vmem:[%s5 + $0x44] sm:$0xf]
        %v2546 = vld [vmem:[%s5 + $0x48] sm:$0xf]
        %v2547 = vld [vmem:[%s5 + $0x4c] sm:$0xf]
        %v2548 = vld [vmem:[%s5 + $0x50] sm:$0xf]
        %v2549 = vld [vmem:[%s5 + $0x54] sm:$0xf]
        %v2550 = vld [vmem:[%s5 + $0x58] sm:$0xf]
        %v2551 = vld [vmem:[%s5 + $0x5c] sm:$0xf]
        %v2552 = vld [vmem:[%s5 + $0x60] sm:$0xf]
        %v2553 = vld [vmem:[%s5 + $0x64] sm:$0xf]
        %v2554 = vld [vmem:[%s5 + $0x68] sm:$0xf]
        %v2555 = vld [vmem:[%s5 + $0x6c] sm:$0xf]
        %v2556 = vld [vmem:[%s5 + $0x70] sm:$0xf]
        %v2557 = vld [vmem:[%s5 + $0x74] sm:$0xf]
        %v2558 = vld [vmem:[%s5 + $0x78] sm:$0xf]
        %v2559 = vld [vmem:[%s5 + $0x7c] sm:$0xf]
        %v2560 = vld [vmem:[%s6] sm:$0x1]
        %v2562 = vperm.slane %v2560, 0
        %v2596 = vunpack.c.l.b16 %v2528
        %v2597 = vunpack.c.l.b16 %v2529
        %v2598 = vunpack.c.l.b16 %v2530
        %v2599 = vunpack.c.l.b16 %v2531
        %v2600 = vunpack.c.l.b16 %v2532
        %v2601 = vunpack.c.l.b16 %v2533
        %v2602 = vunpack.c.l.b16 %v2534
        %v2603 = vunpack.c.l.b16 %v2535
        %v2604 = vunpack.c.l.b16 %v2536
        %v2605 = vunpack.c.l.b16 %v2537
        %v2606 = vunpack.c.l.b16 %v2538
        %v2607 = vunpack.c.l.b16 %v2539
        %v2608 = vunpack.c.l.b16 %v2540
        %v2609 = vunpack.c.l.b16 %v2541
        %v2610 = vunpack.c.l.b16 %v2542
        %v2611 = vunpack.c.l.b16 %v2543
        %v2612 = vunpack.c.l.b16 %v2544
        %v2613 = vunpack.c.l.b16 %v2545
        %v2614 = vunpack.c.l.b16 %v2546
        %v2615 = vunpack.c.l.b16 %v2547
        %v2616 = vunpack.c.l.b16 %v2548
        %v2617 = vunpack.c.l.b16 %v2549
        %v2618 = vunpack.c.l.b16 %v2550
        %v2619 = vunpack.c.l.b16 %v2551
        %v2620 = vunpack.c.l.b16 %v2552
        %v2621 = vunpack.c.l.b16 %v2553
        %v2622 = vunpack.c.l.b16 %v2554
        %v2623 = vunpack.c.l.b16 %v2555
        %v2624 = vunpack.c.l.b16 %v2556
        %v2625 = vunpack.c.l.b16 %v2557
        %v2626 = vunpack.c.l.b16 %v2558
        %v2627 = vunpack.c.l.b16 %v2559
        %v2628 = vpack.c.b16 %v2597, %v2596
        %v2629 = vpack.c.b16 %v2599, %v2598
        %v2630 = vpack.c.b16 %v2601, %v2600
        %v2631 = vpack.c.b16 %v2603, %v2602
        %v2632 = vpack.c.b16 %v2605, %v2604
        %v2633 = vpack.c.b16 %v2607, %v2606
        %v2634 = vpack.c.b16 %v2609, %v2608
        %v2635 = vpack.c.b16 %v2611, %v2610
        %v2636 = vpack.c.b16 %v2613, %v2612
        %v2637 = vpack.c.b16 %v2615, %v2614
        %v2638 = vpack.c.b16 %v2617, %v2616
        %v2639 = vpack.c.b16 %v2619, %v2618
        %v2640 = vpack.c.b16 %v2621, %v2620
        %v2641 = vpack.c.b16 %v2623, %v2622
        %v2642 = vpack.c.b16 %v2625, %v2624
        %v2643 = vpack.c.b16 %v2627, %v2626
        %2660 = vmatpush.bf16.msra.mxu0 %v2635
        %2661 = vmatpush.bf16.msra.mxu0 %v2634
        %2662 = vmatpush.bf16.msra.mxu0 %v2633
        %2663 = vmatpush.bf16.msra.mxu0 %v2632
        %2664 = vmatpush.bf16.msra.mxu0 %v2631
        %2665 = vmatpush.bf16.msra.mxu0 %v2630
        %2666 = vmatpush.bf16.msra.mxu0 %v2629
        %2667 = vmatpush.bf16.msra.mxu0 %v2628
        %2668 = vmatmul.bf16.gmra.mxu0 %v2526
        %v2669 = vpop.f32.mrf.mxu0
        %v2670 = vadd.f32 %v2562, %v2669
        %v2671 = vpop.f32.mrf.mxu0
        %2672 = vdwg.mxu0
        %2673 = vmatpush.bf16.msra.mxu0 %v2643
        %2674 = vmatpush.bf16.msra.mxu0 %v2642
        %2675 = vmatpush.bf16.msra.mxu0 %v2641
        %2676 = vmatpush.bf16.msra.mxu0 %v2640
        %2677 = vmatpush.bf16.msra.mxu0 %v2639
        %2678 = vmatpush.bf16.msra.mxu0 %v2638
        %2679 = vmatpush.bf16.msra.mxu0 %v2637
        %2680 = vmatpush.bf16.msra.mxu0 %v2636
        %2681 = vmatmul.bf16.gmra.mxu0 %v2527
        %v2682 = vpop.f32.mrf.mxu0
        %v2683 = vadd.f32 %v2670, %v2682
        %v2684 = vpop.f32.mrf.mxu0
        %2685 = vdwg.mxu0
        %v2686 = vmax.f32 %v2683, 0.0
        %v2687 = vpack.c.bf16 %v2686, %v2686
        %v2688 = vld [vmem:[%s7] sm:$0xf]
        %v2689 = vld [vmem:[%s7 + $0x4] sm:$0xf]
        %v2690 = vld [vmem:[%s7 + $0x8] sm:$0xf]
        %v2691 = vld [vmem:[%s7 + $0xc] sm:$0xf]
        %v2692 = vld [vmem:[%s7 + $0x10] sm:$0xf]
        %v2693 = vld [vmem:[%s7 + $0x14] sm:$0xf]
        %v2694 = vld [vmem:[%s7 + $0x18] sm:$0xf]
        %v2695 = vld [vmem:[%s7 + $0x1c] sm:$0xf]
        %v2696 = vld [vmem:[%s7 + $0x20] sm:$0xf]
        %v2697 = vld [vmem:[%s7 + $0x24] sm:$0xf]
        %v2698 = vld [vmem:[%s7 + $0x28] sm:$0xf]
        %v2699 = vld [vmem:[%s7 + $0x2c] sm:$0xf]
        %v2700 = vld [vmem:[%s7 + $0x30] sm:$0xf]
        %v2701 = vld [vmem:[%s7 + $0x34] sm:$0xf]
        %v2702 = vld [vmem:[%s7 + $0x38] sm:$0xf]
        %v2703 = vld [vmem:[%s7 + $0x3c] sm:$0xf]
        %v2704 = vld [vmem:[%s8] sm:$0x1]
        %v2706 = vperm.slane %v2704, 0
        %v2724 = vunpack.c.l.b16 %v2688
        %v2725 = vunpack.c.l.b16 %v2689
        %v2726 = vunpack.c.l.b16 %v2690
        %v2727 = vunpack.c.l.b16 %v2691
        %v2728 = vunpack.c.l.b16 %v2692
        %v2729 = vunpack.c.l.b16 %v2693
        %v2730 = vunpack.c.l.b16 %v2694
        %v2731 = vunpack.c.l.b16 %v2695
        %v2732 = vunpack.c.l.b16 %v2696
        %v2733 = vunpack.c.l.b16 %v2697
        %v2734 = vunpack.c.l.b16 %v2698
        %v2735 = vunpack.c.l.b16 %v2699
        %v2736 = vunpack.c.l.b16 %v2700
        %v2737 = vunpack.c.l.b16 %v2701
        %v2738 = vunpack.c.l.b16 %v2702
        %v2739 = vunpack.c.l.b16 %v2703
        %v2740 = vpack.c.b16 %v2725, %v2724
        %v2741 = vpack.c.b16 %v2727, %v2726
        %v2742 = vpack.c.b16 %v2729, %v2728
        %v2743 = vpack.c.b16 %v2731, %v2730
        %v2744 = vpack.c.b16 %v2733, %v2732
        %v2745 = vpack.c.b16 %v2735, %v2734
        %v2746 = vpack.c.b16 %v2737, %v2736
        %v2747 = vpack.c.b16 %v2739, %v2738
        %2756 = vmatpush.bf16.msra.mxu0 %v2747
        %2757 = vmatpush.bf16.msra.mxu0 %v2746
        %2758 = vmatpush.bf16.msra.mxu0 %v2745
        %2759 = vmatpush.bf16.msra.mxu0 %v2744
        %2760 = vmatpush.bf16.msra.mxu0 %v2743
        %2761 = vmatpush.bf16.msra.mxu0 %v2742
        %2762 = vmatpush.bf16.msra.mxu0 %v2741
        %2763 = vmatpush.bf16.msra.mxu0 %v2740
        %2764 = vmatmul.bf16.gmra.mxu0 %v2687
        %v2765 = vpop.f32.mrf.mxu0
        %v2766 = vadd.f32 %v2706, %v2765
        %v2767 = vpop.f32.mrf.mxu0
        %2768 = vdwg.mxu0
        %v2769 = vmax.f32 %v2766, 0.0
        %v2770 = vpack.c.bf16 %v2769, %v2769
        %v2771 = vld [vmem:[%s9] sm:$0xf]
        %v2772 = vld [vmem:[%s9 + $0x4] sm:$0xf]
        %v2773 = vld [vmem:[%s9 + $0x8] sm:$0xf]
        %v2774 = vld [vmem:[%s9 + $0xc] sm:$0xf]
        %v2775 = vld [vmem:[%s9 + $0x10] sm:$0xf]
        %v2776 = vld [vmem:[%s9 + $0x14] sm:$0xf]
        %v2777 = vld [vmem:[%s9 + $0x18] sm:$0xf]
        %v2778 = vld [vmem:[%s9 + $0x1c] sm:$0xf]
        %v2779 = vld [vmem:[%s10] sm:$0x1]
        %v2781 = vperm.slane %v2779, 0
        %v2791 = vunpack.c.l.b16 %v2771
        %v2792 = vunpack.c.l.b16 %v2772
        %v2793 = vunpack.c.l.b16 %v2773
        %v2794 = vunpack.c.l.b16 %v2774
        %v2795 = vunpack.c.l.b16 %v2775
        %v2796 = vunpack.c.l.b16 %v2776
        %v2797 = vunpack.c.l.b16 %v2777
        %v2798 = vunpack.c.l.b16 %v2778
        %v2799 = vpack.c.b16 %v2792, %v2791
        %v2800 = vpack.c.b16 %v2794, %v2793
        %v2801 = vpack.c.b16 %v2796, %v2795
        %v2802 = vpack.c.b16 %v2798, %v2797
        %vm2807 = vcmask 523264
        %v2809 = vsel %vm2807, %v2770, 0
        %2811 = vmatpush.bf16.msra.mxu0 0
        %2812 = vmatpush.bf16.msra.mxu0 0
        %2813 = vmatpush.bf16.msra.mxu0 0
        %2814 = vmatpush.bf16.msra.mxu0 0
        %2815 = vmatpush.bf16.msra.mxu0 %v2802
        %2816 = vmatpush.bf16.msra.mxu0 %v2801
        %2817 = vmatpush.bf16.msra.mxu0 %v2800
        %2818 = vmatpush.bf16.msra.mxu0 %v2799
        %2819 = vmatmul.bf16.gmra.mxu0 %v2809
        %v2820 = vpop.f32.mrf.mxu0
        %v2821 = vadd.f32 %v2781, %v2820
        %v2822 = vpop.f32.mrf.mxu0
        %2823 = vdwg.mxu0
        %v2824 = vmax.f32 %v2821, 0.0
        %v2825 = vpack.c.bf16 %v2824, %v2824
        %v2826 = vld [vmem:[%s11] sm:$0xf]
        %v2827 = vld [vmem:[%s11 + $0x4] sm:$0xf]
        %v2828 = vld [vmem:[%s11 + $0x8] sm:$0xf]
        %v2829 = vld [vmem:[%s11 + $0xc] sm:$0xf]
        %v2830 = vld [vmem:[%s12] sm:$0x1]
        %v2832 = vperm.slane %v2830, 0
        %v2838 = vunpack.c.l.b16 %v2826
        %v2839 = vunpack.c.l.b16 %v2827
        %v2840 = vunpack.c.l.b16 %v2828
        %v2841 = vunpack.c.l.b16 %v2829
        %v2842 = vpack.c.b16 %v2839, %v2838
        %v2843 = vpack.c.b16 %v2841, %v2840
        %vm2846 = vcmask 261120
        %v2848 = vsel %vm2846, %v2825, 0
        %2850 = vmatpush.bf16.msra.mxu0 0
        %2851 = vmatpush.bf16.msra.mxu0 0
        %2852 = vmatpush.bf16.msra.mxu0 0
        %2853 = vmatpush.bf16.msra.mxu0 0
        %2854 = vmatpush.bf16.msra.mxu0 0
        %2855 = vmatpush.bf16.msra.mxu0 0
        %2856 = vmatpush.bf16.msra.mxu0 %v2843
        %2857 = vmatpush.bf16.msra.mxu0 %v2842
        %2858 = vmatmul.bf16.gmra.mxu0 %v2848
        %v2859 = vpop.f32.mrf.mxu0
        %v2860 = vadd.f32 %v2832, %v2859
        %v2861 = vpop.f32.mrf.mxu0
        %2862 = vdwg.mxu0
        %2863 = vst [vmem:[%s433] sm:$0xff] %v2860
        %s2864 = sand.u32 %s313, 1
        %s2865 = scalar_lea.sflag [#allocation3], %s2864
        %s2866 = sand.u32 %s313, 1
        %s2867 = smul.addr %s2866, 8
        %s2868 = scalar_lea.vmem [#allocation2], %s2867
        // Predicated region
        $region73: #{mlp_forward.1} parent=71 // pred_check
          %p2869 = pneg %p323
        $region74: #{mlp_forward.1} parent=71 // pred_check_branch
          %2871 = sbr.rel (%p2869) target = $region76
        $region75: #{mlp_forward.1} parent=71 // pred_region
          %2873 = vsyncadd %s2865, 0
          %s2874 = smul.addr %s27, 8
          %s2875 = scalar_lea.hbm %s13, %s2874
          %s2877 = sshll.u32 %s2868, 4
          %s2878 = int_to_ptr.vmem [resolvable:$true] %s2877
          %s2879 = sshll.u32 %s2875, 4
          %s2880 = int_to_ptr.hbm [resolvable:$true] %s2879
          %2882 = dma.vmem_to_hbm [thread:$0]  %s2878, 128, %s2880, %s2865
        $region76: #{mlp_forward.1} parent=71 // pred_fallthru
          _
      $region72: #{mlp_forward.1} parent=5 // pred_fallthru
        _
      %p2883 = scmp.le.s32.totalorder 2, %s22
      // Predicated region
      $region77: #{mlp_forward.1} parent=5 // pred_check
        %p2884 = pneg %p2883
      $region78: #{mlp_forward.1} parent=5 // pred_check_branch
        %2886 = sbr.rel (%p2884) target = $region80
      $region79: #{mlp_forward.1} parent=5 // pred_region
        %s2887 = ssub.s32 %s22, 2
        // Predicated region
        $region81: #{mlp_forward.1} parent=79 // pred_check
          %p2888 = pneg %p329
        $region82: #{mlp_forward.1} parent=79 // pred_check_branch
          %2890 = sbr.rel (%p2888) target = $region84
        $region83: #{mlp_forward.1} parent=79 // pred_region
          %s2891 = sand.u32 %s314, 1
          %s2892 = scalar_lea.sflag [#allocation3], %s2891
          %s2893 = sand.u32 %s314, 1
          %s2894 = smul.addr %s2893, 8
          %s2895 = scalar_lea.vmem [#allocation2], %s2894
          %2897 = dma.done %s2892, 128
        $region84: #{mlp_forward.1} parent=79 // pred_fallthru
          _
      $region80: #{mlp_forward.1} parent=5 // pred_fallthru
        _
    $region6: #{mlp_forward.1} parent=1 // loop_footer
      %s26 = sadd.s32 1, %s22
    $region7: #{mlp_forward.1} parent=1 // loop_footer_branch
      %21 = sbr.rel target = $region3
    $region8: #{mlp_forward.1} parent=1 // loop_exit
      _
    %2898 = vsyncpa [#allocation3], 1
    %s2899 = scalar_lea.sflag [#allocation3], 1
    %2900 = vsyncpa %s2899, 1

// kernel: mlp_forward.1
$region0: #{mlp_forward.1}
  #allocation0 [shape = 'u32[]', space=smem, size = 0x4, offset = 0x4, fixed_abs, tag = 'smem constant byte address 0x4 - core index']
  #allocation1 [shape = 'u32[72,128]{1,0:T(1,128)}', space=vmem, size = 0x9000, scoped, tag = 'internal scratch']
  %s0 = inlined_call_operand.vmem [shape: bf16[16,784], index: 0, kind: input, shape index: {}]
  %s1 = inlined_call_operand.vmem [shape: bf16[784,512], index: 1, kind: input, shape index: {}]
  %s2 = inlined_call_operand.vmem [shape: f32[1,512], index: 2, kind: input, shape index: {}]
  %s3 = inlined_call_operand.vmem [shape: bf16[512,256], index: 3, kind: input, shape index: {}]
  %s4 = inlined_call_operand.vmem [shape: f32[1,256], index: 4, kind: input, shape index: {}]
  %s5 = inlined_call_operand.vmem [shape: bf16[256,128], index: 5, kind: input, shape index: {}]
  %s6 = inlined_call_operand.vmem [shape: f32[1,128], index: 6, kind: input, shape index: {}]
  %s7 = inlined_call_operand.vmem [shape: bf16[128,64], index: 7, kind: input, shape index: {}]
  %s8 = inlined_call_operand.vmem [shape: f32[1,64], index: 8, kind: input, shape index: {}]
  %s9 = inlined_call_operand.vmem [shape: bf16[64,32], index: 9, kind: input, shape index: {}]
  %s10 = inlined_call_operand.vmem [shape: f32[1,32], index: 10, kind: input, shape index: {}]
  %s11 = inlined_call_operand.vmem [shape: bf16[32,128], index: 11, kind: input, shape index: {}]
  %s12 = inlined_call_operand.vmem [shape: f32[1,128], index: 12, kind: input, shape index: {}]
  %s13 = inlined_call_operand.hbm [shape: f32[16,128], index: 13, kind: output, shape index: {}]
  %s14 = sld [smem:[#allocation0]]
  $region85: #{mlp_forward.1} parent=0
    _
  %s16 = ssub.s32 1, %s14
  %s17 = scalar_select 0, %s16, %s14
  $region1: #{mlp_forward.1} parent=0
    #allocation2 [shape = 'u8[8192]{0}', space=vmem, size = 0x2000, scoped, tag = 'output window, operand 0']
    #allocation3 [shape = 's32[2]{0}', space=sflag, size = 0x8, scoped, tag = 'scoped memory for mlp_forward.1']
    %18 = vsyncpa [#allocation3], 0
    %s19 = scalar_lea.sflag [#allocation3], 1
    %20 = vsyncpa %s19, 0
    loop: start=0, step=1, limit=4
    $region2: #{mlp_forward.1} parent=1 // loop_pre_header
      _
    $region3: #{mlp_forward.1} parent=1 // loop_header
      %s22 = sphi 0, %s26
      %p23 = scmp.ge.s32.totalorder %s22, 4
      %s32 = sphi 0, %s34
      %s35 = sphi 0, %s32
      %s36 = sphi 0, %s35
      %s52 = sphi 0, %s36
      %s56 = sphi 0, %s56
      %s58 = sphi 0, %s56
      %s59 = sphi 0, %s58
      %s73 = sphi 0, %s59
      %s77 = sphi 0, %s77
      %s79 = sphi 0, %s77
      %s80 = sphi 0, %s79
      %s94 = sphi 0, %s80
      %s98 = sphi 0, %s98
      %s100 = sphi 0, %s98
      %s101 = sphi 0, %s100
      %s115 = sphi 0, %s101
      %s119 = sphi 0, %s119
      %s121 = sphi 0, %s119
      %s122 = sphi 0, %s121
      %s136 = sphi 0, %s122
      %s140 = sphi 0, %s140
      %s142 = sphi 0, %s140
      %s143 = sphi 0, %s142
      %s157 = sphi 0, %s143
      %s161 = sphi 0, %s161
      %s163 = sphi 0, %s161
      %s164 = sphi 0, %s163
      %s178 = sphi 0, %s164
      %s182 = sphi 0, %s182
      %s184 = sphi 0, %s182
      %s185 = sphi 0, %s184
      %s199 = sphi 0, %s185
      %s203 = sphi 0, %s203
      %s205 = sphi 0, %s203
      %s206 = sphi 0, %s205
      %s220 = sphi 0, %s206
      %s224 = sphi 0, %s224
      %s226 = sphi 0, %s224
      %s227 = sphi 0, %s226
      %s241 = sphi 0, %s227
      %s245 = sphi 0, %s245
      %s247 = sphi 0, %s245
      %s248 = sphi 0, %s247
      %s262 = sphi 0, %s248
      %s266 = sphi 0, %s266
      %s268 = sphi 0, %s266
      %s269 = sphi 0, %s268
      %s283 = sphi 0, %s269
      %s287 = sphi 0, %s287
      %s289 = sphi 0, %s287
      %s290 = sphi 0, %s289
      %s304 = sphi 0, %s290
      %s310 = sphi 0, %s312
      %s313 = sphi 0, %s310
      %s314 = sphi 0, %s313
      %s330 = sphi 0, %s314
    $region4: #{mlp_forward.1} parent=1 // loop_header_branch
      %25 = sbr.rel (%p23) target = $region8
    $region5: #{mlp_forward.1} parent=1 // loop_body
      %s27 = ssub.s32 %s22, 1
      %s28 = ssub.s32 %s22, 2
      %s29 = sadd.s32 %s22, 1
      %s30 = ssub.s32 %s22, %s29
      %p31 = scmp.eq.s32.totalorder %s30, 0
      %s33 = sadd.s32 %s32, 1
      %s34 = scalar_select %p31, %s32, %s33
      %p37 = pneg %p31
      %p38 = scmp.eq.s32.totalorder %s22, 1
      %p39 = por %p37, %p38
      %p40 = scmp.ne.s32.totalorder %s32, %s35
      %p41 = scmp.eq.s32.totalorder %s22, 0
      %p42 = por %p40, %p41
      %p43 = scmp.ne.s32.totalorder %s32, %s35
      %p44 = scmp.eq.s32.totalorder %s27, 1
      %p45 = por %p43, %p44
      %p46 = scmp.ne.s32.totalorder %s35, %s36
      %p47 = scmp.eq.s32.totalorder %s27, 0
      %p48 = por %p46, %p47
      %p49 = scmp.ne.s32.totalorder %s35, %s36
      %p50 = scmp.eq.s32.totalorder %s28, 1
      %p51 = por %p49, %p50
      %p53 = scmp.ne.s32.totalorder %s36, %s52
      %p54 = scmp.eq.s32.totalorder %s28, 0
      %p55 = por %p53, %p54
      %s57 = sadd.s32 %s56, 1
      %p60 = scmp.eq.s32.totalorder %s22, 1
      %p61 = scmp.ne.s32.totalorder %s56, %s58
      %p62 = scmp.eq.s32.totalorder %s22, 0
      %p63 = por %p61, %p62
      %p64 = scmp.ne.s32.totalorder %s56, %s58
      %p65 = scmp.eq.s32.totalorder %s27, 1
      %p66 = por %p64, %p65
      %p67 = scmp.ne.s32.totalorder %s58, %s59
      %p68 = scmp.eq.s32.totalorder %s27, 0
      %p69 = por %p67, %p68
      %p70 = scmp.ne.s32.totalorder %s58, %s59
      %p71 = scmp.eq.s32.totalorder %s28, 1
      %p72 = por %p70, %p71
      %p74 = scmp.ne.s32.totalorder %s59, %s73
      %p75 = scmp.eq.s32.totalorder %s28, 0
      %p76 = por %p74, %p75
      %s78 = sadd.s32 %s77, 1
      %p81 = scmp.eq.s32.totalorder %s22, 1
      %p82 = scmp.ne.s32.totalorder %s77, %s79
      %p83 = scmp.eq.s32.totalorder %s22, 0
      %p84 = por %p82, %p83
      %p85 = scmp.ne.s32.totalorder %s77, %s79
      %p86 = scmp.eq.s32.totalorder %s27, 1
      %p87 = por %p85, %p86
      %p88 = scmp.ne.s32.totalorder %s79, %s80
      %p89 = scmp.eq.s32.totalorder %s27, 0
      %p90 = por %p88, %p89
      %p91 = scmp.ne.s32.totalorder %s79, %s80
      %p92 = scmp.eq.s32.totalorder %s28, 1
      %p93 = por %p91, %p92
      %p95 = scmp.ne.s32.totalorder %s80, %s94
      %p96 = scmp.eq.s32.totalorder %s28, 0
      %p97 = por %p95, %p96
      %s99 = sadd.s32 %s98, 1
      %p102 = scmp.eq.s32.totalorder %s22, 1
      %p103 = scmp.ne.s32.totalorder %s98, %s100
      %p104 = scmp.eq.s32.totalorder %s22, 0
      %p105 = por %p103, %p104
      %p106 = scmp.ne.s32.totalorder %s98, %s100
      %p107 = scmp.eq.s32.totalorder %s27, 1
      %p108 = por %p106, %p107
      %p109 = scmp.ne.s32.totalorder %s100, %s101
      %p110 = scmp.eq.s32.totalorder %s27, 0
      %p111 = por %p109, %p110
      %p112 = scmp.ne.s32.totalorder %s100, %s101
      %p113 = scmp.eq.s32.totalorder %s28, 1
      %p114 = por %p112, %p113
      %p116 = scmp.ne.s32.totalorder %s101, %s115
      %p117 = scmp.eq.s32.totalorder %s28, 0
      %p118 = por %p116, %p117
      %s120 = sadd.s32 %s119, 1
      %p123 = scmp.eq.s32.totalorder %s22, 1
      %p124 = scmp.ne.s32.totalorder %s119, %s121
      %p125 = scmp.eq.s32.totalorder %s22, 0
      %p126 = por %p124, %p125
      %p127 = scmp.ne.s32.totalorder %s119, %s121
      %p128 = scmp.eq.s32.totalorder %s27, 1
      %p129 = por %p127, %p128
      %p130 = scmp.ne.s32.totalorder %s121, %s122
      %p131 = scmp.eq.s32.totalorder %s27, 0
      %p132 = por %p130, %p131
      %p133 = scmp.ne.s32.totalorder %s121, %s122
      %p134 = scmp.eq.s32.totalorder %s28, 1
      %p135 = por %p133, %p134
      %p137 = scmp.ne.s32.totalorder %s122, %s136
      %p138 = scmp.eq.s32.totalorder %s28, 0
      %p139 = por %p137, %p138
      %s141 = sadd.s32 %s140, 1
      %p144 = scmp.eq.s32.totalorder %s22, 1
      %p145 = scmp.ne.s32.totalorder %s140, %s142
      %p146 = scmp.eq.s32.totalorder %s22, 0
      %p147 = por %p145, %p146
      %p148 = scmp.ne.s32.totalorder %s140, %s142
      %p149 = scmp.eq.s32.totalorder %s27, 1
      %p150 = por %p148, %p149
      %p151 = scmp.ne.s32.totalorder %s142, %s143
      %p152 = scmp.eq.s32.totalorder %s27, 0
      %p153 = por %p151, %p152
      %p154 = scmp.ne.s32.totalorder %s142, %s143
      %p155 = scmp.eq.s32.totalorder %s28, 1
      %p156 = por %p154, %p155
      %p158 = scmp.ne.s32.totalorder %s143, %s157
      %p159 = scmp.eq.s32.totalorder %s28, 0
      %p160 = por %p158, %p159
      %s162 = sadd.s32 %s161, 1
      %p165 = scmp.eq.s32.totalorder %s22, 1
      %p166 = scmp.ne.s32.totalorder %s161, %s163
      %p167 = scmp.eq.s32.totalorder %s22, 0
      %p168 = por %p166, %p167
      %p169 = scmp.ne.s32.totalorder %s161, %s163
      %p170 = scmp.eq.s32.totalorder %s27, 1
      %p171 = por %p169, %p170
      %p172 = scmp.ne.s32.totalorder %s163, %s164
      %p173 = scmp.eq.s32.totalorder %s27, 0
      %p174 = por %p172, %p173
      %p175 = scmp.ne.s32.totalorder %s163, %s164
      %p176 = scmp.eq.s32.totalorder %s28, 1
      %p177 = por %p175, %p176
      %p179 = scmp.ne.s32.totalorder %s164, %s178
      %p180 = scmp.eq.s32.totalorder %s28, 0
      %p181 = por %p179, %p180
      %s183 = sadd.s32 %s182, 1
      %p186 = scmp.eq.s32.totalorder %s22, 1
      %p187 = scmp.ne.s32.totalorder %s182, %s184
      %p188 = scmp.eq.s32.totalorder %s22, 0
      %p189 = por %p187, %p188
      %p190 = scmp.ne.s32.totalorder %s182, %s184
      %p191 = scmp.eq.s32.totalorder %s27, 1
      %p192 = por %p190, %p191
      %p193 = scmp.ne.s32.totalorder %s184, %s185
      %p194 = scmp.eq.s32.totalorder %s27, 0
      %p195 = por %p193, %p194
      %p196 = scmp.ne.s32.totalorder %s184, %s185
      %p197 = scmp.eq.s32.totalorder %s28, 1
      %p198 = por %p196, %p197
      %p200 = scmp.ne.s32.totalorder %s185, %s199
      %p201 = scmp.eq.s32.totalorder %s28, 0
      %p202 = por %p200, %p201
      %s204 = sadd.s32 %s203, 1
      %p207 = scmp.eq.s32.totalorder %s22, 1
      %p208 = scmp.ne.s32.totalorder %s203, %s205
      %p209 = scmp.eq.s32.totalorder %s22, 0
      %p210 = por %p208, %p209
      %p211 = scmp.ne.s32.totalorder %s203, %s205
      %p212 = scmp.eq.s32.totalorder %s27, 1
      %p213 = por %p211, %p212
      %p214 = scmp.ne.s32.totalorder %s205, %s206
      %p215 = scmp.eq.s32.totalorder %s27, 0
      %p216 = por %p214, %p215
      %p217 = scmp.ne.s32.totalorder %s205, %s206
      %p218 = scmp.eq.s32.totalorder %s28, 1
      %p219 = por %p217, %p218
      %p221 = scmp.ne.s32.totalorder %s206, %s220
      %p222 = scmp.eq.s32.totalorder %s28, 0
      %p223 = por %p221, %p222
      %s225 = sadd.s32 %s224, 1
      %p228 = scmp.eq.s32.totalorder %s22, 1
      %p229 = scmp.ne.s32.totalorder %s224, %s226
      %p230 = scmp.eq.s32.totalorder %s22, 0
      %p231 = por %p229, %p230
      %p232 = scmp.ne.s32.totalorder %s224, %s226
      %p233 = scmp.eq.s32.totalorder %s27, 1
      %p234 = por %p232, %p233
      %p235 = scmp.ne.s32.totalorder %s226, %s227
      %p236 = scmp.eq.s32.totalorder %s27, 0
      %p237 = por %p235, %p236
      %p238 = scmp.ne.s32.totalorder %s226, %s227
      %p239 = scmp.eq.s32.totalorder %s28, 1
      %p240 = por %p238, %p239
      %p242 = scmp.ne.s32.totalorder %s227, %s241
      %p243 = scmp.eq.s32.totalorder %s28, 0
      %p244 = por %p242, %p243
      %s246 = sadd.s32 %s245, 1
      %p249 = scmp.eq.s32.totalorder %s22, 1
      %p250 = scmp.ne.s32.totalorder %s245, %s247
      %p251 = scmp.eq.s32.totalorder %s22, 0
      %p252 = por %p250, %p251
      %p253 = scmp.ne.s32.totalorder %s245, %s247
      %p254 = scmp.eq.s32.totalorder %s27, 1
      %p255 = por %p253, %p254
      %p256 = scmp.ne.s32.totalorder %s247, %s248
      %p257 = scmp.eq.s32.totalorder %s27, 0
      %p258 = por %p256, %p257
      %p259 = scmp.ne.s32.totalorder %s247, %s248
      %p260 = scmp.eq.s32.totalorder %s28, 1
      %p261 = por %p259, %p260
      %p263 = scmp.ne.s32.totalorder %s248, %s262
      %p264 = scmp.eq.s32.totalorder %s28, 0
      %p265 = por %p263, %p264
      %s267 = sadd.s32 %s266, 1
      %p270 = scmp.eq.s32.totalorder %s22, 1
      %p271 = scmp.ne.s32.totalorder %s266, %s268
      %p272 = scmp.eq.s32.totalorder %s22, 0
      %p273 = por %p271, %p272
      %p274 = scmp.ne.s32.totalorder %s266, %s268
      %p275 = scmp.eq.s32.totalorder %s27, 1
      %p276 = por %p274, %p275
      %p277 = scmp.ne.s32.totalorder %s268, %s269
      %p278 = scmp.eq.s32.totalorder %s27, 0
      %p279 = por %p277, %p278
      %p280 = scmp.ne.s32.totalorder %s268, %s269
      %p281 = scmp.eq.s32.totalorder %s28, 1
      %p282 = por %p280, %p281
      %p284 = scmp.ne.s32.totalorder %s269, %s283
      %p285 = scmp.eq.s32.totalorder %s28, 0
      %p286 = por %p284, %p285
      %s288 = sadd.s32 %s287, 1
      %p291 = scmp.eq.s32.totalorder %s22, 1
      %p292 = scmp.ne.s32.totalorder %s287, %s289
      %p293 = scmp.eq.s32.totalorder %s22, 0
      %p294 = por %p292, %p293
      %p295 = scmp.ne.s32.totalorder %s287, %s289
      %p296 = scmp.eq.s32.totalorder %s27, 1
      %p297 = por %p295, %p296
      %p298 = scmp.ne.s32.totalorder %s289, %s290
      %p299 = scmp.eq.s32.totalorder %s27, 0
      %p300 = por %p298, %p299
      %p301 = scmp.ne.s32.totalorder %s289, %s290
      %p302 = scmp.eq.s32.totalorder %s28, 1
      %p303 = por %p301, %p302
      %p305 = scmp.ne.s32.totalorder %s290, %s304
      %p306 = scmp.eq.s32.totalorder %s28, 0
      %p307 = por %p305, %p306
      %s308 = ssub.s32 %s22, %s29
      %p309 = scmp.eq.s32.totalorder %s308, 0
      %s311 = sadd.s32 %s310, 1
      %s312 = scalar_select %p309, %s310, %s311
      %p315 = pneg %p309
      %p316 = scmp.eq.s32.totalorder %s22, 1
      %p317 = por %p315, %p316
      %p318 = scmp.ne.s32.totalorder %s310, %s313
      %p319 = scmp.eq.s32.totalorder %s22, 0
      %p320 = por %p318, %p319
      %p321 = scmp.ne.s32.totalorder %s310, %s313
      %p322 = scmp.eq.s32.totalorder %s27, 1
      %p323 = por %p321, %p322
      %p324 = scmp.ne.s32.totalorder %s313, %s314
      %p325 = scmp.eq.s32.totalorder %s27, 0
      %p326 = por %p324, %p325
      %p327 = scmp.ne.s32.totalorder %s313, %s314
      %p328 = scmp.eq.s32.totalorder %s28, 1
      %p329 = por %p327, %p328
      %p331 = scmp.ne.s32.totalorder %s314, %s330
      %p332 = scmp.eq.s32.totalorder %s28, 0
      %p333 = por %p331, %p332
      %p334 = scmp.le.s32.totalorder 1, %s22
      %p335 = scmp.lt.s32.totalorder %s22, 3
      %p336 = pnand %p334, %p335
      %p337 = pneg %p336
      // Predicated region
      $region9: #{mlp_forward.1} parent=5 // pred_check
        _
      $region10: #{mlp_forward.1} parent=5 // pred_check_branch
        %339 = sbr.rel (%p336) target = $region12
      $region11: #{mlp_forward.1} parent=5 // pred_region
        %s340 = ssub.s32 %s22, 1
        // Predicated region
        $region13: #{mlp_forward.1} parent=11 // pred_check
          %p341 = pneg %p69
        $region14: #{mlp_forward.1} parent=11 // pred_check_branch
          %343 = sbr.rel (%p341) target = $region16
        $region15: #{mlp_forward.1} parent=11 // pred_region
          _
        $region16: #{mlp_forward.1} parent=11 // pred_fallthru
          _
        // Predicated region
        $region17: #{mlp_forward.1} parent=11 // pred_check
          %p344 = pneg %p90
        $region18: #{mlp_forward.1} parent=11 // pred_check_branch
          %346 = sbr.rel (%p344) target = $region20
        $region19: #{mlp_forward.1} parent=11 // pred_region
          _
        $region20: #{mlp_forward.1} parent=11 // pred_fallthru
          _
        // Predicated region
        $region21: #{mlp_forward.1} parent=11 // pred_check
          %p347 = pneg %p111
        $region22: #{mlp_forward.1} parent=11 // pred_check_branch
          %349 = sbr.rel (%p347) target = $region24
        $region23: #{mlp_forward.1} parent=11 // pred_region
          _
        $region24: #{mlp_forward.1} parent=11 // pred_fallthru
          _
        // Predicated region
        $region25: #{mlp_forward.1} parent=11 // pred_check
          %p350 = pneg %p132
        $region26: #{mlp_forward.1} parent=11 // pred_check_branch
          %352 = sbr.rel (%p350) target = $region28
        $region27: #{mlp_forward.1} parent=11 // pred_region
          _
        $region28: #{mlp_forward.1} parent=11 // pred_fallthru
          _
        // Predicated region
        $region29: #{mlp_forward.1} parent=11 // pred_check
          %p353 = pneg %p153
        $region30: #{mlp_forward.1} parent=11 // pred_check_branch
          %355 = sbr.rel (%p353) target = $region32
        $region31: #{mlp_forward.1} parent=11 // pred_region
          _
        $region32: #{mlp_forward.1} parent=11 // pred_fallthru
          _
        // Predicated region
        $region33: #{mlp_forward.1} parent=11 // pred_check
          %p356 = pneg %p174
        $region34: #{mlp_forward.1} parent=11 // pred_check_branch
          %358 = sbr.rel (%p356) target = $region36
        $region35: #{mlp_forward.1} parent=11 // pred_region
          _
        $region36: #{mlp_forward.1} parent=11 // pred_fallthru
          _
        // Predicated region
        $region37: #{mlp_forward.1} parent=11 // pred_check
          %p359 = pneg %p195
        $region38: #{mlp_forward.1} parent=11 // pred_check_branch
          %361 = sbr.rel (%p359) target = $region40
        $region39: #{mlp_forward.1} parent=11 // pred_region
          _
        $region40: #{mlp_forward.1} parent=11 // pred_fallthru
          _
        // Predicated region
        $region41: #{mlp_forward.1} parent=11 // pred_check
          %p362 = pneg %p216
        $region42: #{mlp_forward.1} parent=11 // pred_check_branch
          %364 = sbr.rel (%p362) target = $region44
        $region43: #{mlp_forward.1} parent=11 // pred_region
          _
        $region44: #{mlp_forward.1} parent=11 // pred_fallthru
          _
        // Predicated region
        $region45: #{mlp_forward.1} parent=11 // pred_check
          %p365 = pneg %p237
        $region46: #{mlp_forward.1} parent=11 // pred_check_branch
          %367 = sbr.rel (%p365) target = $region48
        $region47: #{mlp_forward.1} parent=11 // pred_region
          _
        $region48: #{mlp_forward.1} parent=11 // pred_fallthru
          _
        // Predicated region
        $region49: #{mlp_forward.1} parent=11 // pred_check
          %p368 = pneg %p258
        $region50: #{mlp_forward.1} parent=11 // pred_check_branch
          %370 = sbr.rel (%p368) target = $region52
        $region51: #{mlp_forward.1} parent=11 // pred_region
          _
        $region52: #{mlp_forward.1} parent=11 // pred_fallthru
          _
        // Predicated region
        $region53: #{mlp_forward.1} parent=11 // pred_check
          %p371 = pneg %p279
        $region54: #{mlp_forward.1} parent=11 // pred_check_branch
          %373 = sbr.rel (%p371) target = $region56
        $region55: #{mlp_forward.1} parent=11 // pred_region
          _
        $region56: #{mlp_forward.1} parent=11 // pred_fallthru
          _
        // Predicated region
        $region57: #{mlp_forward.1} parent=11 // pred_check
          %p374 = pneg %p300
        $region58: #{mlp_forward.1} parent=11 // pred_check_branch
          %376 = sbr.rel (%p374) target = $region60
        $region59: #{mlp_forward.1} parent=11 // pred_region
          _
        $region60: #{mlp_forward.1} parent=11 // pred_fallthru
          _
      $region12: #{mlp_forward.1} parent=5 // pred_fallthru
        _
      %p377 = scmp.lt.s32.totalorder %s22, 2
      // Predicated region
      $region61: #{mlp_forward.1} parent=5 // pred_check
        %p378 = pneg %p377
      $region62: #{mlp_forward.1} parent=5 // pred_check_branch
        %380 = sbr.rel (%p378) target = $region64
      $region63: #{mlp_forward.1} parent=5 // pred_region
        // Predicated region
        $region65: #{mlp_forward.1} parent=63 // pred_check
          %p381 = pneg %p42
        $region66: #{mlp_forward.1} parent=63 // pred_check_branch
          %383 = sbr.rel (%p381) target = $region68
        $region67: #{mlp_forward.1} parent=63 // pred_region
          %p384 = scmp.lt.s32.totalorder %s22, 1
          %s385 = scalar_select %p384, %s22, 1
          %s386 = smul.addr %s385, 7
          %s387 = smul.addr %s386, 4
          %s388 = scalar_lea.vmem %s0, %s387
        $region68: #{mlp_forward.1} parent=63 // pred_fallthru
          _
      $region64: #{mlp_forward.1} parent=5 // pred_fallthru
        _
      %p389 = scmp.le.s32.totalorder 1, %s22
      %p390 = scmp.lt.s32.totalorder %s22, 3
      %p391 = pnand %p389, %p390
      %p392 = pneg %p391
      // Predicated region
      $region69: #{mlp_forward.1} parent=5 // pred_check
        _
      $region70: #{mlp_forward.1} parent=5 // pred_check_branch
        %394 = sbr.rel (%p391) target = $region72
      $region71: #{mlp_forward.1} parent=5 // pred_region
        %s395 = ssub.s32 %s22, 1
        %p396 = scmp.lt.s32.totalorder %s27, 1
        %s397 = scalar_select %p396, %s27, 1
        %s398 = smul.addr %s397, 7
        %s399 = smul.addr %s398, 4
        %s400 = scalar_lea.vmem %s0, %s399
        %p401 = pneg %p48
        %p402 = pneg %p45
        %p403 = pneg %p69
        %p404 = pneg %p66
        %p405 = pneg %p90
        %p406 = pneg %p87
        %p407 = pneg %p111
        %p408 = pneg %p108
        %p409 = pneg %p132
        %p410 = pneg %p129
        %p411 = pneg %p153
        %p412 = pneg %p150
        %p413 = pneg %p174
        %p414 = pneg %p171
        %p415 = pneg %p195
        %p416 = pneg %p192
        %p417 = pneg %p216
        %p418 = pneg %p213
        %p419 = pneg %p237
        %p420 = pneg %p234
        %p421 = pneg %p258
        %p422 = pneg %p255
        %p423 = pneg %p279
        %p424 = pneg %p276
        %p425 = pneg %p300
        %p426 = pneg %p297
        %p427 = pneg %p326
        %p428 = pneg %p323
        %s429 = sand.u32 %s313, 1
        %s430 = scalar_lea.sflag [#allocation3], %s429
        %s431 = sand.u32 %s313, 1
        %s432 = smul.addr %s431, 8
        %s433 = scalar_lea.vmem [#allocation2], %s432
        %p434 = scmp.lt.s32.totalorder %s27, 1
        %s435 = scalar_select %p434, %s27, 1
        %s436 = smul.addr %s435, 7
        %s437 = smul.addr %s436, 4
        %s438 = scalar_lea.vmem %s0, %s437
        %v440 = vld [vmem:[%s438] sm:$0xff]
        %v441 = vld [vmem:[%s438 + $0x8] sm:$0xff]
        %v442 = vld [vmem:[%s438 + $0x10] sm:$0xff]
        %v443 = vld [vmem:[%s438 + $0x18] sm:$0xf]
        %v444 = vld [vmem:[%s1] sm:$0xff]
        %v445 = vld [vmem:[%s1 + $0x8] sm:$0xff]
        %v446 = vld [vmem:[%s1 + $0x10] sm:$0xff]
        %v447 = vld [vmem:[%s1 + $0x18] sm:$0xff]
        %v448 = vld [vmem:[%s1 + $0x20] sm:$0xff]
        %v449 = vld [vmem:[%s1 + $0x28] sm:$0xff]
        %v450 = vld [vmem:[%s1 + $0x30] sm:$0xff]
        %v451 = vld [vmem:[%s1 + $0x38] sm:$0xff]
        %v452 = vld [vmem:[%s1 + $0x40] sm:$0xff]
        %v453 = vld [vmem:[%s1 + $0x48] sm:$0xff]
        %v454 = vld [vmem:[%s1 + $0x50] sm:$0xff]
        %v455 = vld [vmem:[%s1 + $0x58] sm:$0xff]
        %v456 = vld [vmem:[%s1 + $0x60] sm:$0xff]
        %v457 = vld [vmem:[%s1 + $0x68] sm:$0xff]
        %v458 = vld [vmem:[%s1 + $0x70] sm:$0xff]
        %v459 = vld [vmem:[%s1 + $0x78] sm:$0xff]
        %v460 = vld [vmem:[%s1 + $0x80] sm:$0xff]
        %v461 = vld [vmem:[%s1 + $0x88] sm:$0xff]
        %v462 = vld [vmem:[%s1 + $0x90] sm:$0xff]
        %v463 = vld [vmem:[%s1 + $0x98] sm:$0xff]
        %v464 = vld [vmem:[%s1 + $0xa0] sm:$0xff]
        %v465 = vld [vmem:[%s1 + $0xa8] sm:$0xff]
        %v466 = vld [vmem:[%s1 + $0xb0] sm:$0xff]
        %v467 = vld [vmem:[%s1 + $0xb8] sm:$0xff]
        %v468 = vld [vmem:[%s1 + $0xc0] sm:$0xff]
        %v469 = vld [vmem:[%s1 + $0xc8] sm:$0xff]
        %v470 = vld [vmem:[%s1 + $0xd0] sm:$0xff]
        %v471 = vld [vmem:[%s1 + $0xd8] sm:$0xff]
        %v472 = vld [vmem:[%s1 + $0xe0] sm:$0xff]
        %v473 = vld [vmem:[%s1 + $0xe8] sm:$0xff]
        %v474 = vld [vmem:[%s1 + $0xf0] sm:$0xff]
        %v475 = vld [vmem:[%s1 + $0xf8] sm:$0xff]
        %v476 = vld [vmem:[%s1 + $0x100] sm:$0xff]
        %v477 = vld [vmem:[%s1 + $0x108] sm:$0xff]
        %v478 = vld [vmem:[%s1 + $0x110] sm:$0xff]
        %v479 = vld [vmem:[%s1 + $0x118] sm:$0xff]
        %v480 = vld [vmem:[%s1 + $0x120] sm:$0xff]
        %v481 = vld [vmem:[%s1 + $0x128] sm:$0xff]
        %v482 = vld [vmem:[%s1 + $0x130] sm:$0xff]
        %v483 = vld [vmem:[%s1 + $0x138] sm:$0xff]
        %v484 = vld [vmem:[%s1 + $0x140] sm:$0xff]
        %v485 = vld [vmem:[%s1 + $0x148] sm:$0xff]
        %v486 = vld [vmem:[%s1 + $0x150] sm:$0xff]
        %v487 = vld [vmem:[%s1 + $0x158] sm:$0xff]
        %v488 = vld [vmem:[%s1 + $0x160] sm:$0xff]
        %v489 = vld [vmem:[%s1 + $0x168] sm:$0xff]
        %v490 = vld [vmem:[%s1 + $0x170] sm:$0xff]
        %v491 = vld [vmem:[%s1 + $0x178] sm:$0xff]
        %v492 = vld [vmem:[%s1 + $0x180] sm:$0xff]
        %v493 = vld [vmem:[%s1 + $0x188] sm:$0xff]
        %v494 = vld [vmem:[%s1 + $0x190] sm:$0xff]
        %v495 = vld [vmem:[%s1 + $0x198] sm:$0xff]
        %v496 = vld [vmem:[%s1 + $0x1a0] sm:$0xff]
        %v497 = vld [vmem:[%s1 + $0x1a8] sm:$0xff]
        %v498 = vld [vmem:[%s1 + $0x1b0] sm:$0xff]
        %v499 = vld [vmem:[%s1 + $0x1b8] sm:$0xff]
        %v500 = vld [vmem:[%s1 + $0x1c0] sm:$0xff]
        %v501 = vld [vmem:[%s1 + $0x1c8] sm:$0xff]
        %v502 = vld [vmem:[%s1 + $0x1d0] sm:$0xff]
        %v503 = vld [vmem:[%s1 + $0x1d8] sm:$0xff]
        %v504 = vld [vmem:[%s1 + $0x1e0] sm:$0xff]
        %v505 = vld [vmem:[%s1 + $0x1e8] sm:$0xff]
        %v506 = vld [vmem:[%s1 + $0x1f0] sm:$0xff]
        %v507 = vld [vmem:[%s1 + $0x1f8] sm:$0xff]
        %v508 = vld [vmem:[%s1 + $0x200] sm:$0xff]
        %v509 = vld [vmem:[%s1 + $0x208] sm:$0xff]
        %v510 = vld [vmem:[%s1 + $0x210] sm:$0xff]
        %v511 = vld [vmem:[%s1 + $0x218] sm:$0xff]
        %v512 = vld [vmem:[%s1 + $0x220] sm:$0xff]
        %v513 = vld [vmem:[%s1 + $0x228] sm:$0xff]
        %v514 = vld [vmem:[%s1 + $0x230] sm:$0xff]
        %v515 = vld [vmem:[%s1 + $0x238] sm:$0xff]
        %v516 = vld [vmem:[%s1 + $0x240] sm:$0xff]
        %v517 = vld [vmem:[%s1 + $0x248] sm:$0xff]
        %v518 = vld [vmem:[%s1 + $0x250] sm:$0xff]
        %v519 = vld [vmem:[%s1 + $0x258] sm:$0xff]
        %v520 = vld [vmem:[%s1 + $0x260] sm:$0xff]
        %v521 = vld [vmem:[%s1 + $0x268] sm:$0xff]
        %v522 = vld [vmem:[%s1 + $0x270] sm:$0xff]
        %v523 = vld [vmem:[%s1 + $0x278] sm:$0xff]
        %v524 = vld [vmem:[%s1 + $0x280] sm:$0xff]
        %v525 = vld [vmem:[%s1 + $0x288] sm:$0xff]
        %v526 = vld [vmem:[%s1 + $0x290] sm:$0xff]
        %v527 = vld [vmem:[%s1 + $0x298] sm:$0xff]
        %v528 = vld [vmem:[%s1 + $0x2a0] sm:$0xff]
        %v529 = vld [vmem:[%s1 + $0x2a8] sm:$0xff]
        %v530 = vld [vmem:[%s1 + $0x2b0] sm:$0xff]
        %v531 = vld [vmem:[%s1 + $0x2b8] sm:$0xff]
        %v532 = vld [vmem:[%s1 + $0x2c0] sm:$0xff]
        %v533 = vld [vmem:[%s1 + $0x2c8] sm:$0xff]
        %v534 = vld [vmem:[%s1 + $0x2d0] sm:$0xff]
        %v535 = vld [vmem:[%s1 + $0x2d8] sm:$0xff]
        %v536 = vld [vmem:[%s1 + $0x2e0] sm:$0xff]
        %v537 = vld [vmem:[%s1 + $0x2e8] sm:$0xff]
        %v538 = vld [vmem:[%s1 + $0x2f0] sm:$0xff]
        %v539 = vld [vmem:[%s1 + $0x2f8] sm:$0xff]
        %v540 = vld [vmem:[%s1 + $0x300] sm:$0xff]
        %v541 = vld [vmem:[%s1 + $0x308] sm:$0xff]
        %v542 = vld [vmem:[%s1 + $0x310] sm:$0xff]
        %v543 = vld [vmem:[%s1 + $0x318] sm:$0xff]
        %v544 = vld [vmem:[%s1 + $0x320] sm:$0xff]
        %v545 = vld [vmem:[%s1 + $0x328] sm:$0xff]
        %v546 = vld [vmem:[%s1 + $0x330] sm:$0xff]
        %v547 = vld [vmem:[%s1 + $0x338] sm:$0xff]
        %v548 = vld [vmem:[%s1 + $0x340] sm:$0xff]
        %v549 = vld [vmem:[%s1 + $0x348] sm:$0xff]
        %v550 = vld [vmem:[%s1 + $0x350] sm:$0xff]
        %v551 = vld [vmem:[%s1 + $0x358] sm:$0xff]
        %v552 = vld [vmem:[%s1 + $0x360] sm:$0xff]
        %v553 = vld [vmem:[%s1 + $0x368] sm:$0xff]
        %v554 = vld [vmem:[%s1 + $0x370] sm:$0xff]
        %v555 = vld [vmem:[%s1 + $0x378] sm:$0xff]
        %v556 = vld [vmem:[%s1 + $0x380] sm:$0xff]
        %v557 = vld [vmem:[%s1 + $0x388] sm:$0xff]
        %v558 = vld [vmem:[%s1 + $0x390] sm:$0xff]
        %v559 = vld [vmem:[%s1 + $0x398] sm:$0xff]
        %v560 = vld [vmem:[%s1 + $0x3a0] sm:$0xff]
        %v561 = vld [vmem:[%s1 + $0x3a8] sm:$0xff]
        %v562 = vld [vmem:[%s1 + $0x3b0] sm:$0xff]
        %v563 = vld [vmem:[%s1 + $0x3b8] sm:$0xff]
        %v564 = vld [vmem:[%s1 + $0x3c0] sm:$0xff]
        %v565 = vld [vmem:[%s1 + $0x3c8] sm:$0xff]
        %v566 = vld [vmem:[%s1 + $0x3d0] sm:$0xff]
        %v567 = vld [vmem:[%s1 + $0x3d8] sm:$0xff]
        %v568 = vld [vmem:[%s1 + $0x3e0] sm:$0xff]
        %v569 = vld [vmem:[%s1 + $0x3e8] sm:$0xff]
        %v570 = vld [vmem:[%s1 + $0x3f0] sm:$0xff]
        %v571 = vld [vmem:[%s1 + $0x3f8] sm:$0xff]
        %v572 = vld [vmem:[%s1 + $0x400] sm:$0xff]
        %v573 = vld [vmem:[%s1 + $0x408] sm:$0xff]
        %v574 = vld [vmem:[%s1 + $0x410] sm:$0xff]
        %v575 = vld [vmem:[%s1 + $0x418] sm:$0xff]
        %v576 = vld [vmem:[%s1 + $0x420] sm:$0xff]
        %v577 = vld [vmem:[%s1 + $0x428] sm:$0xff]
        %v578 = vld [vmem:[%s1 + $0x430] sm:$0xff]
        %v579 = vld [vmem:[%s1 + $0x438] sm:$0xff]
        %v580 = vld [vmem:[%s1 + $0x440] sm:$0xff]
        %v581 = vld [vmem:[%s1 + $0x448] sm:$0xff]
        %v582 = vld [vmem:[%s1 + $0x450] sm:$0xff]
        %v583 = vld [vmem:[%s1 + $0x458] sm:$0xff]
        %v584 = vld [vmem:[%s1 + $0x460] sm:$0xff]
        %v585 = vld [vmem:[%s1 + $0x468] sm:$0xff]
        %v586 = vld [vmem:[%s1 + $0x470] sm:$0xff]
        %v587 = vld [vmem:[%s1 + $0x478] sm:$0xff]
        %v588 = vld [vmem:[%s1 + $0x480] sm:$0xff]
        %v589 = vld [vmem:[%s1 + $0x488] sm:$0xff]
        %v590 = vld [vmem:[%s1 + $0x490] sm:$0xff]
        %v591 = vld [vmem:[%s1 + $0x498] sm:$0xff]
        %v592 = vld [vmem:[%s1 + $0x4a0] sm:$0xff]
        %v593 = vld [vmem:[%s1 + $0x4a8] sm:$0xff]
        %v594 = vld [vmem:[%s1 + $0x4b0] sm:$0xff]
        %v595 = vld [vmem:[%s1 + $0x4b8] sm:$0xff]
        %v596 = vld [vmem:[%s1 + $0x4c0] sm:$0xff]
        %v597 = vld [vmem:[%s1 + $0x4c8] sm:$0xff]
        %v598 = vld [vmem:[%s1 + $0x4d0] sm:$0xff]
        %v599 = vld [vmem:[%s1 + $0x4d8] sm:$0xff]
        %v600 = vld [vmem:[%s1 + $0x4e0] sm:$0xff]
        %v601 = vld [vmem:[%s1 + $0x4e8] sm:$0xff]
        %v602 = vld [vmem:[%s1 + $0x4f0] sm:$0xff]
        %v603 = vld [vmem:[%s1 + $0x4f8] sm:$0xff]
        %v604 = vld [vmem:[%s1 + $0x500] sm:$0xff]
        %v605 = vld [vmem:[%s1 + $0x508] sm:$0xff]
        %v606 = vld [vmem:[%s1 + $0x510] sm:$0xff]
        %v607 = vld [vmem:[%s1 + $0x518] sm:$0xff]
        %v608 = vld [vmem:[%s1 + $0x520] sm:$0xff]
        %v609 = vld [vmem:[%s1 + $0x528] sm:$0xff]
        %v610 = vld [vmem:[%s1 + $0x530] sm:$0xff]
        %v611 = vld [vmem:[%s1 + $0x538] sm:$0xff]
        %v612 = vld [vmem:[%s1 + $0x540] sm:$0xff]
        %v613 = vld [vmem:[%s1 + $0x548] sm:$0xff]
        %v614 = vld [vmem:[%s1 + $0x550] sm:$0xff]
        %v615 = vld [vmem:[%s1 + $0x558] sm:$0xff]
        %v616 = vld [vmem:[%s1 + $0x560] sm:$0xff]
        %v617 = vld [vmem:[%s1 + $0x568] sm:$0xff]
        %v618 = vld [vmem:[%s1 + $0x570] sm:$0xff]
        %v619 = vld [vmem:[%s1 + $0x578] sm:$0xff]
        %v620 = vld [vmem:[%s1 + $0x580] sm:$0xff]
        %v621 = vld [vmem:[%s1 + $0x588] sm:$0xff]
        %v622 = vld [vmem:[%s1 + $0x590] sm:$0xff]
        %v623 = vld [vmem:[%s1 + $0x598] sm:$0xff]
        %v624 = vld [vmem:[%s1 + $0x5a0] sm:$0xff]
        %v625 = vld [vmem:[%s1 + $0x5a8] sm:$0xff]
        %v626 = vld [vmem:[%s1 + $0x5b0] sm:$0xff]
        %v627 = vld [vmem:[%s1 + $0x5b8] sm:$0xff]
        %v628 = vld [vmem:[%s1 + $0x5c0] sm:$0xff]
        %v629 = vld [vmem:[%s1 + $0x5c8] sm:$0xff]
        %v630 = vld [vmem:[%s1 + $0x5d0] sm:$0xff]
        %v631 = vld [vmem:[%s1 + $0x5d8] sm:$0xff]
        %v632 = vld [vmem:[%s1 + $0x5e0] sm:$0xff]
        %v633 = vld [vmem:[%s1 + $0x5e8] sm:$0xff]
        %v634 = vld [vmem:[%s1 + $0x5f0] sm:$0xff]
        %v635 = vld [vmem:[%s1 + $0x5f8] sm:$0xff]
        %v636 = vld [vmem:[%s1 + $0x600] sm:$0xff]
        %v637 = vld [vmem:[%s1 + $0x608] sm:$0xff]
        %v638 = vld [vmem:[%s1 + $0x610] sm:$0xff]
        %v639 = vld [vmem:[%s1 + $0x618] sm:$0xff]
        %v640 = vld [vmem:[%s2] sm:$0xf]
        %v642 = vperm.slane %v640, 0
        %v643 = vperm.slane %v640, 1
        %v644 = vperm.slane %v640, 2
        %v645 = vperm.slane %v640, 3
        %v654 = vunpack.c.l.b16 %v440
        %v655 = vunpack.c.h.b16 %v440
        %v656 = vunpack.c.l.b16 %v441
        %v657 = vunpack.c.h.b16 %v441
        %v658 = vunpack.c.l.b16 %v442
        %v659 = vunpack.c.h.b16 %v442
        %v660 = vunpack.c.l.b16 %v443
        %v661 = vpack.c.b16 %v654, %v654
        %v662 = vpack.c.b16 %v655, %v655
        %v663 = vpack.c.b16 %v656, %v656
        %v664 = vpack.c.b16 %v657, %v657
        %v665 = vpack.c.b16 %v658, %v658
        %v666 = vpack.c.b16 %v659, %v659
        %v667 = vpack.c.b16 %v660, %v660
        %v870 = vunpack.c.l.b16 %v444
        %v871 = vunpack.c.h.b16 %v444
        %v872 = vunpack.c.l.b16 %v445
        %v873 = vunpack.c.h.b16 %v445
        %v874 = vunpack.c.l.b16 %v446
        %v875 = vunpack.c.h.b16 %v446
        %v876 = vunpack.c.l.b16 %v447
        %v877 = vunpack.c.h.b16 %v447
        %v878 = vunpack.c.l.b16 %v448
        %v879 = vunpack.c.h.b16 %v448
        %v880 = vunpack.c.l.b16 %v449
        %v881 = vunpack.c.h.b16 %v449
        %v882 = vunpack.c.l.b16 %v450
        %v883 = vunpack.c.h.b16 %v450
        %v884 = vunpack.c.l.b16 %v451
        %v885 = vunpack.c.h.b16 %v451
        %v886 = vunpack.c.l.b16 %v452
        %v887 = vunpack.c.h.b16 %v452
        %v888 = vunpack.c.l.b16 %v453
        %v889 = vunpack.c.h.b16 %v453
        %v890 = vunpack.c.l.b16 %v454
        %v891 = vunpack.c.h.b16 %v454
        %v892 = vunpack.c.l.b16 %v455
        %v893 = vunpack.c.h.b16 %v455
        %v894 = vunpack.c.l.b16 %v456
        %v895 = vunpack.c.h.b16 %v456
        %v896 = vunpack.c.l.b16 %v457
        %v897 = vunpack.c.h.b16 %v457
        %v898 = vunpack.c.l.b16 %v458
        %v899 = vunpack.c.h.b16 %v458
        %v900 = vunpack.c.l.b16 %v459
        %v901 = vunpack.c.h.b16 %v459
        %v902 = vunpack.c.l.b16 %v460
        %v903 = vunpack.c.h.b16 %v460
        %v904 = vunpack.c.l.b16 %v461
        %v905 = vunpack.c.h.b16 %v461
        %v906 = vunpack.c.l.b16 %v462
        %v907 = vunpack.c.h.b16 %v462
        %v908 = vunpack.c.l.b16 %v463
        %v909 = vunpack.c.h.b16 %v463
        %v910 = vunpack.c.l.b16 %v464
        %v911 = vunpack.c.h.b16 %v464
        %v912 = vunpack.c.l.b16 %v465
        %v913 = vunpack.c.h.b16 %v465
        %v914 = vunpack.c.l.b16 %v466
        %v915 = vunpack.c.h.b16 %v466
        %v916 = vunpack.c.l.b16 %v467
        %v917 = vunpack.c.h.b16 %v467
        %v918 = vunpack.c.l.b16 %v468
        %v919 = vunpack.c.h.b16 %v468
        %v920 = vunpack.c.l.b16 %v469
        %v921 = vunpack.c.h.b16 %v469
        %v922 = vunpack.c.l.b16 %v470
        %v923 = vunpack.c.h.b16 %v470
        %v924 = vunpack.c.l.b16 %v471
        %v925 = vunpack.c.h.b16 %v471
        %v926 = vunpack.c.l.b16 %v472
        %v927 = vunpack.c.h.b16 %v472
        %v928 = vunpack.c.l.b16 %v473
        %v929 = vunpack.c.h.b16 %v473
        %v930 = vunpack.c.l.b16 %v474
        %v931 = vunpack.c.h.b16 %v474
        %v932 = vunpack.c.l.b16 %v475
        %v933 = vunpack.c.h.b16 %v475
        %v934 = vunpack.c.l.b16 %v476
        %v935 = vunpack.c.h.b16 %v476
        %v936 = vunpack.c.l.b16 %v477
        %v937 = vunpack.c.h.b16 %v477
        %v938 = vunpack.c.l.b16 %v478
        %v939 = vunpack.c.h.b16 %v478
        %v940 = vunpack.c.l.b16 %v479
        %v941 = vunpack.c.h.b16 %v479
        %v942 = vunpack.c.l.b16 %v480
        %v943 = vunpack.c.h.b16 %v480
        %v944 = vunpack.c.l.b16 %v481
        %v945 = vunpack.c.h.b16 %v481
        %v946 = vunpack.c.l.b16 %v482
        %v947 = vunpack.c.h.b16 %v482
        %v948 = vunpack.c.l.b16 %v483
        %v949 = vunpack.c.h.b16 %v483
        %v950 = vunpack.c.l.b16 %v484
        %v951 = vunpack.c.h.b16 %v484
        %v952 = vunpack.c.l.b16 %v485
        %v953 = vunpack.c.h.b16 %v485
        %v954 = vunpack.c.l.b16 %v486
        %v955 = vunpack.c.h.b16 %v486
        %v956 = vunpack.c.l.b16 %v487
        %v957 = vunpack.c.h.b16 %v487
        %v958 = vunpack.c.l.b16 %v488
        %v959 = vunpack.c.h.b16 %v488
        %v960 = vunpack.c.l.b16 %v489
        %v961 = vunpack.c.h.b16 %v489
        %v962 = vunpack.c.l.b16 %v490
        %v963 = vunpack.c.h.b16 %v490
        %v964 = vunpack.c.l.b16 %v491
        %v965 = vunpack.c.h.b16 %v491
        %v966 = vunpack.c.l.b16 %v492
        %v967 = vunpack.c.h.b16 %v492
        %v968 = vunpack.c.l.b16 %v493
        %v969 = vunpack.c.h.b16 %v493
        %v970 = vunpack.c.l.b16 %v494
        %v971 = vunpack.c.h.b16 %v494
        %v972 = vunpack.c.l.b16 %v495
        %v973 = vunpack.c.h.b16 %v495
        %v974 = vunpack.c.l.b16 %v496
        %v975 = vunpack.c.h.b16 %v496
        %v976 = vunpack.c.l.b16 %v497
        %v977 = vunpack.c.h.b16 %v497
        %v978 = vunpack.c.l.b16 %v498
        %v979 = vunpack.c.h.b16 %v498
        %v980 = vunpack.c.l.b16 %v499
        %v981 = vunpack.c.h.b16 %v499
        %v982 = vunpack.c.l.b16 %v500
        %v983 = vunpack.c.h.b16 %v500
        %v984 = vunpack.c.l.b16 %v501
        %v985 = vunpack.c.h.b16 %v501
        %v986 = vunpack.c.l.b16 %v502
        %v987 = vunpack.c.h.b16 %v502
        %v988 = vunpack.c.l.b16 %v503
        %v989 = vunpack.c.h.b16 %v503
        %v990 = vunpack.c.l.b16 %v504
        %v991 = vunpack.c.h.b16 %v504
        %v992 = vunpack.c.l.b16 %v505
        %v993 = vunpack.c.h.b16 %v505
        %v994 = vunpack.c.l.b16 %v506
        %v995 = vunpack.c.h.b16 %v506
        %v996 = vunpack.c.l.b16 %v507
        %v997 = vunpack.c.h.b16 %v507
        %v998 = vunpack.c.l.b16 %v508
        %v999 = vunpack.c.h.b16 %v508
        %v1000 = vunpack.c.l.b16 %v509
        %v1001 = vunpack.c.h.b16 %v509
        %v1002 = vunpack.c.l.b16 %v510
        %v1003 = vunpack.c.h.b16 %v510
        %v1004 = vunpack.c.l.b16 %v511
        %v1005 = vunpack.c.h.b16 %v511
        %v1006 = vunpack.c.l.b16 %v512
        %v1007 = vunpack.c.h.b16 %v512
        %v1008 = vunpack.c.l.b16 %v513
        %v1009 = vunpack.c.h.b16 %v513
        %v1010 = vunpack.c.l.b16 %v514
        %v1011 = vunpack.c.h.b16 %v514
        %v1012 = vunpack.c.l.b16 %v515
        %v1013 = vunpack.c.h.b16 %v515
        %v1014 = vunpack.c.l.b16 %v516
        %v1015 = vunpack.c.h.b16 %v516
        %v1016 = vunpack.c.l.b16 %v517
        %v1017 = vunpack.c.h.b16 %v517
        %v1018 = vunpack.c.l.b16 %v518
        %v1019 = vunpack.c.h.b16 %v518
        %v1020 = vunpack.c.l.b16 %v519
        %v1021 = vunpack.c.h.b16 %v519
        %v1022 = vunpack.c.l.b16 %v520
        %v1023 = vunpack.c.h.b16 %v520
        %v1024 = vunpack.c.l.b16 %v521
        %v1025 = vunpack.c.h.b16 %v521
        %v1026 = vunpack.c.l.b16 %v522
        %v1027 = vunpack.c.h.b16 %v522
        %v1028 = vunpack.c.l.b16 %v523
        %v1029 = vunpack.c.h.b16 %v523
        %v1030 = vunpack.c.l.b16 %v524
        %v1031 = vunpack.c.h.b16 %v524
        %v1032 = vunpack.c.l.b16 %v525
        %v1033 = vunpack.c.h.b16 %v525
        %v1034 = vunpack.c.l.b16 %v526
        %v1035 = vunpack.c.h.b16 %v526
        %v1036 = vunpack.c.l.b16 %v527
        %v1037 = vunpack.c.h.b16 %v527
        %v1038 = vunpack.c.l.b16 %v528
        %v1039 = vunpack.c.h.b16 %v528
        %v1040 = vunpack.c.l.b16 %v529
        %v1041 = vunpack.c.h.b16 %v529
        %v1042 = vunpack.c.l.b16 %v530
        %v1043 = vunpack.c.h.b16 %v530
        %v1044 = vunpack.c.l.b16 %v531
        %v1045 = vunpack.c.h.b16 %v531
        %v1046 = vunpack.c.l.b16 %v532
        %v1047 = vunpack.c.h.b16 %v532
        %v1048 = vunpack.c.l.b16 %v533
        %v1049 = vunpack.c.h.b16 %v533
        %v1050 = vunpack.c.l.b16 %v534
        %v1051 = vunpack.c.h.b16 %v534
        %v1052 = vunpack.c.l.b16 %v535
        %v1053 = vunpack.c.h.b16 %v535
        %v1054 = vunpack.c.l.b16 %v536
        %v1055 = vunpack.c.h.b16 %v536
        %v1056 = vunpack.c.l.b16 %v537
        %v1057 = vunpack.c.h.b16 %v537
        %v1058 = vunpack.c.l.b16 %v538
        %v1059 = vunpack.c.h.b16 %v538
        %v1060 = vunpack.c.l.b16 %v539
        %v1061 = vunpack.c.h.b16 %v539
        %v1062 = vunpack.c.l.b16 %v540
        %v1063 = vunpack.c.h.b16 %v540
        %v1064 = vunpack.c.l.b16 %v541
        %v1065 = vunpack.c.h.b16 %v541
        %v1066 = vunpack.c.l.b16 %v542
        %v1067 = vunpack.c.h.b16 %v542
        %v1068 = vunpack.c.l.b16 %v543
        %v1069 = vunpack.c.h.b16 %v543
        %v1070 = vunpack.c.l.b16 %v544
        %v1071 = vunpack.c.h.b16 %v544
        %v1072 = vunpack.c.l.b16 %v545
        %v1073 = vunpack.c.h.b16 %v545
        %v1074 = vunpack.c.l.b16 %v546
        %v1075 = vunpack.c.h.b16 %v546
        %v1076 = vunpack.c.l.b16 %v547
        %v1077 = vunpack.c.h.b16 %v547
        %v1078 = vunpack.c.l.b16 %v548
        %v1079 = vunpack.c.h.b16 %v548
        %v1080 = vunpack.c.l.b16 %v549
        %v1081 = vunpack.c.h.b16 %v549
        %v1082 = vunpack.c.l.b16 %v550
        %v1083 = vunpack.c.h.b16 %v550
        %v1084 = vunpack.c.l.b16 %v551
        %v1085 = vunpack.c.h.b16 %v551
        %v1086 = vunpack.c.l.b16 %v552
        %v1087 = vunpack.c.h.b16 %v552
        %v1088 = vunpack.c.l.b16 %v553
        %v1089 = vunpack.c.h.b16 %v553
        %v1090 = vunpack.c.l.b16 %v554
        %v1091 = vunpack.c.h.b16 %v554
        %v1092 = vunpack.c.l.b16 %v555
        %v1093 = vunpack.c.h.b16 %v555
        %v1094 = vunpack.c.l.b16 %v556
        %v1095 = vunpack.c.h.b16 %v556
        %v1096 = vunpack.c.l.b16 %v557
        %v1097 = vunpack.c.h.b16 %v557
        %v1098 = vunpack.c.l.b16 %v558
        %v1099 = vunpack.c.h.b16 %v558
        %v1100 = vunpack.c.l.b16 %v559
        %v1101 = vunpack.c.h.b16 %v559
        %v1102 = vunpack.c.l.b16 %v560
        %v1103 = vunpack.c.h.b16 %v560
        %v1104 = vunpack.c.l.b16 %v561
        %v1105 = vunpack.c.h.b16 %v561
        %v1106 = vunpack.c.l.b16 %v562
        %v1107 = vunpack.c.h.b16 %v562
        %v1108 = vunpack.c.l.b16 %v563
        %v1109 = vunpack.c.h.b16 %v563
        %v1110 = vunpack.c.l.b16 %v564
        %v1111 = vunpack.c.h.b16 %v564
        %v1112 = vunpack.c.l.b16 %v565
        %v1113 = vunpack.c.h.b16 %v565
        %v1114 = vunpack.c.l.b16 %v566
        %v1115 = vunpack.c.h.b16 %v566
        %v1116 = vunpack.c.l.b16 %v567
        %v1117 = vunpack.c.h.b16 %v567
        %v1118 = vunpack.c.l.b16 %v568
        %v1119 = vunpack.c.h.b16 %v568
        %v1120 = vunpack.c.l.b16 %v569
        %v1121 = vunpack.c.h.b16 %v569
        %v1122 = vunpack.c.l.b16 %v570
        %v1123 = vunpack.c.h.b16 %v570
        %v1124 = vunpack.c.l.b16 %v571
        %v1125 = vunpack.c.h.b16 %v571
        %v1126 = vunpack.c.l.b16 %v572
        %v1127 = vunpack.c.h.b16 %v572
        %v1128 = vunpack.c.l.b16 %v573
        %v1129 = vunpack.c.h.b16 %v573
        %v1130 = vunpack.c.l.b16 %v574
        %v1131 = vunpack.c.h.b16 %v574
        %v1132 = vunpack.c.l.b16 %v575
        %v1133 = vunpack.c.h.b16 %v575
        %v1134 = vunpack.c.l.b16 %v576
        %v1135 = vunpack.c.h.b16 %v576
        %v1136 = vunpack.c.l.b16 %v577
        %v1137 = vunpack.c.h.b16 %v577
        %v1138 = vunpack.c.l.b16 %v578
        %v1139 = vunpack.c.h.b16 %v578
        %v1140 = vunpack.c.l.b16 %v579
        %v1141 = vunpack.c.h.b16 %v579
        %v1142 = vunpack.c.l.b16 %v580
        %v1143 = vunpack.c.h.b16 %v580
        %v1144 = vunpack.c.l.b16 %v581
        %v1145 = vunpack.c.h.b16 %v581
        %v1146 = vunpack.c.l.b16 %v582
        %v1147 = vunpack.c.h.b16 %v582
        %v1148 = vunpack.c.l.b16 %v583
        %v1149 = vunpack.c.h.b16 %v583
        %v1150 = vunpack.c.l.b16 %v584
        %v1151 = vunpack.c.h.b16 %v584
        %v1152 = vunpack.c.l.b16 %v585
        %v1153 = vunpack.c.h.b16 %v585
        %v1154 = vunpack.c.l.b16 %v586
        %v1155 = vunpack.c.h.b16 %v586
        %v1156 = vunpack.c.l.b16 %v587
        %v1157 = vunpack.c.h.b16 %v587
        %v1158 = vunpack.c.l.b16 %v588
        %v1159 = vunpack.c.h.b16 %v588
        %v1160 = vunpack.c.l.b16 %v589
        %v1161 = vunpack.c.h.b16 %v589
        %v1162 = vunpack.c.l.b16 %v590
        %v1163 = vunpack.c.h.b16 %v590
        %v1164 = vunpack.c.l.b16 %v591
        %v1165 = vunpack.c.h.b16 %v591
        %v1166 = vunpack.c.l.b16 %v592
        %v1167 = vunpack.c.h.b16 %v592
        %v1168 = vunpack.c.l.b16 %v593
        %v1169 = vunpack.c.h.b16 %v593
        %v1170 = vunpack.c.l.b16 %v594
        %v1171 = vunpack.c.h.b16 %v594
        %v1172 = vunpack.c.l.b16 %v595
        %v1173 = vunpack.c.h.b16 %v595
        %v1174 = vunpack.c.l.b16 %v596
        %v1175 = vunpack.c.h.b16 %v596
        %v1176 = vunpack.c.l.b16 %v597
        %v1177 = vunpack.c.h.b16 %v597
        %v1178 = vunpack.c.l.b16 %v598
        %v1179 = vunpack.c.h.b16 %v598
        %v1180 = vunpack.c.l.b16 %v599
        %v1181 = vunpack.c.h.b16 %v599
        %v1182 = vunpack.c.l.b16 %v600
        %v1183 = vunpack.c.h.b16 %v600
        %v1184 = vunpack.c.l.b16 %v601
        %v1185 = vunpack.c.h.b16 %v601
        %v1186 = vunpack.c.l.b16 %v602
        %v1187 = vunpack.c.h.b16 %v602
        %v1188 = vunpack.c.l.b16 %v603
        %v1189 = vunpack.c.h.b16 %v603
        %v1190 = vunpack.c.l.b16 %v604
        %v1191 = vunpack.c.h.b16 %v604
        %v1192 = vunpack.c.l.b16 %v605
        %v1193 = vunpack.c.h.b16 %v605
        %v1194 = vunpack.c.l.b16 %v606
        %v1195 = vunpack.c.h.b16 %v606
        %v1196 = vunpack.c.l.b16 %v607
        %v1197 = vunpack.c.h.b16 %v607
        %v1198 = vunpack.c.l.b16 %v608
        %v1199 = vunpack.c.h.b16 %v608
        %v1200 = vunpack.c.l.b16 %v609
        %v1201 = vunpack.c.h.b16 %v609
        %v1202 = vunpack.c.l.b16 %v610
        %v1203 = vunpack.c.h.b16 %v610
        %v1204 = vunpack.c.l.b16 %v611
        %v1205 = vunpack.c.h.b16 %v611
        %v1206 = vunpack.c.l.b16 %v612
        %v1207 = vunpack.c.h.b16 %v612
        %v1208 = vunpack.c.l.b16 %v613
        %v1209 = vunpack.c.h.b16 %v613
        %v1210 = vunpack.c.l.b16 %v614
        %v1211 = vunpack.c.h.b16 %v614
        %v1212 = vunpack.c.l.b16 %v615
        %v1213 = vunpack.c.h.b16 %v615
        %v1214 = vunpack.c.l.b16 %v616
        %v1215 = vunpack.c.h.b16 %v616
        %v1216 = vunpack.c.l.b16 %v617
        %v1217 = vunpack.c.h.b16 %v617
        %v1218 = vunpack.c.l.b16 %v618
        %v1219 = vunpack.c.h.b16 %v618
        %v1220 = vunpack.c.l.b16 %v619
        %v1221 = vunpack.c.h.b16 %v619
        %v1222 = vunpack.c.l.b16 %v620
        %v1223 = vunpack.c.h.b16 %v620
        %v1224 = vunpack.c.l.b16 %v621
        %v1225 = vunpack.c.h.b16 %v621
        %v1226 = vunpack.c.l.b16 %v622
        %v1227 = vunpack.c.h.b16 %v622
        %v1228 = vunpack.c.l.b16 %v623
        %v1229 = vunpack.c.h.b16 %v623
        %v1230 = vunpack.c.l.b16 %v624
        %v1231 = vunpack.c.h.b16 %v624
        %v1232 = vunpack.c.l.b16 %v625
        %v1233 = vunpack.c.h.b16 %v625
        %v1234 = vunpack.c.l.b16 %v626
        %v1235 = vunpack.c.h.b16 %v626
        %v1236 = vunpack.c.l.b16 %v627
        %v1237 = vunpack.c.h.b16 %v627
        %v1238 = vunpack.c.l.b16 %v628
        %v1239 = vunpack.c.h.b16 %v628
        %v1240 = vunpack.c.l.b16 %v629
        %v1241 = vunpack.c.h.b16 %v629
        %v1242 = vunpack.c.l.b16 %v630
        %v1243 = vunpack.c.h.b16 %v630
        %v1244 = vunpack.c.l.b16 %v631
        %v1245 = vunpack.c.h.b16 %v631
        %v1246 = vunpack.c.l.b16 %v632
        %v1247 = vunpack.c.h.b16 %v632
        %v1248 = vunpack.c.l.b16 %v633
        %v1249 = vunpack.c.h.b16 %v633
        %v1250 = vunpack.c.l.b16 %v634
        %v1251 = vunpack.c.h.b16 %v634
        %v1252 = vunpack.c.l.b16 %v635
        %v1253 = vunpack.c.h.b16 %v635
        %v1254 = vunpack.c.l.b16 %v636
        %v1255 = vunpack.c.h.b16 %v636
        %v1256 = vunpack.c.l.b16 %v637
        %v1257 = vunpack.c.h.b16 %v637
        %v1258 = vunpack.c.l.b16 %v638
        %v1259 = vunpack.c.h.b16 %v638
        %v1260 = vunpack.c.l.b16 %v639
        %v1261 = vunpack.c.h.b16 %v639
        %v1262 = vpack.c.b16 %v874, %v870
        %v1263 = vpack.c.b16 %v875, %v871
        %v1264 = vpack.c.b16 %v876, %v872
        %v1265 = vpack.c.b16 %v877, %v873
        %v1266 = vpack.c.b16 %v882, %v878
        %v1267 = vpack.c.b16 %v883, %v879
        %v1268 = vpack.c.b16 %v884, %v880
        %v1269 = vpack.c.b16 %v885, %v881
        %v1270 = vpack.c.b16 %v890, %v886
        %v1271 = vpack.c.b16 %v891, %v887
        %v1272 = vpack.c.b16 %v892, %v888
        %v1273 = vpack.c.b16 %v893, %v889
        %v1274 = vpack.c.b16 %v898, %v894
        %v1275 = vpack.c.b16 %v899, %v895
        %v1276 = vpack.c.b16 %v900, %v896
        %v1277 = vpack.c.b16 %v901, %v897
        %v1278 = vpack.c.b16 %v906, %v902
        %v1279 = vpack.c.b16 %v907, %v903
        %v1280 = vpack.c.b16 %v908, %v904
        %v1281 = vpack.c.b16 %v909, %v905
        %v1282 = vpack.c.b16 %v914, %v910
        %v1283 = vpack.c.b16 %v915, %v911
        %v1284 = vpack.c.b16 %v916, %v912
        %v1285 = vpack.c.b16 %v917, %v913
        %v1286 = vpack.c.b16 %v922, %v918
        %v1287 = vpack.c.b16 %v923, %v919
        %v1288 = vpack.c.b16 %v924, %v920
        %v1289 = vpack.c.b16 %v925, %v921
        %v1290 = vpack.c.b16 %v930, %v926
        %v1291 = vpack.c.b16 %v931, %v927
        %v1292 = vpack.c.b16 %v932, %v928
        %v1293 = vpack.c.b16 %v933, %v929
        %v1294 = vpack.c.b16 %v938, %v934
        %v1295 = vpack.c.b16 %v939, %v935
        %v1296 = vpack.c.b16 %v940, %v936
        %v1297 = vpack.c.b16 %v941, %v937
        %v1298 = vpack.c.b16 %v946, %v942
        %v1299 = vpack.c.b16 %v947, %v943
        %v1300 = vpack.c.b16 %v948, %v944
        %v1301 = vpack.c.b16 %v949, %v945
        %v1302 = vpack.c.b16 %v954, %v950
        %v1303 = vpack.c.b16 %v955, %v951
        %v1304 = vpack.c.b16 %v956, %v952
        %v1305 = vpack.c.b16 %v957, %v953
        %v1306 = vpack.c.b16 %v962, %v958
        %v1307 = vpack.c.b16 %v963, %v959
        %v1308 = vpack.c.b16 %v964, %v960
        %v1309 = vpack.c.b16 %v965, %v961
        %v1310 = vpack.c.b16 %v970, %v966
        %v1311 = vpack.c.b16 %v971, %v967
        %v1312 = vpack.c.b16 %v972, %v968
        %v1313 = vpack.c.b16 %v973, %v969
        %v1314 = vpack.c.b16 %v978, %v974
        %v1315 = vpack.c.b16 %v979, %v975
        %v1316 = vpack.c.b16 %v980, %v976
        %v1317 = vpack.c.b16 %v981, %v977
        %v1318 = vpack.c.b16 %v986, %v982
        %v1319 = vpack.c.b16 %v987, %v983
        %v1320 = vpack.c.b16 %v988, %v984
        %v1321 = vpack.c.b16 %v989, %v985
        %v1322 = vpack.c.b16 %v994, %v990
        %v1323 = vpack.c.b16 %v995, %v991
        %v1324 = vpack.c.b16 %v996, %v992
        %v1325 = vpack.c.b16 %v997, %v993
        %v1326 = vpack.c.b16 %v1002, %v998
        %v1327 = vpack.c.b16 %v1003, %v999
        %v1328 = vpack.c.b16 %v1004, %v1000
        %v1329 = vpack.c.b16 %v1005, %v1001
        %v1330 = vpack.c.b16 %v1010, %v1006
        %v1331 = vpack.c.b16 %v1011, %v1007
        %v1332 = vpack.c.b16 %v1012, %v1008
        %v1333 = vpack.c.b16 %v1013, %v1009
        %v1334 = vpack.c.b16 %v1018, %v1014
        %v1335 = vpack.c.b16 %v1019, %v1015
        %v1336 = vpack.c.b16 %v1020, %v1016
        %v1337 = vpack.c.b16 %v1021, %v1017
        %v1338 = vpack.c.b16 %v1026, %v1022
        %v1339 = vpack.c.b16 %v1027, %v1023
        %v1340 = vpack.c.b16 %v1028, %v1024
        %v1341 = vpack.c.b16 %v1029, %v1025
        %v1342 = vpack.c.b16 %v1034, %v1030
        %v1343 = vpack.c.b16 %v1035, %v1031
        %v1344 = vpack.c.b16 %v1036, %v1032
        %v1345 = vpack.c.b16 %v1037, %v1033
        %v1346 = vpack.c.b16 %v1042, %v1038
        %v1347 = vpack.c.b16 %v1043, %v1039
        %v1348 = vpack.c.b16 %v1044, %v1040
        %v1349 = vpack.c.b16 %v1045, %v1041
        %v1350 = vpack.c.b16 %v1050, %v1046
        %v1351 = vpack.c.b16 %v1051, %v1047
        %v1352 = vpack.c.b16 %v1052, %v1048
        %v1353 = vpack.c.b16 %v1053, %v1049
        %v1354 = vpack.c.b16 %v1058, %v1054
        %v1355 = vpack.c.b16 %v1059, %v1055
        %v1356 = vpack.c.b16 %v1060, %v1056
        %v1357 = vpack.c.b16 %v1061, %v1057
        %v1358 = vpack.c.b16 %v1066, %v1062
        %v1359 = vpack.c.b16 %v1067, %v1063
        %v1360 = vpack.c.b16 %v1068, %v1064
        %v1361 = vpack.c.b16 %v1069, %v1065
        %v1362 = vpack.c.b16 %v1074, %v1070
        %v1363 = vpack.c.b16 %v1075, %v1071
        %v1364 = vpack.c.b16 %v1076, %v1072
        %v1365 = vpack.c.b16 %v1077, %v1073
        %v1366 = vpack.c.b16 %v1082, %v1078
        %v1367 = vpack.c.b16 %v1083, %v1079
        %v1368 = vpack.c.b16 %v1084, %v1080
        %v1369 = vpack.c.b16 %v1085, %v1081
        %v1370 = vpack.c.b16 %v1090, %v1086
        %v1371 = vpack.c.b16 %v1091, %v1087
        %v1372 = vpack.c.b16 %v1092, %v1088
        %v1373 = vpack.c.b16 %v1093, %v1089
        %v1374 = vpack.c.b16 %v1098, %v1094
        %v1375 = vpack.c.b16 %v1099, %v1095
        %v1376 = vpack.c.b16 %v1100, %v1096
        %v1377 = vpack.c.b16 %v1101, %v1097
        %v1378 = vpack.c.b16 %v1106, %v1102
        %v1379 = vpack.c.b16 %v1107, %v1103
        %v1380 = vpack.c.b16 %v1108, %v1104
        %v1381 = vpack.c.b16 %v1109, %v1105
        %v1382 = vpack.c.b16 %v1114, %v1110
        %v1383 = vpack.c.b16 %v1115, %v1111
        %v1384 = vpack.c.b16 %v1116, %v1112
        %v1385 = vpack.c.b16 %v1117, %v1113
        %v1386 = vpack.c.b16 %v1122, %v1118
        %v1387 = vpack.c.b16 %v1123, %v1119
        %v1388 = vpack.c.b16 %v1124, %v1120
        %v1389 = vpack.c.b16 %v1125, %v1121
        %v1390 = vpack.c.b16 %v1130, %v1126
        %v1391 = vpack.c.b16 %v1131, %v1127
        %v1392 = vpack.c.b16 %v1132, %v1128
        %v1393 = vpack.c.b16 %v1133, %v1129
        %v1394 = vpack.c.b16 %v1138, %v1134
        %v1395 = vpack.c.b16 %v1139, %v1135
        %v1396 = vpack.c.b16 %v1140, %v1136
        %v1397 = vpack.c.b16 %v1141, %v1137
        %v1398 = vpack.c.b16 %v1146, %v1142
        %v1399 = vpack.c.b16 %v1147, %v1143
        %v1400 = vpack.c.b16 %v1148, %v1144
        %v1401 = vpack.c.b16 %v1149, %v1145
        %v1402 = vpack.c.b16 %v1154, %v1150
        %v1403 = vpack.c.b16 %v1155, %v1151
        %v1404 = vpack.c.b16 %v1156, %v1152
        %v1405 = vpack.c.b16 %v1157, %v1153
        %v1406 = vpack.c.b16 %v1162, %v1158
        %v1407 = vpack.c.b16 %v1163, %v1159
        %v1408 = vpack.c.b16 %v1164, %v1160
        %v1409 = vpack.c.b16 %v1165, %v1161
        %v1410 = vpack.c.b16 %v1170, %v1166
        %v1411 = vpack.c.b16 %v1171, %v1167
        %v1412 = vpack.c.b16 %v1172, %v1168
        %v1413 = vpack.c.b16 %v1173, %v1169
        %v1414 = vpack.c.b16 %v1178, %v1174
        %v1415 = vpack.c.b16 %v1179, %v1175
        %v1416 = vpack.c.b16 %v1180, %v1176
        %v1417 = vpack.c.b16 %v1181, %v1177
        %v1418 = vpack.c.b16 %v1186, %v1182
        %v1419 = vpack.c.b16 %v1187, %v1183
        %v1420 = vpack.c.b16 %v1188, %v1184
        %v1421 = vpack.c.b16 %v1189, %v1185
        %v1422 = vpack.c.b16 %v1194, %v1190
        %v1423 = vpack.c.b16 %v1195, %v1191
        %v1424 = vpack.c.b16 %v1196, %v1192
        %v1425 = vpack.c.b16 %v1197, %v1193
        %v1426 = vpack.c.b16 %v1202, %v1198
        %v1427 = vpack.c.b16 %v1203, %v1199
        %v1428 = vpack.c.b16 %v1204, %v1200
        %v1429 = vpack.c.b16 %v1205, %v1201
        %v1430 = vpack.c.b16 %v1210, %v1206
        %v1431 = vpack.c.b16 %v1211, %v1207
        %v1432 = vpack.c.b16 %v1212, %v1208
        %v1433 = vpack.c.b16 %v1213, %v1209
        %v1434 = vpack.c.b16 %v1218, %v1214
        %v1435 = vpack.c.b16 %v1219, %v1215
        %v1436 = vpack.c.b16 %v1220, %v1216
        %v1437 = vpack.c.b16 %v1221, %v1217
        %v1438 = vpack.c.b16 %v1226, %v1222
        %v1439 = vpack.c.b16 %v1227, %v1223
        %v1440 = vpack.c.b16 %v1228, %v1224
        %v1441 = vpack.c.b16 %v1229, %v1225
        %v1442 = vpack.c.b16 %v1234, %v1230
        %v1443 = vpack.c.b16 %v1235, %v1231
        %v1444 = vpack.c.b16 %v1236, %v1232
        %v1445 = vpack.c.b16 %v1237, %v1233
        %v1446 = vpack.c.b16 %v1242, %v1238
        %v1447 = vpack.c.b16 %v1243, %v1239
        %v1448 = vpack.c.b16 %v1244, %v1240
        %v1449 = vpack.c.b16 %v1245, %v1241
        %v1450 = vpack.c.b16 %v1250, %v1246
        %v1451 = vpack.c.b16 %v1251, %v1247
        %v1452 = vpack.c.b16 %v1252, %v1248
        %v1453 = vpack.c.b16 %v1253, %v1249
        %v1454 = vpack.c.b16 %v1258, %v1254
        %v1455 = vpack.c.b16 %v1259, %v1255
        %v1456 = vpack.c.b16 %v1260, %v1256
        %v1457 = vpack.c.b16 %v1261, %v1257
        %vm1654 = vcmask 130048
        %v1656 = vsel %vm1654, %v667, 0
        %1658 = vmatpush.bf16.msra.mxu0 %v1290
        %1659 = vmatpush.bf16.msra.mxu0 %v1286
        %1660 = vmatpush.bf16.msra.mxu0 %v1282
        %1661 = vmatpush.bf16.msra.mxu0 %v1278
        %1662 = vmatpush.bf16.msra.mxu0 %v1274
        %1663 = vmatpush.bf16.msra.mxu0 %v1270
        %1664 = vmatpush.bf16.msra.mxu0 %v1266
        %1665 = vmatpush.bf16.msra.mxu0 %v1262
        %1666 = vmatmul.bf16.gmra.mxu0 %v661
        %v1667 = vpop.f32.mrf.mxu0
        %v1668 = vadd.f32 %v642, %v1667
        %v1669 = vpop.f32.mrf.mxu0
        %1670 = vdwg.mxu0
        %1671 = vmatpush.bf16.msra.mxu0 %v1322
        %1672 = vmatpush.bf16.msra.mxu0 %v1318
        %1673 = vmatpush.bf16.msra.mxu0 %v1314
        %1674 = vmatpush.bf16.msra.mxu0 %v1310
        %1675 = vmatpush.bf16.msra.mxu0 %v1306
        %1676 = vmatpush.bf16.msra.mxu0 %v1302
        %1677 = vmatpush.bf16.msra.mxu0 %v1298
        %1678 = vmatpush.bf16.msra.mxu0 %v1294
        %1679 = vmatmul.bf16.gmra.mxu0 %v662
        %v1680 = vpop.f32.mrf.mxu0
        %v1681 = vadd.f32 %v1668, %v1680
        %v1682 = vpop.f32.mrf.mxu0
        %1683 = vdwg.mxu0
        %1684 = vmatpush.bf16.msra.mxu0 %v1354
        %1685 = vmatpush.bf16.msra.mxu0 %v1350
        %1686 = vmatpush.bf16.msra.mxu0 %v1346
        %1687 = vmatpush.bf16.msra.mxu0 %v1342
        %1688 = vmatpush.bf16.msra.mxu0 %v1338
        %1689 = vmatpush.bf16.msra.mxu0 %v1334
        %1690 = vmatpush.bf16.msra.mxu0 %v1330
        %1691 = vmatpush.bf16.msra.mxu0 %v1326
        %1692 = vmatmul.bf16.gmra.mxu0 %v663
        %v1693 = vpop.f32.mrf.mxu0
        %v1694 = vadd.f32 %v1681, %v1693
        %v1695 = vpop.f32.mrf.mxu0
        %1696 = vdwg.mxu0
        %1697 = vmatpush.bf16.msra.mxu0 %v1386
        %1698 = vmatpush.bf16.msra.mxu0 %v1382
        %1699 = vmatpush.bf16.msra.mxu0 %v1378
        %1700 = vmatpush.bf16.msra.mxu0 %v1374
        %1701 = vmatpush.bf16.msra.mxu0 %v1370
        %1702 = vmatpush.bf16.msra.mxu0 %v1366
        %1703 = vmatpush.bf16.msra.mxu0 %v1362
        %1704 = vmatpush.bf16.msra.mxu0 %v1358
        %1705 = vmatmul.bf16.gmra.mxu0 %v664
        %v1706 = vpop.f32.mrf.mxu0
        %v1707 = vadd.f32 %v1694, %v1706
        %v1708 = vpop.f32.mrf.mxu0
        %1709 = vdwg.mxu0
        %1710 = vmatpush.bf16.msra.mxu0 %v1418
        %1711 = vmatpush.bf16.msra.mxu0 %v1414
        %1712 = vmatpush.bf16.msra.mxu0 %v1410
        %1713 = vmatpush.bf16.msra.mxu0 %v1406
        %1714 = vmatpush.bf16.msra.mxu0 %v1402
        %1715 = vmatpush.bf16.msra.mxu0 %v1398
        %1716 = vmatpush.bf16.msra.mxu0 %v1394
        %1717 = vmatpush.bf16.msra.mxu0 %v1390
        %1718 = vmatmul.bf16.gmra.mxu0 %v665
        %v1719 = vpop.f32.mrf.mxu0
        %v1720 = vadd.f32 %v1707, %v1719
        %v1721 = vpop.f32.mrf.mxu0
        %1722 = vdwg.mxu0
        %1723 = vmatpush.bf16.msra.mxu0 %v1450
        %1724 = vmatpush.bf16.msra.mxu0 %v1446
        %1725 = vmatpush.bf16.msra.mxu0 %v1442
        %1726 = vmatpush.bf16.msra.mxu0 %v1438
        %1727 = vmatpush.bf16.msra.mxu0 %v1434
        %1728 = vmatpush.bf16.msra.mxu0 %v1430
        %1729 = vmatpush.bf16.msra.mxu0 %v1426
        %1730 = vmatpush.bf16.msra.mxu0 %v1422
        %1731 = vmatmul.bf16.gmra.mxu0 %v666
        %v1732 = vpop.f32.mrf.mxu0
        %v1733 = vadd.f32 %v1720, %v1732
        %v1734 = vpop.f32.mrf.mxu0
        %1735 = vdwg.mxu0
        %1736 = vmatpush.bf16.msra.mxu0 0
        %1737 = vmatpush.bf16.msra.mxu0 0
        %1738 = vmatpush.bf16.msra.mxu0 0
        %1739 = vmatpush.bf16.msra.mxu0 0
        %1740 = vmatpush.bf16.msra.mxu0 0
        %1741 = vmatpush.bf16.msra.mxu0 0
        %1742 = vmatpush.bf16.msra.mxu0 0
        %1743 = vmatpush.bf16.msra.mxu0 %v1454
        %1744 = vmatmul.bf16.gmra.mxu0 %v1656
        %v1745 = vpop.f32.mrf.mxu0
        %v1746 = vadd.f32 %v1733, %v1745
        %v1747 = vpop.f32.mrf.mxu0
        %1748 = vdwg.mxu0
        %1749 = vmatpush.bf16.msra.mxu0 %v1291
        %1750 = vmatpush.bf16.msra.mxu0 %v1287
        %1751 = vmatpush.bf16.msra.mxu0 %v1283
        %1752 = vmatpush.bf16.msra.mxu0 %v1279
        %1753 = vmatpush.bf16.msra.mxu0 %v1275
        %1754 = vmatpush.bf16.msra.mxu0 %v1271
        %1755 = vmatpush.bf16.msra.mxu0 %v1267
        %1756 = vmatpush.bf16.msra.mxu0 %v1263
        %1757 = vmatmul.bf16.gmra.mxu0 %v661
        %v1758 = vpop.f32.mrf.mxu0
        %v1759 = vadd.f32 %v643, %v1758
        %v1760 = vpop.f32.mrf.mxu0
        %1761 = vdwg.mxu0
        %1762 = vmatpush.bf16.msra.mxu0 %v1323
        %1763 = vmatpush.bf16.msra.mxu0 %v1319
        %1764 = vmatpush.bf16.msra.mxu0 %v1315
        %1765 = vmatpush.bf16.msra.mxu0 %v1311
        %1766 = vmatpush.bf16.msra.mxu0 %v1307
        %1767 = vmatpush.bf16.msra.mxu0 %v1303
        %1768 = vmatpush.bf16.msra.mxu0 %v1299
        %1769 = vmatpush.bf16.msra.mxu0 %v1295
        %1770 = vmatmul.bf16.gmra.mxu0 %v662
        %v1771 = vpop.f32.mrf.mxu0
        %v1772 = vadd.f32 %v1759, %v1771
        %v1773 = vpop.f32.mrf.mxu0
        %1774 = vdwg.mxu0
        %1775 = vmatpush.bf16.msra.mxu0 %v1355
        %1776 = vmatpush.bf16.msra.mxu0 %v1351
        %1777 = vmatpush.bf16.msra.mxu0 %v1347
        %1778 = vmatpush.bf16.msra.mxu0 %v1343
        %1779 = vmatpush.bf16.msra.mxu0 %v1339
        %1780 = vmatpush.bf16.msra.mxu0 %v1335
        %1781 = vmatpush.bf16.msra.mxu0 %v1331
        %1782 = vmatpush.bf16.msra.mxu0 %v1327
        %1783 = vmatmul.bf16.gmra.mxu0 %v663
        %v1784 = vpop.f32.mrf.mxu0
        %v1785 = vadd.f32 %v1772, %v1784
        %v1786 = vpop.f32.mrf.mxu0
        %1787 = vdwg.mxu0
        %1788 = vmatpush.bf16.msra.mxu0 %v1387
        %1789 = vmatpush.bf16.msra.mxu0 %v1383
        %1790 = vmatpush.bf16.msra.mxu0 %v1379
        %1791 = vmatpush.bf16.msra.mxu0 %v1375
        %1792 = vmatpush.bf16.msra.mxu0 %v1371
        %1793 = vmatpush.bf16.msra.mxu0 %v1367
        %1794 = vmatpush.bf16.msra.mxu0 %v1363
        %1795 = vmatpush.bf16.msra.mxu0 %v1359
        %1796 = vmatmul.bf16.gmra.mxu0 %v664
        %v1797 = vpop.f32.mrf.mxu0
        %v1798 = vadd.f32 %v1785, %v1797
        %v1799 = vpop.f32.mrf.mxu0
        %1800 = vdwg.mxu0
        %1801 = vmatpush.bf16.msra.mxu0 %v1419
        %1802 = vmatpush.bf16.msra.mxu0 %v1415
        %1803 = vmatpush.bf16.msra.mxu0 %v1411
        %1804 = vmatpush.bf16.msra.mxu0 %v1407
        %1805 = vmatpush.bf16.msra.mxu0 %v1403
        %1806 = vmatpush.bf16.msra.mxu0 %v1399
        %1807 = vmatpush.bf16.msra.mxu0 %v1395
        %1808 = vmatpush.bf16.msra.mxu0 %v1391
        %1809 = vmatmul.bf16.gmra.mxu0 %v665
        %v1810 = vpop.f32.mrf.mxu0
        %v1811 = vadd.f32 %v1798, %v1810
        %v1812 = vpop.f32.mrf.mxu0
        %1813 = vdwg.mxu0
        %1814 = vmatpush.bf16.msra.mxu0 %v1451
        %1815 = vmatpush.bf16.msra.mxu0 %v1447
        %1816 = vmatpush.bf16.msra.mxu0 %v1443
        %1817 = vmatpush.bf16.msra.mxu0 %v1439
        %1818 = vmatpush.bf16.msra.mxu0 %v1435
        %1819 = vmatpush.bf16.msra.mxu0 %v1431
        %1820 = vmatpush.bf16.msra.mxu0 %v1427
        %1821 = vmatpush.bf16.msra.mxu0 %v1423
        %1822 = vmatmul.bf16.gmra.mxu0 %v666
        %v1823 = vpop.f32.mrf.mxu0
        %v1824 = vadd.f32 %v1811, %v1823
        %v1825 = vpop.f32.mrf.mxu0
        %1826 = vdwg.mxu0
        %1827 = vmatpush.bf16.msra.mxu0 0
        %1828 = vmatpush.bf16.msra.mxu0 0
        %1829 = vmatpush.bf16.msra.mxu0 0
        %1830 = vmatpush.bf16.msra.mxu0 0
        %1831 = vmatpush.bf16.msra.mxu0 0
        %1832 = vmatpush.bf16.msra.mxu0 0
        %1833 = vmatpush.bf16.msra.mxu0 0
        %1834 = vmatpush.bf16.msra.mxu0 %v1455
        %1835 = vmatmul.bf16.gmra.mxu0 %v1656
        %v1836 = vpop.f32.mrf.mxu0
        %v1837 = vadd.f32 %v1824, %v1836
        %v1838 = vpop.f32.mrf.mxu0
        %1839 = vdwg.mxu0
        %1840 = vmatpush.bf16.msra.mxu0 %v1292
        %1841 = vmatpush.bf16.msra.mxu0 %v1288
        %1842 = vmatpush.bf16.msra.mxu0 %v1284
        %1843 = vmatpush.bf16.msra.mxu0 %v1280
        %1844 = vmatpush.bf16.msra.mxu0 %v1276
        %1845 = vmatpush.bf16.msra.mxu0 %v1272
        %1846 = vmatpush.bf16.msra.mxu0 %v1268
        %1847 = vmatpush.bf16.msra.mxu0 %v1264
        %1848 = vmatmul.bf16.gmra.mxu0 %v661
        %v1849 = vpop.f32.mrf.mxu0
        %v1850 = vadd.f32 %v644, %v1849
        %v1851 = vpop.f32.mrf.mxu0
        %1852 = vdwg.mxu0
        %1853 = vmatpush.bf16.msra.mxu0 %v1324
        %1854 = vmatpush.bf16.msra.mxu0 %v1320
        %1855 = vmatpush.bf16.msra.mxu0 %v1316
        %1856 = vmatpush.bf16.msra.mxu0 %v1312
        %1857 = vmatpush.bf16.msra.mxu0 %v1308
        %1858 = vmatpush.bf16.msra.mxu0 %v1304
        %1859 = vmatpush.bf16.msra.mxu0 %v1300
        %1860 = vmatpush.bf16.msra.mxu0 %v1296
        %1861 = vmatmul.bf16.gmra.mxu0 %v662
        %v1862 = vpop.f32.mrf.mxu0
        %v1863 = vadd.f32 %v1850, %v1862
        %v1864 = vpop.f32.mrf.mxu0
        %1865 = vdwg.mxu0
        %1866 = vmatpush.bf16.msra.mxu0 %v1356
        %1867 = vmatpush.bf16.msra.mxu0 %v1352
        %1868 = vmatpush.bf16.msra.mxu0 %v1348
        %1869 = vmatpush.bf16.msra.mxu0 %v1344
        %1870 = vmatpush.bf16.msra.mxu0 %v1340
        %1871 = vmatpush.bf16.msra.mxu0 %v1336
        %1872 = vmatpush.bf16.msra.mxu0 %v1332
        %1873 = vmatpush.bf16.msra.mxu0 %v1328
        %1874 = vmatmul.bf16.gmra.mxu0 %v663
        %v1875 = vpop.f32.mrf.mxu0
        %v1876 = vadd.f32 %v1863, %v1875
        %v1877 = vpop.f32.mrf.mxu0
        %1878 = vdwg.mxu0
        %1879 = vmatpush.bf16.msra.mxu0 %v1388
        %1880 = vmatpush.bf16.msra.mxu0 %v1384
        %1881 = vmatpush.bf16.msra.mxu0 %v1380
        %1882 = vmatpush.bf16.msra.mxu0 %v1376
        %1883 = vmatpush.bf16.msra.mxu0 %v1372
        %1884 = vmatpush.bf16.msra.mxu0 %v1368
        %1885 = vmatpush.bf16.msra.mxu0 %v1364
        %1886 = vmatpush.bf16.msra.mxu0 %v1360
        %1887 = vmatmul.bf16.gmra.mxu0 %v664
        %v1888 = vpop.f32.mrf.mxu0
        %v1889 = vadd.f32 %v1876, %v1888
        %v1890 = vpop.f32.mrf.mxu0
        %1891 = vdwg.mxu0
        %1892 = vmatpush.bf16.msra.mxu0 %v1420
        %1893 = vmatpush.bf16.msra.mxu0 %v1416
        %1894 = vmatpush.bf16.msra.mxu0 %v1412
        %1895 = vmatpush.bf16.msra.mxu0 %v1408
        %1896 = vmatpush.bf16.msra.mxu0 %v1404
        %1897 = vmatpush.bf16.msra.mxu0 %v1400
        %1898 = vmatpush.bf16.msra.mxu0 %v1396
        %1899 = vmatpush.bf16.msra.mxu0 %v1392
        %1900 = vmatmul.bf16.gmra.mxu0 %v665
        %v1901 = vpop.f32.mrf.mxu0
        %v1902 = vadd.f32 %v1889, %v1901
        %v1903 = vpop.f32.mrf.mxu0
        %1904 = vdwg.mxu0
        %1905 = vmatpush.bf16.msra.mxu0 %v1452
        %1906 = vmatpush.bf16.msra.mxu0 %v1448
        %1907 = vmatpush.bf16.msra.mxu0 %v1444
        %1908 = vmatpush.bf16.msra.mxu0 %v1440
        %1909 = vmatpush.bf16.msra.mxu0 %v1436
        %1910 = vmatpush.bf16.msra.mxu0 %v1432
        %1911 = vmatpush.bf16.msra.mxu0 %v1428
        %1912 = vmatpush.bf16.msra.mxu0 %v1424
        %1913 = vmatmul.bf16.gmra.mxu0 %v666
        %v1914 = vpop.f32.mrf.mxu0
        %v1915 = vadd.f32 %v1902, %v1914
        %v1916 = vpop.f32.mrf.mxu0
        %1917 = vdwg.mxu0
        %1918 = vmatpush.bf16.msra.mxu0 0
        %1919 = vmatpush.bf16.msra.mxu0 0
        %1920 = vmatpush.bf16.msra.mxu0 0
        %1921 = vmatpush.bf16.msra.mxu0 0
        %1922 = vmatpush.bf16.msra.mxu0 0
        %1923 = vmatpush.bf16.msra.mxu0 0
        %1924 = vmatpush.bf16.msra.mxu0 0
        %1925 = vmatpush.bf16.msra.mxu0 %v1456
        %1926 = vmatmul.bf16.gmra.mxu0 %v1656
        %v1927 = vpop.f32.mrf.mxu0
        %v1928 = vadd.f32 %v1915, %v1927
        %v1929 = vpop.f32.mrf.mxu0
        %1930 = vdwg.mxu0
        %1931 = vmatpush.bf16.msra.mxu0 %v1293
        %1932 = vmatpush.bf16.msra.mxu0 %v1289
        %1933 = vmatpush.bf16.msra.mxu0 %v1285
        %1934 = vmatpush.bf16.msra.mxu0 %v1281
        %1935 = vmatpush.bf16.msra.mxu0 %v1277
        %1936 = vmatpush.bf16.msra.mxu0 %v1273
        %1937 = vmatpush.bf16.msra.mxu0 %v1269
        %1938 = vmatpush.bf16.msra.mxu0 %v1265
        %1939 = vmatmul.bf16.gmra.mxu0 %v661
        %v1940 = vpop.f32.mrf.mxu0
        %v1941 = vadd.f32 %v645, %v1940
        %v1942 = vpop.f32.mrf.mxu0
        %1943 = vdwg.mxu0
        %1944 = vmatpush.bf16.msra.mxu0 %v1325
        %1945 = vmatpush.bf16.msra.mxu0 %v1321
        %1946 = vmatpush.bf16.msra.mxu0 %v1317
        %1947 = vmatpush.bf16.msra.mxu0 %v1313
        %1948 = vmatpush.bf16.msra.mxu0 %v1309
        %1949 = vmatpush.bf16.msra.mxu0 %v1305
        %1950 = vmatpush.bf16.msra.mxu0 %v1301
        %1951 = vmatpush.bf16.msra.mxu0 %v1297
        %1952 = vmatmul.bf16.gmra.mxu0 %v662
        %v1953 = vpop.f32.mrf.mxu0
        %v1954 = vadd.f32 %v1941, %v1953
        %v1955 = vpop.f32.mrf.mxu0
        %1956 = vdwg.mxu0
        %1957 = vmatpush.bf16.msra.mxu0 %v1357
        %1958 = vmatpush.bf16.msra.mxu0 %v1353
        %1959 = vmatpush.bf16.msra.mxu0 %v1349
        %1960 = vmatpush.bf16.msra.mxu0 %v1345
        %1961 = vmatpush.bf16.msra.mxu0 %v1341
        %1962 = vmatpush.bf16.msra.mxu0 %v1337
        %1963 = vmatpush.bf16.msra.mxu0 %v1333
        %1964 = vmatpush.bf16.msra.mxu0 %v1329
        %1965 = vmatmul.bf16.gmra.mxu0 %v663
        %v1966 = vpop.f32.mrf.mxu0
        %v1967 = vadd.f32 %v1954, %v1966
        %v1968 = vpop.f32.mrf.mxu0
        %1969 = vdwg.mxu0
        %1970 = vmatpush.bf16.msra.mxu0 %v1389
        %1971 = vmatpush.bf16.msra.mxu0 %v1385
        %1972 = vmatpush.bf16.msra.mxu0 %v1381
        %1973 = vmatpush.bf16.msra.mxu0 %v1377
        %1974 = vmatpush.bf16.msra.mxu0 %v1373
        %1975 = vmatpush.bf16.msra.mxu0 %v1369
        %1976 = vmatpush.bf16.msra.mxu0 %v1365
        %1977 = vmatpush.bf16.msra.mxu0 %v1361
        %1978 = vmatmul.bf16.gmra.mxu0 %v664
        %v1979 = vpop.f32.mrf.mxu0
        %v1980 = vadd.f32 %v1967, %v1979
        %v1981 = vpop.f32.mrf.mxu0
        %1982 = vdwg.mxu0
        %1983 = vmatpush.bf16.msra.mxu0 %v1421
        %1984 = vmatpush.bf16.msra.mxu0 %v1417
        %1985 = vmatpush.bf16.msra.mxu0 %v1413
        %1986 = vmatpush.bf16.msra.mxu0 %v1409
        %1987 = vmatpush.bf16.msra.mxu0 %v1405
        %1988 = vmatpush.bf16.msra.mxu0 %v1401
        %1989 = vmatpush.bf16.msra.mxu0 %v1397
        %1990 = vmatpush.bf16.msra.mxu0 %v1393
        %1991 = vmatmul.bf16.gmra.mxu0 %v665
        %v1992 = vpop.f32.mrf.mxu0
        %v1993 = vadd.f32 %v1980, %v1992
        %v1994 = vpop.f32.mrf.mxu0
        %1995 = vdwg.mxu0
        %1996 = vmatpush.bf16.msra.mxu0 %v1453
        %1997 = vmatpush.bf16.msra.mxu0 %v1449
        %1998 = vmatpush.bf16.msra.mxu0 %v1445
        %1999 = vmatpush.bf16.msra.mxu0 %v1441
        %2000 = vmatpush.bf16.msra.mxu0 %v1437
        %2001 = vmatpush.bf16.msra.mxu0 %v1433
        %2002 = vmatpush.bf16.msra.mxu0 %v1429
        %2003 = vmatpush.bf16.msra.mxu0 %v1425
        %2004 = vmatmul.bf16.gmra.mxu0 %v666
        %v2005 = vpop.f32.mrf.mxu0
        %v2006 = vadd.f32 %v1993, %v2005
        %v2007 = vpop.f32.mrf.mxu0
        %2008 = vdwg.mxu0
        %2009 = vmatpush.bf16.msra.mxu0 0
        %2010 = vmatpush.bf16.msra.mxu0 0
        %2011 = vmatpush.bf16.msra.mxu0 0
        %2012 = vmatpush.bf16.msra.mxu0 0
        %2013 = vmatpush.bf16.msra.mxu0 0
        %2014 = vmatpush.bf16.msra.mxu0 0
        %2015 = vmatpush.bf16.msra.mxu0 0
        %2016 = vmatpush.bf16.msra.mxu0 %v1457
        %2017 = vmatmul.bf16.gmra.mxu0 %v1656
        %v2018 = vpop.f32.mrf.mxu0
        %v2019 = vadd.f32 %v2006, %v2018
        %v2020 = vpop.f32.mrf.mxu0
        %2021 = vdwg.mxu0
        %v2022 = vmax.f32 %v1746, 0.0
        %v2023 = vmax.f32 %v1837, 0.0
        %v2024 = vmax.f32 %v1928, 0.0
        %v2025 = vmax.f32 %v2019, 0.0
        %v2026 = vpack.c.bf16 %v2022, %v2022
        %v2027 = vpack.c.bf16 %v2023, %v2023
        %v2028 = vpack.c.bf16 %v2024, %v2024
        %v2029 = vpack.c.bf16 %v2025, %v2025
        %v2030 = vld [vmem:[%s3] sm:$0xff]
        %v2031 = vld [vmem:[%s3 + $0x8] sm:$0xff]
        %v2032 = vld [vmem:[%s3 + $0x10] sm:$0xff]
        %v2033 = vld [vmem:[%s3 + $0x18] sm:$0xff]
        %v2034 = vld [vmem:[%s3 + $0x20] sm:$0xff]
        %v2035 = vld [vmem:[%s3 + $0x28] sm:$0xff]
        %v2036 = vld [vmem:[%s3 + $0x30] sm:$0xff]
        %v2037 = vld [vmem:[%s3 + $0x38] sm:$0xff]
        %v2038 = vld [vmem:[%s3 + $0x40] sm:$0xff]
        %v2039 = vld [vmem:[%s3 + $0x48] sm:$0xff]
        %v2040 = vld [vmem:[%s3 + $0x50] sm:$0xff]
        %v2041 = vld [vmem:[%s3 + $0x58] sm:$0xff]
        %v2042 = vld [vmem:[%s3 + $0x60] sm:$0xff]
        %v2043 = vld [vmem:[%s3 + $0x68] sm:$0xff]
        %v2044 = vld [vmem:[%s3 + $0x70] sm:$0xff]
        %v2045 = vld [vmem:[%s3 + $0x78] sm:$0xff]
        %v2046 = vld [vmem:[%s3 + $0x80] sm:$0xff]
        %v2047 = vld [vmem:[%s3 + $0x88] sm:$0xff]
        %v2048 = vld [vmem:[%s3 + $0x90] sm:$0xff]
        %v2049 = vld [vmem:[%s3 + $0x98] sm:$0xff]
        %v2050 = vld [vmem:[%s3 + $0xa0] sm:$0xff]
        %v2051 = vld [vmem:[%s3 + $0xa8] sm:$0xff]
        %v2052 = vld [vmem:[%s3 + $0xb0] sm:$0xff]
        %v2053 = vld [vmem:[%s3 + $0xb8] sm:$0xff]
        %v2054 = vld [vmem:[%s3 + $0xc0] sm:$0xff]
        %v2055 = vld [vmem:[%s3 + $0xc8] sm:$0xff]
        %v2056 = vld [vmem:[%s3 + $0xd0] sm:$0xff]
        %v2057 = vld [vmem:[%s3 + $0xd8] sm:$0xff]
        %v2058 = vld [vmem:[%s3 + $0xe0] sm:$0xff]
        %v2059 = vld [vmem:[%s3 + $0xe8] sm:$0xff]
        %v2060 = vld [vmem:[%s3 + $0xf0] sm:$0xff]
        %v2061 = vld [vmem:[%s3 + $0xf8] sm:$0xff]
        %v2062 = vld [vmem:[%s3 + $0x100] sm:$0xff]
        %v2063 = vld [vmem:[%s3 + $0x108] sm:$0xff]
        %v2064 = vld [vmem:[%s3 + $0x110] sm:$0xff]
        %v2065 = vld [vmem:[%s3 + $0x118] sm:$0xff]
        %v2066 = vld [vmem:[%s3 + $0x120] sm:$0xff]
        %v2067 = vld [vmem:[%s3 + $0x128] sm:$0xff]
        %v2068 = vld [vmem:[%s3 + $0x130] sm:$0xff]
        %v2069 = vld [vmem:[%s3 + $0x138] sm:$0xff]
        %v2070 = vld [vmem:[%s3 + $0x140] sm:$0xff]
        %v2071 = vld [vmem:[%s3 + $0x148] sm:$0xff]
        %v2072 = vld [vmem:[%s3 + $0x150] sm:$0xff]
        %v2073 = vld [vmem:[%s3 + $0x158] sm:$0xff]
        %v2074 = vld [vmem:[%s3 + $0x160] sm:$0xff]
        %v2075 = vld [vmem:[%s3 + $0x168] sm:$0xff]
        %v2076 = vld [vmem:[%s3 + $0x170] sm:$0xff]
        %v2077 = vld [vmem:[%s3 + $0x178] sm:$0xff]
        %v2078 = vld [vmem:[%s3 + $0x180] sm:$0xff]
        %v2079 = vld [vmem:[%s3 + $0x188] sm:$0xff]
        %v2080 = vld [vmem:[%s3 + $0x190] sm:$0xff]
        %v2081 = vld [vmem:[%s3 + $0x198] sm:$0xff]
        %v2082 = vld [vmem:[%s3 + $0x1a0] sm:$0xff]
        %v2083 = vld [vmem:[%s3 + $0x1a8] sm:$0xff]
        %v2084 = vld [vmem:[%s3 + $0x1b0] sm:$0xff]
        %v2085 = vld [vmem:[%s3 + $0x1b8] sm:$0xff]
        %v2086 = vld [vmem:[%s3 + $0x1c0] sm:$0xff]
        %v2087 = vld [vmem:[%s3 + $0x1c8] sm:$0xff]
        %v2088 = vld [vmem:[%s3 + $0x1d0] sm:$0xff]
        %v2089 = vld [vmem:[%s3 + $0x1d8] sm:$0xff]
        %v2090 = vld [vmem:[%s3 + $0x1e0] sm:$0xff]
        %v2091 = vld [vmem:[%s3 + $0x1e8] sm:$0xff]
        %v2092 = vld [vmem:[%s3 + $0x1f0] sm:$0xff]
        %v2093 = vld [vmem:[%s3 + $0x1f8] sm:$0xff]
        %v2094 = vld [vmem:[%s4] sm:$0x3]
        %v2096 = vperm.slane %v2094, 0
        %v2097 = vperm.slane %v2094, 1
        %v2164 = vunpack.c.l.b16 %v2030
        %v2165 = vunpack.c.h.b16 %v2030
        %v2166 = vunpack.c.l.b16 %v2031
        %v2167 = vunpack.c.h.b16 %v2031
        %v2168 = vunpack.c.l.b16 %v2032
        %v2169 = vunpack.c.h.b16 %v2032
        %v2170 = vunpack.c.l.b16 %v2033
        %v2171 = vunpack.c.h.b16 %v2033
        %v2172 = vunpack.c.l.b16 %v2034
        %v2173 = vunpack.c.h.b16 %v2034
        %v2174 = vunpack.c.l.b16 %v2035
        %v2175 = vunpack.c.h.b16 %v2035
        %v2176 = vunpack.c.l.b16 %v2036
        %v2177 = vunpack.c.h.b16 %v2036
        %v2178 = vunpack.c.l.b16 %v2037
        %v2179 = vunpack.c.h.b16 %v2037
        %v2180 = vunpack.c.l.b16 %v2038
        %v2181 = vunpack.c.h.b16 %v2038
        %v2182 = vunpack.c.l.b16 %v2039
        %v2183 = vunpack.c.h.b16 %v2039
        %v2184 = vunpack.c.l.b16 %v2040
        %v2185 = vunpack.c.h.b16 %v2040
        %v2186 = vunpack.c.l.b16 %v2041
        %v2187 = vunpack.c.h.b16 %v2041
        %v2188 = vunpack.c.l.b16 %v2042
        %v2189 = vunpack.c.h.b16 %v2042
        %v2190 = vunpack.c.l.b16 %v2043
        %v2191 = vunpack.c.h.b16 %v2043
        %v2192 = vunpack.c.l.b16 %v2044
        %v2193 = vunpack.c.h.b16 %v2044
        %v2194 = vunpack.c.l.b16 %v2045
        %v2195 = vunpack.c.h.b16 %v2045
        %v2196 = vunpack.c.l.b16 %v2046
        %v2197 = vunpack.c.h.b16 %v2046
        %v2198 = vunpack.c.l.b16 %v2047
        %v2199 = vunpack.c.h.b16 %v2047
        %v2200 = vunpack.c.l.b16 %v2048
        %v2201 = vunpack.c.h.b16 %v2048
        %v2202 = vunpack.c.l.b16 %v2049
        %v2203 = vunpack.c.h.b16 %v2049
        %v2204 = vunpack.c.l.b16 %v2050
        %v2205 = vunpack.c.h.b16 %v2050
        %v2206 = vunpack.c.l.b16 %v2051
        %v2207 = vunpack.c.h.b16 %v2051
        %v2208 = vunpack.c.l.b16 %v2052
        %v2209 = vunpack.c.h.b16 %v2052
        %v2210 = vunpack.c.l.b16 %v2053
        %v2211 = vunpack.c.h.b16 %v2053
        %v2212 = vunpack.c.l.b16 %v2054
        %v2213 = vunpack.c.h.b16 %v2054
        %v2214 = vunpack.c.l.b16 %v2055
        %v2215 = vunpack.c.h.b16 %v2055
        %v2216 = vunpack.c.l.b16 %v2056
        %v2217 = vunpack.c.h.b16 %v2056
        %v2218 = vunpack.c.l.b16 %v2057
        %v2219 = vunpack.c.h.b16 %v2057
        %v2220 = vunpack.c.l.b16 %v2058
        %v2221 = vunpack.c.h.b16 %v2058
        %v2222 = vunpack.c.l.b16 %v2059
        %v2223 = vunpack.c.h.b16 %v2059
        %v2224 = vunpack.c.l.b16 %v2060
        %v2225 = vunpack.c.h.b16 %v2060
        %v2226 = vunpack.c.l.b16 %v2061
        %v2227 = vunpack.c.h.b16 %v2061
        %v2228 = vunpack.c.l.b16 %v2062
        %v2229 = vunpack.c.h.b16 %v2062
        %v2230 = vunpack.c.l.b16 %v2063
        %v2231 = vunpack.c.h.b16 %v2063
        %v2232 = vunpack.c.l.b16 %v2064
        %v2233 = vunpack.c.h.b16 %v2064
        %v2234 = vunpack.c.l.b16 %v2065
        %v2235 = vunpack.c.h.b16 %v2065
        %v2236 = vunpack.c.l.b16 %v2066
        %v2237 = vunpack.c.h.b16 %v2066
        %v2238 = vunpack.c.l.b16 %v2067
        %v2239 = vunpack.c.h.b16 %v2067
        %v2240 = vunpack.c.l.b16 %v2068
        %v2241 = vunpack.c.h.b16 %v2068
        %v2242 = vunpack.c.l.b16 %v2069
        %v2243 = vunpack.c.h.b16 %v2069
        %v2244 = vunpack.c.l.b16 %v2070
        %v2245 = vunpack.c.h.b16 %v2070
        %v2246 = vunpack.c.l.b16 %v2071
        %v2247 = vunpack.c.h.b16 %v2071
        %v2248 = vunpack.c.l.b16 %v2072
        %v2249 = vunpack.c.h.b16 %v2072
        %v2250 = vunpack.c.l.b16 %v2073
        %v2251 = vunpack.c.h.b16 %v2073
        %v2252 = vunpack.c.l.b16 %v2074
        %v2253 = vunpack.c.h.b16 %v2074
        %v2254 = vunpack.c.l.b16 %v2075
        %v2255 = vunpack.c.h.b16 %v2075
        %v2256 = vunpack.c.l.b16 %v2076
        %v2257 = vunpack.c.h.b16 %v2076
        %v2258 = vunpack.c.l.b16 %v2077
        %v2259 = vunpack.c.h.b16 %v2077
        %v2260 = vunpack.c.l.b16 %v2078
        %v2261 = vunpack.c.h.b16 %v2078
        %v2262 = vunpack.c.l.b16 %v2079
        %v2263 = vunpack.c.h.b16 %v2079
        %v2264 = vunpack.c.l.b16 %v2080
        %v2265 = vunpack.c.h.b16 %v2080
        %v2266 = vunpack.c.l.b16 %v2081
        %v2267 = vunpack.c.h.b16 %v2081
        %v2268 = vunpack.c.l.b16 %v2082
        %v2269 = vunpack.c.h.b16 %v2082
        %v2270 = vunpack.c.l.b16 %v2083
        %v2271 = vunpack.c.h.b16 %v2083
        %v2272 = vunpack.c.l.b16 %v2084
        %v2273 = vunpack.c.h.b16 %v2084
        %v2274 = vunpack.c.l.b16 %v2085
        %v2275 = vunpack.c.h.b16 %v2085
        %v2276 = vunpack.c.l.b16 %v2086
        %v2277 = vunpack.c.h.b16 %v2086
        %v2278 = vunpack.c.l.b16 %v2087
        %v2279 = vunpack.c.h.b16 %v2087
        %v2280 = vunpack.c.l.b16 %v2088
        %v2281 = vunpack.c.h.b16 %v2088
        %v2282 = vunpack.c.l.b16 %v2089
        %v2283 = vunpack.c.h.b16 %v2089
        %v2284 = vunpack.c.l.b16 %v2090
        %v2285 = vunpack.c.h.b16 %v2090
        %v2286 = vunpack.c.l.b16 %v2091
        %v2287 = vunpack.c.h.b16 %v2091
        %v2288 = vunpack.c.l.b16 %v2092
        %v2289 = vunpack.c.h.b16 %v2092
        %v2290 = vunpack.c.l.b16 %v2093
        %v2291 = vunpack.c.h.b16 %v2093
        %v2292 = vpack.c.b16 %v2166, %v2164
        %v2293 = vpack.c.b16 %v2167, %v2165
        %v2294 = vpack.c.b16 %v2170, %v2168
        %v2295 = vpack.c.b16 %v2171, %v2169
        %v2296 = vpack.c.b16 %v2174, %v2172
        %v2297 = vpack.c.b16 %v2175, %v2173
        %v2298 = vpack.c.b16 %v2178, %v2176
        %v2299 = vpack.c.b16 %v2179, %v2177
        %v2300 = vpack.c.b16 %v2182, %v2180
        %v2301 = vpack.c.b16 %v2183, %v2181
        %v2302 = vpack.c.b16 %v2186, %v2184
        %v2303 = vpack.c.b16 %v2187, %v2185
        %v2304 = vpack.c.b16 %v2190, %v2188
        %v2305 = vpack.c.b16 %v2191, %v2189
        %v2306 = vpack.c.b16 %v2194, %v2192
        %v2307 = vpack.c.b16 %v2195, %v2193
        %v2308 = vpack.c.b16 %v2198, %v2196
        %v2309 = vpack.c.b16 %v2199, %v2197
        %v2310 = vpack.c.b16 %v2202, %v2200
        %v2311 = vpack.c.b16 %v2203, %v2201
        %v2312 = vpack.c.b16 %v2206, %v2204
        %v2313 = vpack.c.b16 %v2207, %v2205
        %v2314 = vpack.c.b16 %v2210, %v2208
        %v2315 = vpack.c.b16 %v2211, %v2209
        %v2316 = vpack.c.b16 %v2214, %v2212
        %v2317 = vpack.c.b16 %v2215, %v2213
        %v2318 = vpack.c.b16 %v2218, %v2216
        %v2319 = vpack.c.b16 %v2219, %v2217
        %v2320 = vpack.c.b16 %v2222, %v2220
        %v2321 = vpack.c.b16 %v2223, %v2221
        %v2322 = vpack.c.b16 %v2226, %v2224
        %v2323 = vpack.c.b16 %v2227, %v2225
        %v2324 = vpack.c.b16 %v2230, %v2228
        %v2325 = vpack.c.b16 %v2231, %v2229
        %v2326 = vpack.c.b16 %v2234, %v2232
        %v2327 = vpack.c.b16 %v2235, %v2233
        %v2328 = vpack.c.b16 %v2238, %v2236
        %v2329 = vpack.c.b16 %v2239, %v2237
        %v2330 = vpack.c.b16 %v2242, %v2240
        %v2331 = vpack.c.b16 %v2243, %v2241
        %v2332 = vpack.c.b16 %v2246, %v2244
        %v2333 = vpack.c.b16 %v2247, %v2245
        %v2334 = vpack.c.b16 %v2250, %v2248
        %v2335 = vpack.c.b16 %v2251, %v2249
        %v2336 = vpack.c.b16 %v2254, %v2252
        %v2337 = vpack.c.b16 %v2255, %v2253
        %v2338 = vpack.c.b16 %v2258, %v2256
        %v2339 = vpack.c.b16 %v2259, %v2257
        %v2340 = vpack.c.b16 %v2262, %v2260
        %v2341 = vpack.c.b16 %v2263, %v2261
        %v2342 = vpack.c.b16 %v2266, %v2264
        %v2343 = vpack.c.b16 %v2267, %v2265
        %v2344 = vpack.c.b16 %v2270, %v2268
        %v2345 = vpack.c.b16 %v2271, %v2269
        %v2346 = vpack.c.b16 %v2274, %v2272
        %v2347 = vpack.c.b16 %v2275, %v2273
        %v2348 = vpack.c.b16 %v2278, %v2276
        %v2349 = vpack.c.b16 %v2279, %v2277
        %v2350 = vpack.c.b16 %v2282, %v2280
        %v2351 = vpack.c.b16 %v2283, %v2281
        %v2352 = vpack.c.b16 %v2286, %v2284
        %v2353 = vpack.c.b16 %v2287, %v2285
        %v2354 = vpack.c.b16 %v2290, %v2288
        %v2355 = vpack.c.b16 %v2291, %v2289
        %2420 = vmatpush.bf16.msra.mxu0 %v2306
        %2421 = vmatpush.bf16.msra.mxu0 %v2304
        %2422 = vmatpush.bf16.msra.mxu0 %v2302
        %2423 = vmatpush.bf16.msra.mxu0 %v2300
        %2424 = vmatpush.bf16.msra.mxu0 %v2298
        %2425 = vmatpush.bf16.msra.mxu0 %v2296
        %2426 = vmatpush.bf16.msra.mxu0 %v2294
        %2427 = vmatpush.bf16.msra.mxu0 %v2292
        %2428 = vmatmul.bf16.gmra.mxu0 %v2026
        %v2429 = vpop.f32.mrf.mxu0
        %v2430 = vadd.f32 %v2096, %v2429
        %v2431 = vpop.f32.mrf.mxu0
        %2432 = vdwg.mxu0
        %2433 = vmatpush.bf16.msra.mxu0 %v2322
        %2434 = vmatpush.bf16.msra.mxu0 %v2320
        %2435 = vmatpush.bf16.msra.mxu0 %v2318
        %2436 = vmatpush.bf16.msra.mxu0 %v2316
        %2437 = vmatpush.bf16.msra.mxu0 %v2314
        %2438 = vmatpush.bf16.msra.mxu0 %v2312
        %2439 = vmatpush.bf16.msra.mxu0 %v2310
        %2440 = vmatpush.bf16.msra.mxu0 %v2308
        %2441 = vmatmul.bf16.gmra.mxu0 %v2027
        %v2442 = vpop.f32.mrf.mxu0
        %v2443 = vadd.f32 %v2430, %v2442
        %v2444 = vpop.f32.mrf.mxu0
        %2445 = vdwg.mxu0
        %2446 = vmatpush.bf16.msra.mxu0 %v2338
        %2447 = vmatpush.bf16.msra.mxu0 %v2336
        %2448 = vmatpush.bf16.msra.mxu0 %v2334
        %2449 = vmatpush.bf16.msra.mxu0 %v2332
        %2450 = vmatpush.bf16.msra.mxu0 %v2330
        %2451 = vmatpush.bf16.msra.mxu0 %v2328
        %2452 = vmatpush.bf16.msra.mxu0 %v2326
        %2453 = vmatpush.bf16.msra.mxu0 %v2324
        %2454 = vmatmul.bf16.gmra.mxu0 %v2028
        %v2455 = vpop.f32.mrf.mxu0
        %v2456 = vadd.f32 %v2443, %v2455
        %v2457 = vpop.f32.mrf.mxu0
        %2458 = vdwg.mxu0
        %2459 = vmatpush.bf16.msra.mxu0 %v2354
        %2460 = vmatpush.bf16.msra.mxu0 %v2352
        %2461 = vmatpush.bf16.msra.mxu0 %v2350
        %2462 = vmatpush.bf16.msra.mxu0 %v2348
        %2463 = vmatpush.bf16.msra.mxu0 %v2346
        %2464 = vmatpush.bf16.msra.mxu0 %v2344
        %2465 = vmatpush.bf16.msra.mxu0 %v2342
        %2466 = vmatpush.bf16.msra.mxu0 %v2340
        %2467 = vmatmul.bf16.gmra.mxu0 %v2029
        %v2468 = vpop.f32.mrf.mxu0
        %v2469 = vadd.f32 %v2456, %v2468
        %v2470 = vpop.f32.mrf.mxu0
        %2471 = vdwg.mxu0
        %2472 = vmatpush.bf16.msra.mxu0 %v2307
        %2473 = vmatpush.bf16.msra.mxu0 %v2305
        %2474 = vmatpush.bf16.msra.mxu0 %v2303
        %2475 = vmatpush.bf16.msra.mxu0 %v2301
        %2476 = vmatpush.bf16.msra.mxu0 %v2299
        %2477 = vmatpush.bf16.msra.mxu0 %v2297
        %2478 = vmatpush.bf16.msra.mxu0 %v2295
        %2479 = vmatpush.bf16.msra.mxu0 %v2293
        %2480 = vmatmul.bf16.gmra.mxu0 %v2026
        %v2481 = vpop.f32.mrf.mxu0
        %v2482 = vadd.f32 %v2097, %v2481
        %v2483 = vpop.f32.mrf.mxu0
        %2484 = vdwg.mxu0
        %2485 = vmatpush.bf16.msra.mxu0 %v2323
        %2486 = vmatpush.bf16.msra.mxu0 %v2321
        %2487 = vmatpush.bf16.msra.mxu0 %v2319
        %2488 = vmatpush.bf16.msra.mxu0 %v2317
        %2489 = vmatpush.bf16.msra.mxu0 %v2315
        %2490 = vmatpush.bf16.msra.mxu0 %v2313
        %2491 = vmatpush.bf16.msra.mxu0 %v2311
        %2492 = vmatpush.bf16.msra.mxu0 %v2309
        %2493 = vmatmul.bf16.gmra.mxu0 %v2027
        %v2494 = vpop.f32.mrf.mxu0
        %v2495 = vadd.f32 %v2482, %v2494
        %v2496 = vpop.f32.mrf.mxu0
        %2497 = vdwg.mxu0
        %2498 = vmatpush.bf16.msra.mxu0 %v2339
        %2499 = vmatpush.bf16.msra.mxu0 %v2337
        %2500 = vmatpush.bf16.msra.mxu0 %v2335
        %2501 = vmatpush.bf16.msra.mxu0 %v2333
        %2502 = vmatpush.bf16.msra.mxu0 %v2331
        %2503 = vmatpush.bf16.msra.mxu0 %v2329
        %2504 = vmatpush.bf16.msra.mxu0 %v2327
        %2505 = vmatpush.bf16.msra.mxu0 %v2325
        %2506 = vmatmul.bf16.gmra.mxu0 %v2028
        %v2507 = vpop.f32.mrf.mxu0
        %v2508 = vadd.f32 %v2495, %v2507
        %v2509 = vpop.f32.mrf.mxu0
        %2510 = vdwg.mxu0
        %2511 = vmatpush.bf16.msra.mxu0 %v2355
        %2512 = vmatpush.bf16.msra.mxu0 %v2353
        %2513 = vmatpush.bf16.msra.mxu0 %v2351
        %2514 = vmatpush.bf16.msra.mxu0 %v2349
        %2515 = vmatpush.bf16.msra.mxu0 %v2347
        %2516 = vmatpush.bf16.msra.mxu0 %v2345
        %2517 = vmatpush.bf16.msra.mxu0 %v2343
        %2518 = vmatpush.bf16.msra.mxu0 %v2341
        %2519 = vmatmul.bf16.gmra.mxu0 %v2029
        %v2520 = vpop.f32.mrf.mxu0
        %v2521 = vadd.f32 %v2508, %v2520
        %v2522 = vpop.f32.mrf.mxu0
        %2523 = vdwg.mxu0
        %v2524 = vmax.f32 %v2469, 0.0
        %v2525 = vmax.f32 %v2521, 0.0
        %v2526 = vpack.c.bf16 %v2524, %v2524
        %v2527 = vpack.c.bf16 %v2525, %v2525
        %v2528 = vld [vmem:[%s5] sm:$0xf]
        %v2529 = vld [vmem:[%s5 + $0x4] sm:$0xf]
        %v2530 = vld [vmem:[%s5 + $0x8] sm:$0xf]
        %v2531 = vld [vmem:[%s5 + $0xc] sm:$0xf]
        %v2532 = vld [vmem:[%s5 + $0x10] sm:$0xf]
        %v2533 = vld [vmem:[%s5 + $0x14] sm:$0xf]
        %v2534 = vld [vmem:[%s5 + $0x18] sm:$0xf]
        %v2535 = vld [vmem:[%s5 + $0x1c] sm:$0xf]
        %v2536 = vld [vmem:[%s5 + $0x20] sm:$0xf]
        %v2537 = vld [vmem:[%s5 + $0x24] sm:$0xf]
        %v2538 = vld [vmem:[%s5 + $0x28] sm:$0xf]
        %v2539 = vld [vmem:[%s5 + $0x2c] sm:$0xf]
        %v2540 = vld [vmem:[%s5 + $0x30] sm:$0xf]
        %v2541 = vld [vmem:[%s5 + $0x34] sm:$0xf]
        %v2542 = vld [vmem:[%s5 + $0x38] sm:$0xf]
        %v2543 = vld [vmem:[%s5 + $0x3c] sm:$0xf]
        %v2544 = vld [vmem:[%s5 + $0x40] sm:$0xf]
        %v2545 = vld [vmem:[%s5 + $0x44] sm:$0xf]
        %v2546 = vld [vmem:[%s5 + $0x48] sm:$0xf]
        %v2547 = vld [vmem:[%s5 + $0x4c] sm:$0xf]
        %v2548 = vld [vmem:[%s5 + $0x50] sm:$0xf]
        %v2549 = vld [vmem:[%s5 + $0x54] sm:$0xf]
        %v2550 = vld [vmem:[%s5 + $0x58] sm:$0xf]
        %v2551 = vld [vmem:[%s5 + $0x5c] sm:$0xf]
        %v2552 = vld [vmem:[%s5 + $0x60] sm:$0xf]
        %v2553 = vld [vmem:[%s5 + $0x64] sm:$0xf]
        %v2554 = vld [vmem:[%s5 + $0x68] sm:$0xf]
        %v2555 = vld [vmem:[%s5 + $0x6c] sm:$0xf]
        %v2556 = vld [vmem:[%s5 + $0x70] sm:$0xf]
        %v2557 = vld [vmem:[%s5 + $0x74] sm:$0xf]
        %v2558 = vld [vmem:[%s5 + $0x78] sm:$0xf]
        %v2559 = vld [vmem:[%s5 + $0x7c] sm:$0xf]
        %v2560 = vld [vmem:[%s6] sm:$0x1]
        %v2562 = vperm.slane %v2560, 0
        %v2596 = vunpack.c.l.b16 %v2528
        %v2597 = vunpack.c.l.b16 %v2529
        %v2598 = vunpack.c.l.b16 %v2530
        %v2599 = vunpack.c.l.b16 %v2531
        %v2600 = vunpack.c.l.b16 %v2532
        %v2601 = vunpack.c.l.b16 %v2533
        %v2602 = vunpack.c.l.b16 %v2534
        %v2603 = vunpack.c.l.b16 %v2535
        %v2604 = vunpack.c.l.b16 %v2536
        %v2605 = vunpack.c.l.b16 %v2537
        %v2606 = vunpack.c.l.b16 %v2538
        %v2607 = vunpack.c.l.b16 %v2539
        %v2608 = vunpack.c.l.b16 %v2540
        %v2609 = vunpack.c.l.b16 %v2541
        %v2610 = vunpack.c.l.b16 %v2542
        %v2611 = vunpack.c.l.b16 %v2543
        %v2612 = vunpack.c.l.b16 %v2544
        %v2613 = vunpack.c.l.b16 %v2545
        %v2614 = vunpack.c.l.b16 %v2546
        %v2615 = vunpack.c.l.b16 %v2547
        %v2616 = vunpack.c.l.b16 %v2548
        %v2617 = vunpack.c.l.b16 %v2549
        %v2618 = vunpack.c.l.b16 %v2550
        %v2619 = vunpack.c.l.b16 %v2551
        %v2620 = vunpack.c.l.b16 %v2552
        %v2621 = vunpack.c.l.b16 %v2553
        %v2622 = vunpack.c.l.b16 %v2554
        %v2623 = vunpack.c.l.b16 %v2555
        %v2624 = vunpack.c.l.b16 %v2556
        %v2625 = vunpack.c.l.b16 %v2557
        %v2626 = vunpack.c.l.b16 %v2558
        %v2627 = vunpack.c.l.b16 %v2559
        %v2628 = vpack.c.b16 %v2597, %v2596
        %v2629 = vpack.c.b16 %v2599, %v2598
        %v2630 = vpack.c.b16 %v2601, %v2600
        %v2631 = vpack.c.b16 %v2603, %v2602
        %v2632 = vpack.c.b16 %v2605, %v2604
        %v2633 = vpack.c.b16 %v2607, %v2606
        %v2634 = vpack.c.b16 %v2609, %v2608
        %v2635 = vpack.c.b16 %v2611, %v2610
        %v2636 = vpack.c.b16 %v2613, %v2612
        %v2637 = vpack.c.b16 %v2615, %v2614
        %v2638 = vpack.c.b16 %v2617, %v2616
        %v2639 = vpack.c.b16 %v2619, %v2618
        %v2640 = vpack.c.b16 %v2621, %v2620
        %v2641 = vpack.c.b16 %v2623, %v2622
        %v2642 = vpack.c.b16 %v2625, %v2624
        %v2643 = vpack.c.b16 %v2627, %v2626
        %2660 = vmatpush.bf16.msra.mxu0 %v2635
        %2661 = vmatpush.bf16.msra.mxu0 %v2634
        %2662 = vmatpush.bf16.msra.mxu0 %v2633
        %2663 = vmatpush.bf16.msra.mxu0 %v2632
        %2664 = vmatpush.bf16.msra.mxu0 %v2631
        %2665 = vmatpush.bf16.msra.mxu0 %v2630
        %2666 = vmatpush.bf16.msra.mxu0 %v2629
        %2667 = vmatpush.bf16.msra.mxu0 %v2628
        %2668 = vmatmul.bf16.gmra.mxu0 %v2526
        %v2669 = vpop.f32.mrf.mxu0
        %v2670 = vadd.f32 %v2562, %v2669
        %v2671 = vpop.f32.mrf.mxu0
        %2672 = vdwg.mxu0
        %2673 = vmatpush.bf16.msra.mxu0 %v2643
        %2674 = vmatpush.bf16.msra.mxu0 %v2642
        %2675 = vmatpush.bf16.msra.mxu0 %v2641
        %2676 = vmatpush.bf16.msra.mxu0 %v2640
        %2677 = vmatpush.bf16.msra.mxu0 %v2639
        %2678 = vmatpush.bf16.msra.mxu0 %v2638
        %2679 = vmatpush.bf16.msra.mxu0 %v2637
        %2680 = vmatpush.bf16.msra.mxu0 %v2636
        %2681 = vmatmul.bf16.gmra.mxu0 %v2527
        %v2682 = vpop.f32.mrf.mxu0
        %v2683 = vadd.f32 %v2670, %v2682
        %v2684 = vpop.f32.mrf.mxu0
        %2685 = vdwg.mxu0
        %v2686 = vmax.f32 %v2683, 0.0
        %v2687 = vpack.c.bf16 %v2686, %v2686
        %v2688 = vld [vmem:[%s7] sm:$0xf]
        %v2689 = vld [vmem:[%s7 + $0x4] sm:$0xf]
        %v2690 = vld [vmem:[%s7 + $0x8] sm:$0xf]
        %v2691 = vld [vmem:[%s7 + $0xc] sm:$0xf]
        %v2692 = vld [vmem:[%s7 + $0x10] sm:$0xf]
        %v2693 = vld [vmem:[%s7 + $0x14] sm:$0xf]
        %v2694 = vld [vmem:[%s7 + $0x18] sm:$0xf]
        %v2695 = vld [vmem:[%s7 + $0x1c] sm:$0xf]
        %v2696 = vld [vmem:[%s7 + $0x20] sm:$0xf]
        %v2697 = vld [vmem:[%s7 + $0x24] sm:$0xf]
        %v2698 = vld [vmem:[%s7 + $0x28] sm:$0xf]
        %v2699 = vld [vmem:[%s7 + $0x2c] sm:$0xf]
        %v2700 = vld [vmem:[%s7 + $0x30] sm:$0xf]
        %v2701 = vld [vmem:[%s7 + $0x34] sm:$0xf]
        %v2702 = vld [vmem:[%s7 + $0x38] sm:$0xf]
        %v2703 = vld [vmem:[%s7 + $0x3c] sm:$0xf]
        %v2704 = vld [vmem:[%s8] sm:$0x1]
        %v2706 = vperm.slane %v2704, 0
        %v2724 = vunpack.c.l.b16 %v2688
        %v2725 = vunpack.c.l.b16 %v2689
        %v2726 = vunpack.c.l.b16 %v2690
        %v2727 = vunpack.c.l.b16 %v2691
        %v2728 = vunpack.c.l.b16 %v2692
        %v2729 = vunpack.c.l.b16 %v2693
        %v2730 = vunpack.c.l.b16 %v2694
        %v2731 = vunpack.c.l.b16 %v2695
        %v2732 = vunpack.c.l.b16 %v2696
        %v2733 = vunpack.c.l.b16 %v2697
        %v2734 = vunpack.c.l.b16 %v2698
        %v2735 = vunpack.c.l.b16 %v2699
        %v2736 = vunpack.c.l.b16 %v2700
        %v2737 = vunpack.c.l.b16 %v2701
        %v2738 = vunpack.c.l.b16 %v2702
        %v2739 = vunpack.c.l.b16 %v2703
        %v2740 = vpack.c.b16 %v2725, %v2724
        %v2741 = vpack.c.b16 %v2727, %v2726
        %v2742 = vpack.c.b16 %v2729, %v2728
        %v2743 = vpack.c.b16 %v2731, %v2730
        %v2744 = vpack.c.b16 %v2733, %v2732
        %v2745 = vpack.c.b16 %v2735, %v2734
        %v2746 = vpack.c.b16 %v2737, %v2736
        %v2747 = vpack.c.b16 %v2739, %v2738
        %2756 = vmatpush.bf16.msra.mxu0 %v2747
        %2757 = vmatpush.bf16.msra.mxu0 %v2746
        %2758 = vmatpush.bf16.msra.mxu0 %v2745
        %2759 = vmatpush.bf16.msra.mxu0 %v2744
        %2760 = vmatpush.bf16.msra.mxu0 %v2743
        %2761 = vmatpush.bf16.msra.mxu0 %v2742
        %2762 = vmatpush.bf16.msra.mxu0 %v2741
        %2763 = vmatpush.bf16.msra.mxu0 %v2740
        %2764 = vmatmul.bf16.gmra.mxu0 %v2687
        %v2765 = vpop.f32.mrf.mxu0
        %v2766 = vadd.f32 %v2706, %v2765
        %v2767 = vpop.f32.mrf.mxu0
        %2768 = vdwg.mxu0
        %v2769 = vmax.f32 %v2766, 0.0
        %v2770 = vpack.c.bf16 %v2769, %v2769
        %v2771 = vld [vmem:[%s9] sm:$0xf]
        %v2772 = vld [vmem:[%s9 + $0x4] sm:$0xf]
        %v2773 = vld [vmem:[%s9 + $0x8] sm:$0xf]
        %v2774 = vld [vmem:[%s9 + $0xc] sm:$0xf]
        %v2775 = vld [vmem:[%s9 + $0x10] sm:$0xf]
        %v2776 = vld [vmem:[%s9 + $0x14] sm:$0xf]
        %v2777 = vld [vmem:[%s9 + $0x18] sm:$0xf]
        %v2778 = vld [vmem:[%s9 + $0x1c] sm:$0xf]
        %v2779 = vld [vmem:[%s10] sm:$0x1]
        %v2781 = vperm.slane %v2779, 0
        %v2791 = vunpack.c.l.b16 %v2771
        %v2792 = vunpack.c.l.b16 %v2772
        %v2793 = vunpack.c.l.b16 %v2773
        %v2794 = vunpack.c.l.b16 %v2774
        %v2795 = vunpack.c.l.b16 %v2775
        %v2796 = vunpack.c.l.b16 %v2776
        %v2797 = vunpack.c.l.b16 %v2777
        %v2798 = vunpack.c.l.b16 %v2778
        %v2799 = vpack.c.b16 %v2792, %v2791
        %v2800 = vpack.c.b16 %v2794, %v2793
        %v2801 = vpack.c.b16 %v2796, %v2795
        %v2802 = vpack.c.b16 %v2798, %v2797
        %vm2807 = vcmask 523264
        %v2809 = vsel %vm2807, %v2770, 0
        %2811 = vmatpush.bf16.msra.mxu0 0
        %2812 = vmatpush.bf16.msra.mxu0 0
        %2813 = vmatpush.bf16.msra.mxu0 0
        %2814 = vmatpush.bf16.msra.mxu0 0
        %2815 = vmatpush.bf16.msra.mxu0 %v2802
        %2816 = vmatpush.bf16.msra.mxu0 %v2801
        %2817 = vmatpush.bf16.msra.mxu0 %v2800
        %2818 = vmatpush.bf16.msra.mxu0 %v2799
        %2819 = vmatmul.bf16.gmra.mxu0 %v2809
        %v2820 = vpop.f32.mrf.mxu0
        %v2821 = vadd.f32 %v2781, %v2820
        %v2822 = vpop.f32.mrf.mxu0
        %2823 = vdwg.mxu0
        %v2824 = vmax.f32 %v2821, 0.0
        %v2825 = vpack.c.bf16 %v2824, %v2824
        %v2826 = vld [vmem:[%s11] sm:$0xf]
        %v2827 = vld [vmem:[%s11 + $0x4] sm:$0xf]
        %v2828 = vld [vmem:[%s11 + $0x8] sm:$0xf]
        %v2829 = vld [vmem:[%s11 + $0xc] sm:$0xf]
        %v2830 = vld [vmem:[%s12] sm:$0x1]
        %v2832 = vperm.slane %v2830, 0
        %v2838 = vunpack.c.l.b16 %v2826
        %v2839 = vunpack.c.l.b16 %v2827
        %v2840 = vunpack.c.l.b16 %v2828
        %v2841 = vunpack.c.l.b16 %v2829
        %v2842 = vpack.c.b16 %v2839, %v2838
        %v2843 = vpack.c.b16 %v2841, %v2840
        %vm2846 = vcmask 261120
        %v2848 = vsel %vm2846, %v2825, 0
        %2850 = vmatpush.bf16.msra.mxu0 0
        %2851 = vmatpush.bf16.msra.mxu0 0
        %2852 = vmatpush.bf16.msra.mxu0 0
        %2853 = vmatpush.bf16.msra.mxu0 0
        %2854 = vmatpush.bf16.msra.mxu0 0
        %2855 = vmatpush.bf16.msra.mxu0 0
        %2856 = vmatpush.bf16.msra.mxu0 %v2843
        %2857 = vmatpush.bf16.msra.mxu0 %v2842
        %2858 = vmatmul.bf16.gmra.mxu0 %v2848
        %v2859 = vpop.f32.mrf.mxu0
        %v2860 = vadd.f32 %v2832, %v2859
        %v2861 = vpop.f32.mrf.mxu0
        %2862 = vdwg.mxu0
        %2863 = vst [vmem:[%s433] sm:$0xff] %v2860
        %s2864 = sand.u32 %s313, 1
        %s2865 = scalar_lea.sflag [#allocation3], %s2864
        %s2866 = sand.u32 %s313, 1
        %s2867 = smul.addr %s2866, 8
        %s2868 = scalar_lea.vmem [#allocation2], %s2867
        // Predicated region
        $region73: #{mlp_forward.1} parent=71 // pred_check
          %p2869 = pneg %p323
        $region74: #{mlp_forward.1} parent=71 // pred_check_branch
          %2871 = sbr.rel (%p2869) target = $region76
        $region75: #{mlp_forward.1} parent=71 // pred_region
          %2873 = vsyncadd %s2865, 0
          %s2874 = smul.addr %s27, 8
          %s2875 = scalar_lea.hbm %s13, %s2874
          %s2877 = sshll.u32 %s2868, 4
          %s2878 = int_to_ptr.vmem [resolvable:$true] %s2877
          %s2879 = sshll.u32 %s2875, 4
          %s2880 = int_to_ptr.hbm [resolvable:$true] %s2879
          %2882 = dma.vmem_to_hbm [thread:$0]  %s2878, 128, %s2880, %s2865
        $region76: #{mlp_forward.1} parent=71 // pred_fallthru
          _
      $region72: #{mlp_forward.1} parent=5 // pred_fallthru
        _
      %p2883 = scmp.le.s32.totalorder 2, %s22
      // Predicated region
      $region77: #{mlp_forward.1} parent=5 // pred_check
        %p2884 = pneg %p2883
      $region78: #{mlp_forward.1} parent=5 // pred_check_branch
        %2886 = sbr.rel (%p2884) target = $region80
      $region79: #{mlp_forward.1} parent=5 // pred_region
        %s2887 = ssub.s32 %s22, 2
        // Predicated region
        $region81: #{mlp_forward.1} parent=79 // pred_check
          %p2888 = pneg %p329
        $region82: #{mlp_forward.1} parent=79 // pred_check_branch
          %2890 = sbr.rel (%p2888) target = $region84
        $region83: #{mlp_forward.1} parent=79 // pred_region
          %s2891 = sand.u32 %s314, 1
          %s2892 = scalar_lea.sflag [#allocation3], %s2891
          %s2893 = sand.u32 %s314, 1
          %s2894 = smul.addr %s2893, 8
          %s2895 = scalar_lea.vmem [#allocation2], %s2894
          %2897 = dma.done %s2892, 128
        $region84: #{mlp_forward.1} parent=79 // pred_fallthru
          _
      $region80: #{mlp_forward.1} parent=5 // pred_fallthru
        _
    $region6: #{mlp_forward.1} parent=1 // loop_footer
      %s26 = sadd.s32 1, %s22
    $region7: #{mlp_forward.1} parent=1 // loop_footer_branch
      %21 = sbr.rel target = $region3
    $region8: #{mlp_forward.1} parent=1 // loop_exit
      _
    %2898 = vsyncpa [#allocation3], 1
    %s2899 = scalar_lea.sflag [#allocation3], 1
    %2900 = vsyncpa %s2899, 1

</llo_original>
